<compile_context>
chip_gen: v5e
topology: v5e:2x2
jax: 0.10.0
libtpu: 0.0.40
codegen_flags: <defaults>
</compile_context>

<pallas_src>
import math
from functools import partial

import jax
import jax.numpy as jnp
from jax.experimental import pallas as pl
from jax.experimental.pallas import tpu as pltpu


# ------------------- fused encoder stack (one call, grid over layers) --------

def _make_encoder_kernel(B, S, H, n_heads):
    dh = H // n_heads
    scale = 1.0 / math.sqrt(dh)
    gelu_c = math.sqrt(2.0 / math.pi)

    def layer_norm(v, g, b):
        mu = jnp.mean(v, axis=-1, keepdims=True)
        var = jnp.mean(jnp.square(v - mu), axis=-1, keepdims=True)
        return (v - mu) * jax.lax.rsqrt(var + 1e-12) * g + b

    def kernel(x_ref, maskb_ref, wqkv_ref, bqkv_ref, wo_ref, bo_ref,
               ln1g_ref, ln1b_ref, w1_ref, b1_ref, w2_ref, b2_ref,
               ln2g_ref, ln2b_ref, o_ref):
        layer = pl.program_id(0)

        # Activation carry lives in the resident output block (constant index
        # map over the layer axis) -> no HBM round trip between layers.
        @pl.when(layer == 0)
        def _():
            o_ref[...] = x_ref[...]

        x = o_ref[...]                                        # [B*S, H] f32

        # Fused QKV projection: one MXU dot, cast qkv to bf16 ONCE.
        qkv = jnp.dot(x.astype(jnp.bfloat16), wqkv_ref[...],
                      preferred_element_type=jnp.float32) + bqkv_ref[...]
        qkv3 = qkv.reshape(B, S, 3 * H).astype(jnp.bfloat16)  # [B, S, 3H]

        # Hoisted additive-mask broadcast (JAX does not CSE broadcast_in_dim).
        bias = jnp.broadcast_to(maskb_ref[...], (B, S, S))    # [B, S, S] f32

        # Per-head attention as B-batched einsums (no per-(b,h) double loop).
        ctxs = []
        for h in range(n_heads):
            c0 = h * dh
            q = qkv3[:, :, c0:c0 + dh]                        # [B, S, dh] bf16
            k = qkv3[:, :, H + c0:H + c0 + dh]
            v = qkv3[:, :, 2 * H + c0:2 * H + c0 + dh]
            s = jnp.einsum('bqd,bkd->bqk', q, k,
                           preferred_element_type=jnp.float32) * scale + bias
            m = jnp.max(s, axis=-1, keepdims=True)
            e = jnp.exp(s - m)                                # EUP
            p = e * pl.reciprocal(jnp.sum(e, axis=-1, keepdims=True),
                                  approx=False)
            ctxs.append(jnp.einsum('bqk,bkd->bqd', p.astype(jnp.bfloat16), v,
                                   preferred_element_type=jnp.float32))
        ctx = jnp.concatenate(ctxs, axis=-1).reshape(B * S, H)

        # ONE full-K output projection dot (review item 3).
        ao = jnp.dot(ctx.astype(jnp.bfloat16), wo_ref[...],
                     preferred_element_type=jnp.float32) + bo_ref[...]
        h1 = layer_norm(x + ao, ln1g_ref[...], ln1b_ref[...])

        # Feed-forward.
        f = jnp.dot(h1.astype(jnp.bfloat16), w1_ref[...],
                    preferred_element_type=jnp.float32) + b1_ref[...]
        # TODO(synk): HF BERT uses exact erf GELU; tanh approximation used for
        # guaranteed Mosaic lowering (encoder weights are a random stand-in).
        f = 0.5 * f * (1.0 + jnp.tanh(gelu_c * (f + 0.044715 * f * f * f)))
        f2 = jnp.dot(f.astype(jnp.bfloat16), w2_ref[...],
                     preferred_element_type=jnp.float32) + b2_ref[...]

        o_ref[...] = layer_norm(h1 + f2, ln2g_ref[...], ln2b_ref[...])

    return kernel


def _layer_norm_jax(x, g, b, eps=1e-12):
    mu = jnp.mean(x, axis=-1, keepdims=True)
    var = jnp.mean((x - mu) ** 2, axis=-1, keepdims=True)
    return (x - mu) * jax.lax.rsqrt(var + eps) * g + b


def bert_encoder(params, ids, mask, n_heads):
    B, S = ids.shape
    H = params['tok_emb'].shape[1]
    FF = params['w1'].shape[-1]
    L = params['wqkv'].shape[0]

    # TODO(synk): token/position embedding gather stays in plain JAX (no clean
    # Pallas gather at this scale).
    h = params['tok_emb'][ids] + params['pos_emb'][:S][None, :, :]
    h = _layer_norm_jax(h, params['ln_emb_g'], params['ln_emb_b'])

    mask_bias = ((1.0 - mask.astype(jnp.float32)) * -1e4)[:, None, :]  # [B,1,S]
    x2 = h.reshape(B * S, H).astype(jnp.float32)

    lw = lambda shp: pl.BlockSpec((None,) + shp, lambda l: (l, 0, 0))  # per-layer

    grid_spec = pltpu.PrefetchScalarGridSpec(
        num_scalar_prefetch=0,
        grid=(L,),
        in_specs=[
            pl.BlockSpec((B * S, H), lambda l: (0, 0)),       # initial activation
            pl.BlockSpec((B, 1, S), lambda l: (0, 0, 0)),     # additive mask
            lw((H, 3 * H)),   # wqkv
            lw((1, 3 * H)),   # bqkv
            lw((H, H)),       # wo
            lw((1, H)),       # bo
            lw((1, H)),       # ln1 gamma
            lw((1, H)),       # ln1 beta
            lw((H, FF)),      # w1
            lw((1, FF)),      # b1
            lw((FF, H)),      # w2
            lw((1, H)),       # b2
            lw((1, H)),       # ln2 gamma
            lw((1, H)),       # ln2 beta
        ],
        out_specs=pl.BlockSpec((B * S, H), lambda l: (0, 0)),
    )

    out = pl.pallas_call(
        _make_encoder_kernel(B, S, H, n_heads),
        out_shape=jax.ShapeDtypeStruct((B * S, H), jnp.float32),
        grid_spec=grid_spec,
        compiler_params=pltpu.CompilerParams(
            dimension_semantics=("arbitrary",)),      # layer axis is sequential
    )(x2, mask_bias, params['wqkv'], params['bqkv'], params['wo'], params['bo'],
      params['ln1_g'], params['ln1_b'], params['w1'], params['b1'],
      params['w2'], params['b2'], params['ln2_g'], params['ln2_b'])

    return out.reshape(B, S, H)


# ----------------------------- fused DPCNN head -------------------------------

def _dpcnn_final_len(S):
    L = S - 2
    while L > 2:
        L = ((L + 1) - 3) // 2 + 1     # pad2 then MaxPool2d((3,1), stride=2)
    return L


def _make_dpcnn_kernel(S, H):
    Lr = S - 2                          # length after conv_region

    def kernel(enc_ref, wreg_ref, breg_ref, wconv_ref, bconv_ref,
               wfc_ref, bfc_ref, o_ref, pool_ref):

        def pad_rows(v, top, bot):      # nn.ZeroPad2d((0,0,top,bot)) on [L, C]
            C = v.shape[1]
            parts = []
            if top:
                parts.append(jnp.zeros((top, C), v.dtype))
            parts.append(v)
            if bot:
                parts.append(jnp.zeros((bot, C), v.dtype))
            return jnp.concatenate(parts, axis=0)

        def conv3(vp, w_ref, bias, relu):
            # vp: zero-padded feature map [Lp, C]; conv == 3 shifted MXU dots.
            if relu:                    # relu(pad(x)) == pad(relu(x))
                vp = jnp.maximum(vp, 0.0)
            vb = vp.astype(jnp.bfloat16)
            Lo = vp.shape[0] - 2
            acc = jnp.dot(vb[0:Lo, :], w_ref[0],
                          preferred_element_type=jnp.float32)
            acc = acc + jnp.dot(vb[1:Lo + 1, :], w_ref[1],
                                preferred_element_type=jnp.float32)
            acc = acc + jnp.dot(vb[2:Lo + 2, :], w_ref[2],
                                preferred_element_type=jnp.float32)
            return acc + bias

        # conv_region: in-kernel im2col as 3 shifted dots (no HBM 3x copy).
        x = conv3(enc_ref[...], wreg_ref, breg_ref[...], relu=False)   # [Lr,Fp]
        # pad1 + relu + conv, twice (as in the PyTorch forward)
        x = conv3(pad_rows(x, 1, 1), wconv_ref, bconv_ref[...], relu=True)
        x = conv3(pad_rows(x, 1, 1), wconv_ref, bconv_ref[...], relu=True)

        while x.shape[0] > 2:           # static shapes -> unrolled at trace
            xp = pad_rows(x, 0, 1)      # pad2
            Lp = xp.shape[0]
            Lo = (Lp - 3) // 2 + 1
            m = jnp.maximum(jnp.maximum(xp[0:Lp - 2, :], xp[1:Lp - 1, :]),
                            xp[2:Lp, :])
            pool_ref[0:Lp - 2, :] = m
            px = pool_ref[pl.ds(0, Lo, stride=2), :]   # stride-2 downsample
            z = conv3(pad_rows(px, 1, 1), wconv_ref, bconv_ref[...], relu=True)
            z = conv3(pad_rows(z, 1, 1), wconv_ref, bconv_ref[...], relu=True)
            x = z + px

        # Final FC into a lane-dense (128-wide) output block.
        o_ref[...] = jnp.dot(x.astype(jnp.bfloat16), wfc_ref[...],
                             preferred_element_type=jnp.float32) + bfc_ref[...]

    return kernel


def dpcnn_head(enc, params, num_classes):
    B, S, H = enc.shape
    Fp = params['w_conv'].shape[-1]          # lane-padded filter dim (128)
    Cp = params['w_fc'].shape[-1]            # lane-padded class dim (128)
    Lf = _dpcnn_final_len(S)
    scratch_rows = ((S + 7) // 8) * 8

    grid_spec = pltpu.PrefetchScalarGridSpec(
        num_scalar_prefetch=0,
        grid=(B,),                                      # batch rides the grid
        in_specs=[
            pl.BlockSpec((None, S, H), lambda b: (b, 0, 0)),
            pl.BlockSpec((3, H, Fp), lambda b: (0, 0, 0)),
            pl.BlockSpec((1, Fp), lambda b: (0, 0)),
            pl.BlockSpec((3, Fp, Fp), lambda b: (0, 0, 0)),
            pl.BlockSpec((1, Fp), lambda b: (0, 0)),
            pl.BlockSpec((Fp, Cp), lambda b: (0, 0)),
            pl.BlockSpec((1, Cp), lambda b: (0, 0)),
        ],
        out_specs=pl.BlockSpec((None, Lf, Cp), lambda b: (b, 0, 0)),
        scratch_shapes=[pltpu.VMEM((scratch_rows, Fp), jnp.float32)],
    )

    out = pl.pallas_call(
        _make_dpcnn_kernel(S, H),
        out_shape=jax.ShapeDtypeStruct((B, Lf, Cp), jnp.float32),
        grid_spec=grid_spec,
        compiler_params=pltpu.CompilerParams(
            dimension_semantics=("parallel",)),         # 2 TCs on v7x
    )(enc, params['w_region'], params['b_region'],
      params['w_conv'], params['b_conv'], params['w_fc'], params['b_fc'])

    out = out[:, :, :num_classes]                       # strip lane padding
    # PyTorch: out.squeeze() then fc -> [B, num_classes] (Lf == 1 case).
    # TODO(synk): PyTorch's squeeze() would also drop the batch dim when B==1;
    # the batch axis is kept here for robustness.
    return out[:, 0, :] if Lf == 1 else out


# ----------------------------- params & forward -------------------------------

def init_params(key, vocab, max_pos, hidden, n_layers, ffn,
                num_filters, num_classes):
    keys = iter(jax.random.split(key, 32))
    bf16 = jnp.bfloat16
    H, L, FF = hidden, n_layers, ffn
    F_PAD, C_PAD = 128, 128          # lane-dense filter / class dims

    def nrm(shape, scale=0.02, dtype=jnp.float32):
        return (scale * jax.random.normal(next(keys), shape)).astype(dtype)

    def pad_to(x, shape):
        return jnp.pad(x, [(0, t - s) for s, t in zip(x.shape, shape)])

    p = {
        'tok_emb': nrm((vocab, H)),
        'pos_emb': nrm((max_pos, H)),
        'ln_emb_g': jnp.ones((H,), jnp.float32),
        'ln_emb_b': jnp.zeros((H,), jnp.float32),
        # Encoder weights stacked along a leading layer axis (grid prefetch).
        # Weights are bf16 (MXU operands / less HBM traffic), biases/LN f32.
        'wqkv': nrm((L, H, 3 * H), dtype=bf16),
        'bqkv': jnp.zeros((L, 1, 3 * H), jnp.float32),
        'wo': nrm((L, H, H), dtype=bf16),
        'bo': jnp.zeros((L, 1, H), jnp.float32),
        'ln1_g': jnp.ones((L, 1, H), jnp.float32),
        'ln1_b': jnp.zeros((L, 1, H), jnp.float32),
        'w1': nrm((L, H, FF), dtype=bf16),
        'b1': jnp.zeros((L, 1, FF), jnp.float32),
        'w2': nrm((L, FF, H), dtype=bf16),
        'b2': jnp.zeros((L, 1, H), jnp.float32),
        'ln2_g': jnp.ones((L, 1, H), jnp.float32),
        'ln2_b': jnp.zeros((L, 1, H), jnp.float32),
        # DPCNN head, zero-padded to lane-dense (128) filter/class dims.
        # w_region[k, hh, f]  == Conv2d(1, F, (3, H)).weight[f, 0, k, hh]
        'w_region': pad_to(nrm((3, H, num_filters), 0.1, bf16), (3, H, F_PAD)),
        'b_region': jnp.zeros((1, F_PAD), jnp.float32),
        # w_conv[k, ci, co]   == Conv2d(F, F, (3, 1)).weight[co, ci, k, 0]
        'w_conv': pad_to(nrm((3, num_filters, num_filters), 0.1, bf16),
                         (3, F_PAD, F_PAD)),
        'b_conv': jnp.zeros((1, F_PAD), jnp.float32),
        'w_fc': pad_to(nrm((num_filters, num_classes), 0.1, bf16),
                       (F_PAD, C_PAD)),
        'b_fc': jnp.zeros((1, C_PAD), jnp.float32),
    }
    return p


def model_forward(params, ids, seq_len, mask, n_heads, num_classes):
    del seq_len                                    # unused, as in PyTorch forward
    enc = bert_encoder(params, ids, mask, n_heads)       # [B, S, H]
    return dpcnn_head(enc, params, num_classes)          # [B, num_classes]


# ----------------------------- driver ------------------------------------------

if __name__ == "__main__":
    B, S = 2, 8
    VOCAB, MAX_POS, HIDDEN, N_LAYERS, N_HEADS, FFN = 100, 64, 32, 2, 2, 64
    NUM_FILTERS, NUM_CLASSES = 16, 3

    key = jax.random.PRNGKey(0)
    k_ids, k_params = jax.random.split(key)

    ids = jax.random.randint(k_ids, (B, S), 0, VOCAB, dtype=jnp.int32)
    seq_len = jnp.array([S, S - 2], dtype=jnp.int32)
    mask = (jnp.arange(S)[None, :] < seq_len[:, None]).astype(jnp.int32)

    params = init_params(k_params, VOCAB, MAX_POS, HIDDEN, N_LAYERS, FFN,
                         NUM_FILTERS, NUM_CLASSES)

    fwd = jax.jit(partial(model_forward, n_heads=N_HEADS,
                          num_classes=NUM_CLASSES))
    logits = jax.block_until_ready(fwd(params, ids, seq_len, mask))

    assert logits.shape == (B, NUM_CLASSES), logits.shape
    assert bool(jnp.all(jnp.isfinite(logits)))
    print("KERNEL_OK")
</pallas_src>

<mosaic_0001>
module attributes {stable_mosaic.version = 11 : i64} {
  func.func @kernel(%arg0: i32, %arg1: memref<16x32xf32, #tpu.memory_space<vmem>>, %arg2: memref<2x1x8xf32, #tpu.memory_space<vmem>>, %arg3: memref<1x32x96xbf16, #tpu.memory_space<vmem>>, %arg4: memref<1x1x96xf32, #tpu.memory_space<vmem>>, %arg5: memref<1x32x32xbf16, #tpu.memory_space<vmem>>, %arg6: memref<1x1x32xf32, #tpu.memory_space<vmem>>, %arg7: memref<1x1x32xf32, #tpu.memory_space<vmem>>, %arg8: memref<1x1x32xf32, #tpu.memory_space<vmem>>, %arg9: memref<1x32x64xbf16, #tpu.memory_space<vmem>>, %arg10: memref<1x1x64xf32, #tpu.memory_space<vmem>>, %arg11: memref<1x64x32xbf16, #tpu.memory_space<vmem>>, %arg12: memref<1x1x32xf32, #tpu.memory_space<vmem>>, %arg13: memref<1x1x32xf32, #tpu.memory_space<vmem>>, %arg14: memref<1x1x32xf32, #tpu.memory_space<vmem>>, %arg15: memref<16x32xf32, #tpu.memory_space<vmem>>) attributes {dimension_semantics = [#tpu.dimension_semantics<arbitrary>], iteration_bounds = array<i64: 2>, scalar_prefetch = 0 : i64, scratch_operands = 0 : i64, tpu.core_type = #tpu.core_type<tc>, window_params = [{pipeline_mode = #tpu.pipeline_mode<synchronous>, transform_indices = @transform_0, window_bounds = array<i64: 16, 32>}, {pipeline_mode = #tpu.pipeline_mode<synchronous>, transform_indices = @transform_1, window_bounds = array<i64: 2, 1, 8>}, {transform_indices = @transform_2, window_bounds = array<i64: 1, 32, 96>}, {transform_indices = @transform_3, window_bounds = array<i64: 1, 1, 96>}, {transform_indices = @transform_4, window_bounds = array<i64: 1, 32, 32>}, {transform_indices = @transform_5, window_bounds = array<i64: 1, 1, 32>}, {transform_indices = @transform_6, window_bounds = array<i64: 1, 1, 32>}, {transform_indices = @transform_7, window_bounds = array<i64: 1, 1, 32>}, {transform_indices = @transform_8, window_bounds = array<i64: 1, 32, 64>}, {transform_indices = @transform_9, window_bounds = array<i64: 1, 1, 64>}, {transform_indices = @transform_10, window_bounds = array<i64: 1, 64, 32>}, {transform_indices = @transform_11, window_bounds = array<i64: 1, 1, 32>}, {transform_indices = @transform_12, window_bounds = array<i64: 1, 1, 32>}, {transform_indices = @transform_13, window_bounds = array<i64: 1, 1, 32>}, {pipeline_mode = #tpu.pipeline_mode<synchronous>, transform_indices = @transform_14, window_bounds = array<i64: 16, 32>}]} {
    %c0_i32 = arith.constant 0 : i32
    %0 = arith.cmpi eq, %arg0, %c0_i32 : i32
    %1 = arith.extui %0 : i1 to i32
    %c0_i32_0 = arith.constant 0 : i32
    %2 = arith.cmpi ne, %1, %c0_i32_0 : i32
    scf.if %2 {
      %c0_70 = arith.constant 0 : index
      %c0_71 = arith.constant 0 : index
      %149 = vector.load %arg1[%c0_70, %c0_71] : memref<16x32xf32, #tpu.memory_space<vmem>>, vector<16x32xf32>
      %c0_72 = arith.constant 0 : index
      %c0_73 = arith.constant 0 : index
      %150 = vector.load %arg15[%c0_72, %c0_73] : memref<16x32xf32, #tpu.memory_space<vmem>>, vector<16x32xf32>
      tpu.vector_store %arg15[%c0_72, %c0_73], %149 {strides = array<i32>} : memref<16x32xf32, #tpu.memory_space<vmem>>, vector<16x32xf32>,
    } else {
    }
    %c0 = arith.constant 0 : index
    %c0_1 = arith.constant 0 : index
    %3 = vector.load %arg15[%c0, %c0_1] : memref<16x32xf32, #tpu.memory_space<vmem>>, vector<16x32xf32>
    %4 = arith.truncf %3 : vector<16x32xf32> to vector<16x32xbf16>
    %c0_2 = arith.constant 0 : index
    %c0_3 = arith.constant 0 : index
    %c0_4 = arith.constant 0 : index
    %5 = vector.load %arg3[%c0_2, %c0_3, %c0_4] : memref<1x32x96xbf16, #tpu.memory_space<vmem>>, vector<1x32x96xbf16>
    %6 = vector.shape_cast %5 : vector<1x32x96xbf16> to vector<32x96xbf16>
    %cst = arith.constant dense<0.000000e+00> : vector<16x96xf32>
    %7 = tpu.matmul %4, %6, %cst {dimension_numbers = #tpu.dot_dimension_numbers<[1], [0], [0], [1], [0, 0, 1, 1], [], []>} : vector<16x32xbf16>, vector<32x96xbf16>, vector<16x96xf32> -> vector<16x96xf32>
    %c0_5 = arith.constant 0 : index
    %c0_6 = arith.constant 0 : index
    %c0_7 = arith.constant 0 : index
    %8 = vector.load %arg4[%c0_5, %c0_6, %c0_7] : memref<1x1x96xf32, #tpu.memory_space<vmem>>, vector<1x1x96xf32>
    %9 = vector.shape_cast %8 : vector<1x1x96xf32> to vector<1x96xf32>
    %10 = vector.broadcast %9 : vector<1x96xf32> to vector<16x96xf32>
    %11 = arith.addf %7, %10 : vector<16x96xf32>
    %12 = vector.shape_cast %11 : vector<16x96xf32> to vector<2x8x96xf32>
    %13 = arith.truncf %12 : vector<2x8x96xf32> to vector<2x8x96xbf16>
    %c0_8 = arith.constant 0 : index
    %c0_9 = arith.constant 0 : index
    %c0_10 = arith.constant 0 : index
    %14 = vector.load %arg2[%c0_8, %c0_9, %c0_10] : memref<2x1x8xf32, #tpu.memory_space<vmem>>, vector<2x1x8xf32>
    %15 = vector.shape_cast %14 : vector<2x1x8xf32> to vector<2x1x8xf32>
    %16 = vector.broadcast %15 : vector<2x1x8xf32> to vector<2x8x8xf32>
    %17 = vector.extract_strided_slice %13 {offsets = [0, 0, 0], sizes = [2, 8, 16], strides = [1, 1, 1]} : vector<2x8x96xbf16> to vector<2x8x16xbf16>
    %18 = vector.extract_strided_slice %13 {offsets = [0, 0, 32], sizes = [2, 8, 16], strides = [1, 1, 1]} : vector<2x8x96xbf16> to vector<2x8x16xbf16>
    %19 = vector.extract_strided_slice %13 {offsets = [0, 0, 64], sizes = [2, 8, 16], strides = [1, 1, 1]} : vector<2x8x96xbf16> to vector<2x8x16xbf16>
    "tpu.trace_start"() <{level = 10 : i32, message = "bqd,bkd->bqk"}> : () -> ()
    %cst_11 = arith.constant dense<0.000000e+00> : vector<2x8x8xf32>
    %20 = tpu.matmul %17, %18, %cst_11 {dimension_numbers = #tpu.dot_dimension_numbers<[2], [2], [1], [1], [0, 0, 0, 1, 1, 1], [0], [0]>} : vector<2x8x16xbf16>, vector<2x8x16xbf16>, vector<2x8x8xf32> -> vector<2x8x8xf32>
    "tpu.trace_stop"() : () -> ()
    %cst_12 = arith.constant 2.500000e-01 : f32
    %21 = vector.broadcast %cst_12 : f32 to vector<2x8x8xf32>
    %22 = arith.mulf %20, %21 : vector<2x8x8xf32>
    %23 = arith.addf %22, %16 : vector<2x8x8xf32>
    %cst_13 = arith.constant dense<0xFF800000> : vector<2x8xf32>
    %24 = vector.multi_reduction <maximumf>, %23, %cst_13 [2] : vector<2x8x8xf32> to vector<2x8xf32>
    %25 = vector.shape_cast %24 : vector<2x8xf32> to vector<2x8x1xf32>
    %26 = vector.broadcast %25 : vector<2x8x1xf32> to vector<2x8x8xf32>
    %27 = arith.subf %23, %26 : vector<2x8x8xf32>
    %28 = math.exp %27 : vector<2x8x8xf32>
    %cst_14 = arith.constant dense<0.000000e+00> : vector<2x8xf32>
    %29 = vector.multi_reduction <add>, %28, %cst_14 [2] : vector<2x8x8xf32> to vector<2x8xf32>
    %30 = vector.shape_cast %29 : vector<2x8xf32> to vector<2x8x1xf32>
    %31 = tpu.reciprocal %30 : vector<2x8x1xf32> -> vector<2x8x1xf32>
    %32 = vector.broadcast %31 : vector<2x8x1xf32> to vector<2x8x8xf32>
    %33 = arith.mulf %28, %32 : vector<2x8x8xf32>
    %34 = arith.truncf %33 : vector<2x8x8xf32> to vector<2x8x8xbf16>
    "tpu.trace_start"() <{level = 10 : i32, message = "bqk,bkd->bqd"}> : () -> ()
    %cst_15 = arith.constant dense<0.000000e+00> : vector<2x8x16xf32>
    %35 = tpu.matmul %34, %19, %cst_15 {dimension_numbers = #tpu.dot_dimension_numbers<[2], [1], [1], [2], [0, 0, 0, 1, 1, 2], [0], [0]>} : vector<2x8x8xbf16>, vector<2x8x16xbf16>, vector<2x8x16xf32> -> vector<2x8x16xf32>
    "tpu.trace_stop"() : () -> ()
    %36 = vector.extract_strided_slice %13 {offsets = [0, 0, 16], sizes = [2, 8, 16], strides = [1, 1, 1]} : vector<2x8x96xbf16> to vector<2x8x16xbf16>
    %37 = vector.extract_strided_slice %13 {offsets = [0, 0, 48], sizes = [2, 8, 16], strides = [1, 1, 1]} : vector<2x8x96xbf16> to vector<2x8x16xbf16>
    %38 = vector.extract_strided_slice %13 {offsets = [0, 0, 80], sizes = [2, 8, 16], strides = [1, 1, 1]} : vector<2x8x96xbf16> to vector<2x8x16xbf16>
    "tpu.trace_start"() <{level = 10 : i32, message = "bqd,bkd->bqk"}> : () -> ()
    %cst_16 = arith.constant dense<0.000000e+00> : vector<2x8x8xf32>
    %39 = tpu.matmul %36, %37, %cst_16 {dimension_numbers = #tpu.dot_dimension_numbers<[2], [2], [1], [1], [0, 0, 0, 1, 1, 1], [0], [0]>} : vector<2x8x16xbf16>, vector<2x8x16xbf16>, vector<2x8x8xf32> -> vector<2x8x8xf32>
    "tpu.trace_stop"() : () -> ()
    %cst_17 = arith.constant 2.500000e-01 : f32
    %40 = vector.broadcast %cst_17 : f32 to vector<2x8x8xf32>
    %41 = arith.mulf %39, %40 : vector<2x8x8xf32>
    %42 = arith.addf %41, %16 : vector<2x8x8xf32>
    %cst_18 = arith.constant dense<0xFF800000> : vector<2x8xf32>
    %43 = vector.multi_reduction <maximumf>, %42, %cst_18 [2] : vector<2x8x8xf32> to vector<2x8xf32>
    %44 = vector.shape_cast %43 : vector<2x8xf32> to vector<2x8x1xf32>
    %45 = vector.broadcast %44 : vector<2x8x1xf32> to vector<2x8x8xf32>
    %46 = arith.subf %42, %45 : vector<2x8x8xf32>
    %47 = math.exp %46 : vector<2x8x8xf32>
    %cst_19 = arith.constant dense<0.000000e+00> : vector<2x8xf32>
    %48 = vector.multi_reduction <add>, %47, %cst_19 [2] : vector<2x8x8xf32> to vector<2x8xf32>
    %49 = vector.shape_cast %48 : vector<2x8xf32> to vector<2x8x1xf32>
    %50 = tpu.reciprocal %49 : vector<2x8x1xf32> -> vector<2x8x1xf32>
    %51 = vector.broadcast %50 : vector<2x8x1xf32> to vector<2x8x8xf32>
    %52 = arith.mulf %47, %51 : vector<2x8x8xf32>
    %53 = arith.truncf %52 : vector<2x8x8xf32> to vector<2x8x8xbf16>
    "tpu.trace_start"() <{level = 10 : i32, message = "bqk,bkd->bqd"}> : () -> ()
    %cst_20 = arith.constant dense<0.000000e+00> : vector<2x8x16xf32>
    %54 = tpu.matmul %53, %38, %cst_20 {dimension_numbers = #tpu.dot_dimension_numbers<[2], [1], [1], [2], [0, 0, 0, 1, 1, 2], [0], [0]>} : vector<2x8x8xbf16>, vector<2x8x16xbf16>, vector<2x8x16xf32> -> vector<2x8x16xf32>
    "tpu.trace_stop"() : () -> ()
    %55 = tpu.concatenate %35, %54 in 2 : vector<2x8x16xf32>, vector<2x8x16xf32> -> vector<2x8x32xf32>
    %56 = vector.shape_cast %55 : vector<2x8x32xf32> to vector<16x32xf32>
    %57 = arith.truncf %56 : vector<16x32xf32> to vector<16x32xbf16>
    %c0_21 = arith.constant 0 : index
    %c0_22 = arith.constant 0 : index
    %c0_23 = arith.constant 0 : index
    %58 = vector.load %arg5[%c0_21, %c0_22, %c0_23] : memref<1x32x32xbf16, #tpu.memory_space<vmem>>, vector<1x32x32xbf16>
    %59 = vector.shape_cast %58 : vector<1x32x32xbf16> to vector<32x32xbf16>
    %cst_24 = arith.constant dense<0.000000e+00> : vector<16x32xf32>
    %60 = tpu.matmul %57, %59, %cst_24 {dimension_numbers = #tpu.dot_dimension_numbers<[1], [0], [0], [1], [0, 0, 1, 1], [], []>} : vector<16x32xbf16>, vector<32x32xbf16>, vector<16x32xf32> -> vector<16x32xf32>
    %c0_25 = arith.constant 0 : index
    %c0_26 = arith.constant 0 : index
    %c0_27 = arith.constant 0 : index
    %61 = vector.load %arg6[%c0_25, %c0_26, %c0_27] : memref<1x1x32xf32, #tpu.memory_space<vmem>>, vector<1x1x32xf32>
    %62 = vector.shape_cast %61 : vector<1x1x32xf32> to vector<1x32xf32>
    %63 = vector.broadcast %62 : vector<1x32xf32> to vector<16x32xf32>
    %64 = arith.addf %60, %63 : vector<16x32xf32>
    %65 = arith.addf %3, %64 : vector<16x32xf32>
    %c0_28 = arith.constant 0 : index
    %c0_29 = arith.constant 0 : index
    %c0_30 = arith.constant 0 : index
    %66 = vector.load %arg7[%c0_28, %c0_29, %c0_30] : memref<1x1x32xf32, #tpu.memory_space<vmem>>, vector<1x1x32xf32>
    %67 = vector.shape_cast %66 : vector<1x1x32xf32> to vector<1x32xf32>
    %c0_31 = arith.constant 0 : index
    %c0_32 = arith.constant 0 : index
    %c0_33 = arith.constant 0 : index
    %68 = vector.load %arg8[%c0_31, %c0_32, %c0_33] : memref<1x1x32xf32, #tpu.memory_space<vmem>>, vector<1x1x32xf32>
    %69 = vector.shape_cast %68 : vector<1x1x32xf32> to vector<1x32xf32>
    %cst_34 = arith.constant dense<0.000000e+00> : vector<16xf32>
    %70 = vector.multi_reduction <add>, %65, %cst_34 [1] : vector<16x32xf32> to vector<16xf32>
    %71 = vector.shape_cast %70 : vector<16xf32> to vector<16x1xf32>
    %cst_35 = arith.constant 3.200000e+01 : f32
    %72 = vector.broadcast %cst_35 : f32 to vector<16x1xf32>
    %73 = arith.divf %71, %72 : vector<16x1xf32>
    %74 = vector.broadcast %73 : vector<16x1xf32> to vector<16x32xf32>
    %75 = arith.subf %65, %74 : vector<16x32xf32>
    %76 = arith.mulf %75, %75 : vector<16x32xf32>
    %cst_36 = arith.constant dense<0.000000e+00> : vector<16xf32>
    %77 = vector.multi_reduction <add>, %76, %cst_36 [1] : vector<16x32xf32> to vector<16xf32>
    %78 = vector.shape_cast %77 : vector<16xf32> to vector<16x1xf32>
    %cst_37 = arith.constant 3.200000e+01 : f32
    %79 = vector.broadcast %cst_37 : f32 to vector<16x1xf32>
    %80 = arith.divf %78, %79 : vector<16x1xf32>
    %81 = vector.broadcast %73 : vector<16x1xf32> to vector<16x32xf32>
    %82 = arith.subf %65, %81 : vector<16x32xf32>
    %cst_38 = arith.constant 9.99999996E-13 : f32
    %83 = vector.broadcast %cst_38 : f32 to vector<16x1xf32>
    %84 = arith.addf %80, %83 : vector<16x1xf32>
    %85 = math.rsqrt %84 : vector<16x1xf32>
    %86 = vector.broadcast %85 : vector<16x1xf32> to vector<16x32xf32>
    %87 = arith.mulf %82, %86 : vector<16x32xf32>
    %88 = vector.broadcast %67 : vector<1x32xf32> to vector<16x32xf32>
    %89 = arith.mulf %87, %88 : vector<16x32xf32>
    %90 = vector.broadcast %69 : vector<1x32xf32> to vector<16x32xf32>
    %91 = arith.addf %89, %90 : vector<16x32xf32>
    %92 = arith.truncf %91 : vector<16x32xf32> to vector<16x32xbf16>
    %c0_39 = arith.constant 0 : index
    %c0_40 = arith.constant 0 : index
    %c0_41 = arith.constant 0 : index
    %93 = vector.load %arg9[%c0_39, %c0_40, %c0_41] : memref<1x32x64xbf16, #tpu.memory_space<vmem>>, vector<1x32x64xbf16>
    %94 = vector.shape_cast %93 : vector<1x32x64xbf16> to vector<32x64xbf16>
    %cst_42 = arith.constant dense<0.000000e+00> : vector<16x64xf32>
    %95 = tpu.matmul %92, %94, %cst_42 {dimension_numbers = #tpu.dot_dimension_numbers<[1], [0], [0], [1], [0, 0, 1, 1], [], []>} : vector<16x32xbf16>, vector<32x64xbf16>, vector<16x64xf32> -> vector<16x64xf32>
    %c0_43 = arith.constant 0 : index
    %c0_44 = arith.constant 0 : index
    %c0_45 = arith.constant 0 : index
    %96 = vector.load %arg10[%c0_43, %c0_44, %c0_45] : memref<1x1x64xf32, #tpu.memory_space<vmem>>, vector<1x1x64xf32>
    %97 = vector.shape_cast %96 : vector<1x1x64xf32> to vector<1x64xf32>
    %98 = vector.broadcast %97 : vector<1x64xf32> to vector<16x64xf32>
    %99 = arith.addf %95, %98 : vector<16x64xf32>
    %cst_46 = arith.constant 5.000000e-01 : f32
    %100 = vector.broadcast %cst_46 : f32 to vector<16x64xf32>
    %101 = arith.mulf %100, %99 : vector<16x64xf32>
    %cst_47 = arith.constant 4.471500e-02 : f32
    %102 = vector.broadcast %cst_47 : f32 to vector<16x64xf32>
    %103 = arith.mulf %102, %99 : vector<16x64xf32>
    %104 = arith.mulf %103, %99 : vector<16x64xf32>
    %105 = arith.mulf %104, %99 : vector<16x64xf32>
    %106 = arith.addf %99, %105 : vector<16x64xf32>
    %cst_48 = arith.constant 0.797884583 : f32
    %107 = vector.broadcast %cst_48 : f32 to vector<16x64xf32>
    %108 = arith.mulf %107, %106 : vector<16x64xf32>
    %109 = math.tanh %108 : vector<16x64xf32>
    %cst_49 = arith.constant 1.000000e+00 : f32
    %110 = vector.broadcast %cst_49 : f32 to vector<16x64xf32>
    %111 = arith.addf %110, %109 : vector<16x64xf32>
    %112 = arith.mulf %101, %111 : vector<16x64xf32>
    %113 = arith.truncf %112 : vector<16x64xf32> to vector<16x64xbf16>
    %c0_50 = arith.constant 0 : index
    %c0_51 = arith.constant 0 : index
    %c0_52 = arith.constant 0 : index
    %114 = vector.load %arg11[%c0_50, %c0_51, %c0_52] : memref<1x64x32xbf16, #tpu.memory_space<vmem>>, vector<1x64x32xbf16>
    %115 = vector.shape_cast %114 : vector<1x64x32xbf16> to vector<64x32xbf16>
    %cst_53 = arith.constant dense<0.000000e+00> : vector<16x32xf32>
    %116 = tpu.matmul %113, %115, %cst_53 {dimension_numbers = #tpu.dot_dimension_numbers<[1], [0], [0], [1], [0, 0, 1, 1], [], []>} : vector<16x64xbf16>, vector<64x32xbf16>, vector<16x32xf32> -> vector<16x32xf32>
    %c0_54 = arith.constant 0 : index
    %c0_55 = arith.constant 0 : index
    %c0_56 = arith.constant 0 : index
    %117 = vector.load %arg12[%c0_54, %c0_55, %c0_56] : memref<1x1x32xf32, #tpu.memory_space<vmem>>, vector<1x1x32xf32>
    %118 = vector.shape_cast %117 : vector<1x1x32xf32> to vector<1x32xf32>
    %119 = vector.broadcast %118 : vector<1x32xf32> to vector<16x32xf32>
    %120 = arith.addf %116, %119 : vector<16x32xf32>
    %121 = arith.addf %91, %120 : vector<16x32xf32>
    %c0_57 = arith.constant 0 : index
    %c0_58 = arith.constant 0 : index
    %c0_59 = arith.constant 0 : index
    %122 = vector.load %arg13[%c0_57, %c0_58, %c0_59] : memref<1x1x32xf32, #tpu.memory_space<vmem>>, vector<1x1x32xf32>
    %123 = vector.shape_cast %122 : vector<1x1x32xf32> to vector<1x32xf32>
    %c0_60 = arith.constant 0 : index
    %c0_61 = arith.constant 0 : index
    %c0_62 = arith.constant 0 : index
    %124 = vector.load %arg14[%c0_60, %c0_61, %c0_62] : memref<1x1x32xf32, #tpu.memory_space<vmem>>, vector<1x1x32xf32>
    %125 = vector.shape_cast %124 : vector<1x1x32xf32> to vector<1x32xf32>
    %cst_63 = arith.constant dense<0.000000e+00> : vector<16xf32>
    %126 = vector.multi_reduction <add>, %121, %cst_63 [1] : vector<16x32xf32> to vector<16xf32>
    %127 = vector.shape_cast %126 : vector<16xf32> to vector<16x1xf32>
    %cst_64 = arith.constant 3.200000e+01 : f32
    %128 = vector.broadcast %cst_64 : f32 to vector<16x1xf32>
    %129 = arith.divf %127, %128 : vector<16x1xf32>
    %130 = vector.broadcast %129 : vector<16x1xf32> to vector<16x32xf32>
    %131 = arith.subf %121, %130 : vector<16x32xf32>
    %132 = arith.mulf %131, %131 : vector<16x32xf32>
    %cst_65 = arith.constant dense<0.000000e+00> : vector<16xf32>
    %133 = vector.multi_reduction <add>, %132, %cst_65 [1] : vector<16x32xf32> to vector<16xf32>
    %134 = vector.shape_cast %133 : vector<16xf32> to vector<16x1xf32>
    %cst_66 = arith.constant 3.200000e+01 : f32
    %135 = vector.broadcast %cst_66 : f32 to vector<16x1xf32>
    %136 = arith.divf %134, %135 : vector<16x1xf32>
    %137 = vector.broadcast %129 : vector<16x1xf32> to vector<16x32xf32>
    %138 = arith.subf %121, %137 : vector<16x32xf32>
    %cst_67 = arith.constant 9.99999996E-13 : f32
    %139 = vector.broadcast %cst_67 : f32 to vector<16x1xf32>
    %140 = arith.addf %136, %139 : vector<16x1xf32>
    %141 = math.rsqrt %140 : vector<16x1xf32>
    %142 = vector.broadcast %141 : vector<16x1xf32> to vector<16x32xf32>
    %143 = arith.mulf %138, %142 : vector<16x32xf32>
    %144 = vector.broadcast %123 : vector<1x32xf32> to vector<16x32xf32>
    %145 = arith.mulf %143, %144 : vector<16x32xf32>
    %146 = vector.broadcast %125 : vector<1x32xf32> to vector<16x32xf32>
    %147 = arith.addf %145, %146 : vector<16x32xf32>
    %c0_68 = arith.constant 0 : index
    %c0_69 = arith.constant 0 : index
    %148 = vector.load %arg15[%c0_68, %c0_69] : memref<16x32xf32, #tpu.memory_space<vmem>>, vector<16x32xf32>
    tpu.vector_store %arg15[%c0_68, %c0_69], %147 {strides = array<i32>} : memref<16x32xf32, #tpu.memory_space<vmem>>, vector<16x32xf32>,
    return
  }
  func.func @transform_0(%arg0: i32) -> (i32, i32) {
    %c0_i32 = arith.constant 0 : i32
    %c0_i32_0 = arith.constant 0 : i32
    %c0_i32_1 = arith.constant 0 : i32
    return %c0_i32, %c0_i32_0 : i32, i32
  }
  func.func @transform_1(%arg0: i32) -> (i32, i32, i32) {
    %c0_i32 = arith.constant 0 : i32
    %c0_i32_0 = arith.constant 0 : i32
    %c0_i32_1 = arith.constant 0 : i32
    %c0_i32_2 = arith.constant 0 : i32
    return %c0_i32, %c0_i32_0, %c0_i32_1 : i32, i32, i32
  }
  func.func @transform_2(%arg0: i32) -> (i32, i32, i32) {
    %c0_i32 = arith.constant 0 : i32
    %c0_i32_0 = arith.constant 0 : i32
    %c0_i32_1 = arith.constant 0 : i32
    return %arg0, %c0_i32, %c0_i32_0 : i32, i32, i32
  }
  func.func @transform_3(%arg0: i32) -> (i32, i32, i32) {
    %c0_i32 = arith.constant 0 : i32
    %c0_i32_0 = arith.constant 0 : i32
    %c0_i32_1 = arith.constant 0 : i32
    return %arg0, %c0_i32, %c0_i32_0 : i32, i32, i32
  }
  func.func @transform_4(%arg0: i32) -> (i32, i32, i32) {
    %c0_i32 = arith.constant 0 : i32
    %c0_i32_0 = arith.constant 0 : i32
    %c0_i32_1 = arith.constant 0 : i32
    return %arg0, %c0_i32, %c0_i32_0 : i32, i32, i32
  }
  func.func @transform_5(%arg0: i32) -> (i32, i32, i32) {
    %c0_i32 = arith.constant 0 : i32
    %c0_i32_0 = arith.constant 0 : i32
    %c0_i32_1 = arith.constant 0 : i32
    return %arg0, %c0_i32, %c0_i32_0 : i32, i32, i32
  }
  func.func @transform_6(%arg0: i32) -> (i32, i32, i32) {
    %c0_i32 = arith.constant 0 : i32
    %c0_i32_0 = arith.constant 0 : i32
    %c0_i32_1 = arith.constant 0 : i32
    return %arg0, %c0_i32, %c0_i32_0 : i32, i32, i32
  }
  func.func @transform_7(%arg0: i32) -> (i32, i32, i32) {
    %c0_i32 = arith.constant 0 : i32
    %c0_i32_0 = arith.constant 0 : i32
    %c0_i32_1 = arith.constant 0 : i32
    return %arg0, %c0_i32, %c0_i32_0 : i32, i32, i32
  }
  func.func @transform_8(%arg0: i32) -> (i32, i32, i32) {
    %c0_i32 = arith.constant 0 : i32
    %c0_i32_0 = arith.constant 0 : i32
    %c0_i32_1 = arith.constant 0 : i32
    return %arg0, %c0_i32, %c0_i32_0 : i32, i32, i32
  }
  func.func @transform_9(%arg0: i32) -> (i32, i32, i32) {
    %c0_i32 = arith.constant 0 : i32
    %c0_i32_0 = arith.constant 0 : i32
    %c0_i32_1 = arith.constant 0 : i32
    return %arg0, %c0_i32, %c0_i32_0 : i32, i32, i32
  }
  func.func @transform_10(%arg0: i32) -> (i32, i32, i32) {
    %c0_i32 = arith.constant 0 : i32
    %c0_i32_0 = arith.constant 0 : i32
    %c0_i32_1 = arith.constant 0 : i32
    return %arg0, %c0_i32, %c0_i32_0 : i32, i32, i32
  }
  func.func @transform_11(%arg0: i32) -> (i32, i32, i32) {
    %c0_i32 = arith.constant 0 : i32
    %c0_i32_0 = arith.constant 0 : i32
    %c0_i32_1 = arith.constant 0 : i32
    return %arg0, %c0_i32, %c0_i32_0 : i32, i32, i32
  }
  func.func @transform_12(%arg0: i32) -> (i32, i32, i32) {
    %c0_i32 = arith.constant 0 : i32
    %c0_i32_0 = arith.constant 0 : i32
    %c0_i32_1 = arith.constant 0 : i32
    return %arg0, %c0_i32, %c0_i32_0 : i32, i32, i32
  }
  func.func @transform_13(%arg0: i32) -> (i32, i32, i32) {
    %c0_i32 = arith.constant 0 : i32
    %c0_i32_0 = arith.constant 0 : i32
    %c0_i32_1 = arith.constant 0 : i32
    return %arg0, %c0_i32, %c0_i32_0 : i32, i32, i32
  }
  func.func @transform_14(%arg0: i32) -> (i32, i32) {
    %c0_i32 = arith.constant 0 : i32
    %c0_i32_0 = arith.constant 0 : i32
    %c0_i32_1 = arith.constant 0 : i32
    return %c0_i32, %c0_i32_0 : i32, i32
  }
}

module attributes {stable_mosaic.version = 11 : i64} {
  func.func @kernel(%arg0: i32, %arg1: memref<1x8x32xf32, #tpu.memory_space<vmem>>, %arg2: memref<3x32x128xbf16, #tpu.memory_space<vmem>>, %arg3: memref<1x128xf32, #tpu.memory_space<vmem>>, %arg4: memref<3x128x128xbf16, #tpu.memory_space<vmem>>, %arg5: memref<1x128xf32, #tpu.memory_space<vmem>>, %arg6: memref<128x128xbf16, #tpu.memory_space<vmem>>, %arg7: memref<1x128xf32, #tpu.memory_space<vmem>>, %arg8: memref<1x1x128xf32, #tpu.memory_space<vmem>>, %arg9: memref<8x128xf32, #tpu.memory_space<vmem>>) attributes {dimension_semantics = [#tpu.dimension_semantics<parallel>], iteration_bounds = array<i64: 2>, scalar_prefetch = 0 : i64, scratch_operands = 1 : i64, tpu.core_type = #tpu.core_type<tc>, window_params = [{transform_indices = @transform_0, window_bounds = array<i64: 1, 8, 32>}, {pipeline_mode = #tpu.pipeline_mode<synchronous>, transform_indices = @transform_1, window_bounds = array<i64: 3, 32, 128>}, {pipeline_mode = #tpu.pipeline_mode<synchronous>, transform_indices = @transform_2, window_bounds = array<i64: 1, 128>}, {pipeline_mode = #tpu.pipeline_mode<synchronous>, transform_indices = @transform_3, window_bounds = array<i64: 3, 128, 128>}, {pipeline_mode = #tpu.pipeline_mode<synchronous>, transform_indices = @transform_4, window_bounds = array<i64: 1, 128>}, {pipeline_mode = #tpu.pipeline_mode<synchronous>, transform_indices = @transform_5, window_bounds = array<i64: 128, 128>}, {pipeline_mode = #tpu.pipeline_mode<synchronous>, transform_indices = @transform_6, window_bounds = array<i64: 1, 128>}, {transform_indices = @transform_7, window_bounds = array<i64: 1, 1, 128>}]} {
    %c0 = arith.constant 0 : index
    %c0_0 = arith.constant 0 : index
    %c0_1 = arith.constant 0 : index
    %0 = vector.load %arg1[%c0, %c0_0, %c0_1] : memref<1x8x32xf32, #tpu.memory_space<vmem>>, vector<1x8x32xf32>
    %1 = vector.shape_cast %0 : vector<1x8x32xf32> to vector<8x32xf32>
    %c0_2 = arith.constant 0 : index
    %c0_3 = arith.constant 0 : index
    %2 = vector.load %arg3[%c0_2, %c0_3] : memref<1x128xf32, #tpu.memory_space<vmem>>, vector<1x128xf32>
    %3 = arith.truncf %1 : vector<8x32xf32> to vector<8x32xbf16>
    %4 = vector.extract_strided_slice %3 {offsets = [0, 0], sizes = [6, 32], strides = [1, 1]} : vector<8x32xbf16> to vector<6x32xbf16>
    %c0_4 = arith.constant 0 : index
    %c0_5 = arith.constant 0 : index
    %c0_6 = arith.constant 0 : index
    %5 = vector.load %arg2[%c0_4, %c0_5, %c0_6] : memref<3x32x128xbf16, #tpu.memory_space<vmem>>, vector<1x32x128xbf16>
    %6 = vector.shape_cast %5 : vector<1x32x128xbf16> to vector<32x128xbf16>
    %cst = arith.constant dense<0.000000e+00> : vector<6x128xf32>
    %7 = tpu.matmul %4, %6, %cst {dimension_numbers = #tpu.dot_dimension_numbers<[1], [0], [0], [1], [0, 0, 1, 1], [], []>} : vector<6x32xbf16>, vector<32x128xbf16>, vector<6x128xf32> -> vector<6x128xf32>
    %8 = vector.extract_strided_slice %3 {offsets = [1, 0], sizes = [6, 32], strides = [1, 1]} : vector<8x32xbf16> to vector<6x32xbf16>
    %c1 = arith.constant 1 : index
    %c0_7 = arith.constant 0 : index
    %c0_8 = arith.constant 0 : index
    %9 = vector.load %arg2[%c1, %c0_7, %c0_8] : memref<3x32x128xbf16, #tpu.memory_space<vmem>>, vector<1x32x128xbf16>
    %10 = vector.shape_cast %9 : vector<1x32x128xbf16> to vector<32x128xbf16>
    %cst_9 = arith.constant dense<0.000000e+00> : vector<6x128xf32>
    %11 = tpu.matmul %8, %10, %cst_9 {dimension_numbers = #tpu.dot_dimension_numbers<[1], [0], [0], [1], [0, 0, 1, 1], [], []>} : vector<6x32xbf16>, vector<32x128xbf16>, vector<6x128xf32> -> vector<6x128xf32>
    %12 = arith.addf %7, %11 : vector<6x128xf32>
    %13 = vector.extract_strided_slice %3 {offsets = [2, 0], sizes = [6, 32], strides = [1, 1]} : vector<8x32xbf16> to vector<6x32xbf16>
    %c2 = arith.constant 2 : index
    %c0_10 = arith.constant 0 : index
    %c0_11 = arith.constant 0 : index
    %14 = vector.load %arg2[%c2, %c0_10, %c0_11] : memref<3x32x128xbf16, #tpu.memory_space<vmem>>, vector<1x32x128xbf16>
    %15 = vector.shape_cast %14 : vector<1x32x128xbf16> to vector<32x128xbf16>
    %cst_12 = arith.constant dense<0.000000e+00> : vector<6x128xf32>
    %16 = tpu.matmul %13, %15, %cst_12 {dimension_numbers = #tpu.dot_dimension_numbers<[1], [0], [0], [1], [0, 0, 1, 1], [], []>} : vector<6x32xbf16>, vector<32x128xbf16>, vector<6x128xf32> -> vector<6x128xf32>
    %17 = arith.addf %12, %16 : vector<6x128xf32>
    %18 = vector.broadcast %2 : vector<1x128xf32> to vector<6x128xf32>
    %19 = arith.addf %17, %18 : vector<6x128xf32>
    %cst_13 = arith.constant 0.000000e+00 : f32
    %20 = vector.broadcast %cst_13 : f32 to vector<1x128xf32>
    %cst_14 = arith.constant 0.000000e+00 : f32
    %21 = vector.broadcast %cst_14 : f32 to vector<1x128xf32>
    %22 = tpu.concatenate %20, %19, %21 in 0 : vector<1x128xf32>, vector<6x128xf32>, vector<1x128xf32> -> vector<8x128xf32>
    %c0_15 = arith.constant 0 : index
    %c0_16 = arith.constant 0 : index
    %23 = vector.load %arg5[%c0_15, %c0_16] : memref<1x128xf32, #tpu.memory_space<vmem>>, vector<1x128xf32>
    %cst_17 = arith.constant 0.000000e+00 : f32
    %24 = vector.broadcast %cst_17 : f32 to vector<8x128xf32>
    %25 = arith.maximumf %22, %24 : vector<8x128xf32>
    %26 = arith.truncf %25 : vector<8x128xf32> to vector<8x128xbf16>
    %27 = vector.extract_strided_slice %26 {offsets = [0, 0], sizes = [6, 128], strides = [1, 1]} : vector<8x128xbf16> to vector<6x128xbf16>
    %c0_18 = arith.constant 0 : index
    %c0_19 = arith.constant 0 : index
    %c0_20 = arith.constant 0 : index
    %28 = vector.load %arg4[%c0_18, %c0_19, %c0_20] : memref<3x128x128xbf16, #tpu.memory_space<vmem>>, vector<1x128x128xbf16>
    %29 = vector.shape_cast %28 : vector<1x128x128xbf16> to vector<128x128xbf16>
    %cst_21 = arith.constant dense<0.000000e+00> : vector<6x128xf32>
    %30 = tpu.matmul %27, %29, %cst_21 {dimension_numbers = #tpu.dot_dimension_numbers<[1], [0], [0], [1], [0, 0, 1, 1], [], []>} : vector<6x128xbf16>, vector<128x128xbf16>, vector<6x128xf32> -> vector<6x128xf32>
    %31 = vector.extract_strided_slice %26 {offsets = [1, 0], sizes = [6, 128], strides = [1, 1]} : vector<8x128xbf16> to vector<6x128xbf16>
    %c1_22 = arith.constant 1 : index
    %c0_23 = arith.constant 0 : index
    %c0_24 = arith.constant 0 : index
    %32 = vector.load %arg4[%c1_22, %c0_23, %c0_24] : memref<3x128x128xbf16, #tpu.memory_space<vmem>>, vector<1x128x128xbf16>
    %33 = vector.shape_cast %32 : vector<1x128x128xbf16> to vector<128x128xbf16>
    %cst_25 = arith.constant dense<0.000000e+00> : vector<6x128xf32>
    %34 = tpu.matmul %31, %33, %cst_25 {dimension_numbers = #tpu.dot_dimension_numbers<[1], [0], [0], [1], [0, 0, 1, 1], [], []>} : vector<6x128xbf16>, vector<128x128xbf16>, vector<6x128xf32> -> vector<6x128xf32>
    %35 = arith.addf %30, %34 : vector<6x128xf32>
    %36 = vector.extract_strided_slice %26 {offsets = [2, 0], sizes = [6, 128], strides = [1, 1]} : vector<8x128xbf16> to vector<6x128xbf16>
    %c2_26 = arith.constant 2 : index
    %c0_27 = arith.constant 0 : index
    %c0_28 = arith.constant 0 : index
    %37 = vector.load %arg4[%c2_26, %c0_27, %c0_28] : memref<3x128x128xbf16, #tpu.memory_space<vmem>>, vector<1x128x128xbf16>
    %38 = vector.shape_cast %37 : vector<1x128x128xbf16> to vector<128x128xbf16>
    %cst_29 = arith.constant dense<0.000000e+00> : vector<6x128xf32>
    %39 = tpu.matmul %36, %38, %cst_29 {dimension_numbers = #tpu.dot_dimension_numbers<[1], [0], [0], [1], [0, 0, 1, 1], [], []>} : vector<6x128xbf16>, vector<128x128xbf16>, vector<6x128xf32> -> vector<6x128xf32>
    %40 = arith.addf %35, %39 : vector<6x128xf32>
    %41 = vector.broadcast %23 : vector<1x128xf32> to vector<6x128xf32>
    %42 = arith.addf %40, %41 : vector<6x128xf32>
    %cst_30 = arith.constant 0.000000e+00 : f32
    %43 = vector.broadcast %cst_30 : f32 to vector<1x128xf32>
    %cst_31 = arith.constant 0.000000e+00 : f32
    %44 = vector.broadcast %cst_31 : f32 to vector<1x128xf32>
    %45 = tpu.concatenate %43, %42, %44 in 0 : vector<1x128xf32>, vector<6x128xf32>, vector<1x128xf32> -> vector<8x128xf32>
    %c0_32 = arith.constant 0 : index
    %c0_33 = arith.constant 0 : index
    %46 = vector.load %arg5[%c0_32, %c0_33] : memref<1x128xf32, #tpu.memory_space<vmem>>, vector<1x128xf32>
    %cst_34 = arith.constant 0.000000e+00 : f32
    %47 = vector.broadcast %cst_34 : f32 to vector<8x128xf32>
    %48 = arith.maximumf %45, %47 : vector<8x128xf32>
    %49 = arith.truncf %48 : vector<8x128xf32> to vector<8x128xbf16>
    %50 = vector.extract_strided_slice %49 {offsets = [0, 0], sizes = [6, 128], strides = [1, 1]} : vector<8x128xbf16> to vector<6x128xbf16>
    %c0_35 = arith.constant 0 : index
    %c0_36 = arith.constant 0 : index
    %c0_37 = arith.constant 0 : index
    %51 = vector.load %arg4[%c0_35, %c0_36, %c0_37] : memref<3x128x128xbf16, #tpu.memory_space<vmem>>, vector<1x128x128xbf16>
    %52 = vector.shape_cast %51 : vector<1x128x128xbf16> to vector<128x128xbf16>
    %cst_38 = arith.constant dense<0.000000e+00> : vector<6x128xf32>
    %53 = tpu.matmul %50, %52, %cst_38 {dimension_numbers = #tpu.dot_dimension_numbers<[1], [0], [0], [1], [0, 0, 1, 1], [], []>} : vector<6x128xbf16>, vector<128x128xbf16>, vector<6x128xf32> -> vector<6x128xf32>
    %54 = vector.extract_strided_slice %49 {offsets = [1, 0], sizes = [6, 128], strides = [1, 1]} : vector<8x128xbf16> to vector<6x128xbf16>
    %c1_39 = arith.constant 1 : index
    %c0_40 = arith.constant 0 : index
    %c0_41 = arith.constant 0 : index
    %55 = vector.load %arg4[%c1_39, %c0_40, %c0_41] : memref<3x128x128xbf16, #tpu.memory_space<vmem>>, vector<1x128x128xbf16>
    %56 = vector.shape_cast %55 : vector<1x128x128xbf16> to vector<128x128xbf16>
    %cst_42 = arith.constant dense<0.000000e+00> : vector<6x128xf32>
    %57 = tpu.matmul %54, %56, %cst_42 {dimension_numbers = #tpu.dot_dimension_numbers<[1], [0], [0], [1], [0, 0, 1, 1], [], []>} : vector<6x128xbf16>, vector<128x128xbf16>, vector<6x128xf32> -> vector<6x128xf32>
    %58 = arith.addf %53, %57 : vector<6x128xf32>
    %59 = vector.extract_strided_slice %49 {offsets = [2, 0], sizes = [6, 128], strides = [1, 1]} : vector<8x128xbf16> to vector<6x128xbf16>
    %c2_43 = arith.constant 2 : index
    %c0_44 = arith.constant 0 : index
    %c0_45 = arith.constant 0 : index
    %60 = vector.load %arg4[%c2_43, %c0_44, %c0_45] : memref<3x128x128xbf16, #tpu.memory_space<vmem>>, vector<1x128x128xbf16>
    %61 = vector.shape_cast %60 : vector<1x128x128xbf16> to vector<128x128xbf16>
    %cst_46 = arith.constant dense<0.000000e+00> : vector<6x128xf32>
    %62 = tpu.matmul %59, %61, %cst_46 {dimension_numbers = #tpu.dot_dimension_numbers<[1], [0], [0], [1], [0, 0, 1, 1], [], []>} : vector<6x128xbf16>, vector<128x128xbf16>, vector<6x128xf32> -> vector<6x128xf32>
    %63 = arith.addf %58, %62 : vector<6x128xf32>
    %64 = vector.broadcast %46 : vector<1x128xf32> to vector<6x128xf32>
    %65 = arith.addf %63, %64 : vector<6x128xf32>
    %cst_47 = arith.constant 0.000000e+00 : f32
    %66 = vector.broadcast %cst_47 : f32 to vector<1x128xf32>
    %67 = tpu.concatenate %65, %66 in 0 : vector<6x128xf32>, vector<1x128xf32> -> vector<7x128xf32>
    %68 = vector.extract_strided_slice %67 {offsets = [0, 0], sizes = [5, 128], strides = [1, 1]} : vector<7x128xf32> to vector<5x128xf32>
    %69 = vector.extract_strided_slice %67 {offsets = [1, 0], sizes = [5, 128], strides = [1, 1]} : vector<7x128xf32> to vector<5x128xf32>
    %70 = arith.maximumf %68, %69 : vector<5x128xf32>
    %71 = vector.extract_strided_slice %67 {offsets = [2, 0], sizes = [5, 128], strides = [1, 1]} : vector<7x128xf32> to vector<5x128xf32>
    %72 = arith.maximumf %70, %71 : vector<5x128xf32>
    %c0_48 = arith.constant 0 : index
    %c0_49 = arith.constant 0 : index
    %73 = vector.load %arg9[%c0_48, %c0_49] : memref<8x128xf32, #tpu.memory_space<vmem>>, vector<5x128xf32>
    tpu.vector_store %arg9[%c0_48, %c0_49], %72 {strides = array<i32>} : memref<8x128xf32, #tpu.memory_space<vmem>>, vector<5x128xf32>,
    %c0_50 = arith.constant 0 : index
    %c0_51 = arith.constant 0 : index
    %74 = tpu.strided_load %arg9[%c0_50, %c0_51] {strides = array<i32: 2, 1>} : memref<8x128xf32, #tpu.memory_space<vmem>>, vector<3x128xf32>
    %cst_52 = arith.constant 0.000000e+00 : f32
    %75 = vector.broadcast %cst_52 : f32 to vector<1x128xf32>
    %cst_53 = arith.constant 0.000000e+00 : f32
    %76 = vector.broadcast %cst_53 : f32 to vector<1x128xf32>
    %77 = tpu.concatenate %75, %74, %76 in 0 : vector<1x128xf32>, vector<3x128xf32>, vector<1x128xf32> -> vector<5x128xf32>
    %c0_54 = arith.constant 0 : index
    %c0_55 = arith.constant 0 : index
    %78 = vector.load %arg5[%c0_54, %c0_55] : memref<1x128xf32, #tpu.memory_space<vmem>>, vector<1x128xf32>
    %cst_56 = arith.constant 0.000000e+00 : f32
    %79 = vector.broadcast %cst_56 : f32 to vector<5x128xf32>
    %80 = arith.maximumf %77, %79 : vector<5x128xf32>
    %81 = arith.truncf %80 : vector<5x128xf32> to vector<5x128xbf16>
    %82 = vector.extract_strided_slice %81 {offsets = [0, 0], sizes = [3, 128], strides = [1, 1]} : vector<5x128xbf16> to vector<3x128xbf16>
    %c0_57 = arith.constant 0 : index
    %c0_58 = arith.constant 0 : index
    %c0_59 = arith.constant 0 : index
    %83 = vector.load %arg4[%c0_57, %c0_58, %c0_59] : memref<3x128x128xbf16, #tpu.memory_space<vmem>>, vector<1x128x128xbf16>
    %84 = vector.shape_cast %83 : vector<1x128x128xbf16> to vector<128x128xbf16>
    %cst_60 = arith.constant dense<0.000000e+00> : vector<3x128xf32>
    %85 = tpu.matmul %82, %84, %cst_60 {dimension_numbers = #tpu.dot_dimension_numbers<[1], [0], [0], [1], [0, 0, 1, 1], [], []>} : vector<3x128xbf16>, vector<128x128xbf16>, vector<3x128xf32> -> vector<3x128xf32>
    %86 = vector.extract_strided_slice %81 {offsets = [1, 0], sizes = [3, 128], strides = [1, 1]} : vector<5x128xbf16> to vector<3x128xbf16>
    %c1_61 = arith.constant 1 : index
    %c0_62 = arith.constant 0 : index
    %c0_63 = arith.constant 0 : index
    %87 = vector.load %arg4[%c1_61, %c0_62, %c0_63] : memref<3x128x128xbf16, #tpu.memory_space<vmem>>, vector<1x128x128xbf16>
    %88 = vector.shape_cast %87 : vector<1x128x128xbf16> to vector<128x128xbf16>
    %cst_64 = arith.constant dense<0.000000e+00> : vector<3x128xf32>
    %89 = tpu.matmul %86, %88, %cst_64 {dimension_numbers = #tpu.dot_dimension_numbers<[1], [0], [0], [1], [0, 0, 1, 1], [], []>} : vector<3x128xbf16>, vector<128x128xbf16>, vector<3x128xf32> -> vector<3x128xf32>
    %90 = arith.addf %85, %89 : vector<3x128xf32>
    %91 = vector.extract_strided_slice %81 {offsets = [2, 0], sizes = [3, 128], strides = [1, 1]} : vector<5x128xbf16> to vector<3x128xbf16>
    %c2_65 = arith.constant 2 : index
    %c0_66 = arith.constant 0 : index
    %c0_67 = arith.constant 0 : index
    %92 = vector.load %arg4[%c2_65, %c0_66, %c0_67] : memref<3x128x128xbf16, #tpu.memory_space<vmem>>, vector<1x128x128xbf16>
    %93 = vector.shape_cast %92 : vector<1x128x128xbf16> to vector<128x128xbf16>
    %cst_68 = arith.constant dense<0.000000e+00> : vector<3x128xf32>
    %94 = tpu.matmul %91, %93, %cst_68 {dimension_numbers = #tpu.dot_dimension_numbers<[1], [0], [0], [1], [0, 0, 1, 1], [], []>} : vector<3x128xbf16>, vector<128x128xbf16>, vector<3x128xf32> -> vector<3x128xf32>
    %95 = arith.addf %90, %94 : vector<3x128xf32>
    %96 = vector.broadcast %78 : vector<1x128xf32> to vector<3x128xf32>
    %97 = arith.addf %95, %96 : vector<3x128xf32>
    %cst_69 = arith.constant 0.000000e+00 : f32
    %98 = vector.broadcast %cst_69 : f32 to vector<1x128xf32>
    %cst_70 = arith.constant 0.000000e+00 : f32
    %99 = vector.broadcast %cst_70 : f32 to vector<1x128xf32>
    %100 = tpu.concatenate %98, %97, %99 in 0 : vector<1x128xf32>, vector<3x128xf32>, vector<1x128xf32> -> vector<5x128xf32>
    %c0_71 = arith.constant 0 : index
    %c0_72 = arith.constant 0 : index
    %101 = vector.load %arg5[%c0_71, %c0_72] : memref<1x128xf32, #tpu.memory_space<vmem>>, vector<1x128xf32>
    %cst_73 = arith.constant 0.000000e+00 : f32
    %102 = vector.broadcast %cst_73 : f32 to vector<5x128xf32>
    %103 = arith.maximumf %100, %102 : vector<5x128xf32>
    %104 = arith.truncf %103 : vector<5x128xf32> to vector<5x128xbf16>
    %105 = vector.extract_strided_slice %104 {offsets = [0, 0], sizes = [3, 128], strides = [1, 1]} : vector<5x128xbf16> to vector<3x128xbf16>
    %c0_74 = arith.constant 0 : index
    %c0_75 = arith.constant 0 : index
    %c0_76 = arith.constant 0 : index
    %106 = vector.load %arg4[%c0_74, %c0_75, %c0_76] : memref<3x128x128xbf16, #tpu.memory_space<vmem>>, vector<1x128x128xbf16>
    %107 = vector.shape_cast %106 : vector<1x128x128xbf16> to vector<128x128xbf16>
    %cst_77 = arith.constant dense<0.000000e+00> : vector<3x128xf32>
    %108 = tpu.matmul %105, %107, %cst_77 {dimension_numbers = #tpu.dot_dimension_numbers<[1], [0], [0], [1], [0, 0, 1, 1], [], []>} : vector<3x128xbf16>, vector<128x128xbf16>, vector<3x128xf32> -> vector<3x128xf32>
    %109 = vector.extract_strided_slice %104 {offsets = [1, 0], sizes = [3, 128], strides = [1, 1]} : vector<5x128xbf16> to vector<3x128xbf16>
    %c1_78 = arith.constant 1 : index
    %c0_79 = arith.constant 0 : index
    %c0_80 = arith.constant 0 : index
    %110 = vector.load %arg4[%c1_78, %c0_79, %c0_80] : memref<3x128x128xbf16, #tpu.memory_space<vmem>>, vector<1x128x128xbf16>
    %111 = vector.shape_cast %110 : vector<1x128x128xbf16> to vector<128x128xbf16>
    %cst_81 = arith.constant dense<0.000000e+00> : vector<3x128xf32>
    %112 = tpu.matmul %109, %111, %cst_81 {dimension_numbers = #tpu.dot_dimension_numbers<[1], [0], [0], [1], [0, 0, 1, 1], [], []>} : vector<3x128xbf16>, vector<128x128xbf16>, vector<3x128xf32> -> vector<3x128xf32>
    %113 = arith.addf %108, %112 : vector<3x128xf32>
    %114 = vector.extract_strided_slice %104 {offsets = [2, 0], sizes = [3, 128], strides = [1, 1]} : vector<5x128xbf16> to vector<3x128xbf16>
    %c2_82 = arith.constant 2 : index
    %c0_83 = arith.constant 0 : index
    %c0_84 = arith.constant 0 : index
    %115 = vector.load %arg4[%c2_82, %c0_83, %c0_84] : memref<3x128x128xbf16, #tpu.memory_space<vmem>>, vector<1x128x128xbf16>
    %116 = vector.shape_cast %115 : vector<1x128x128xbf16> to vector<128x128xbf16>
    %cst_85 = arith.constant dense<0.000000e+00> : vector<3x128xf32>
    %117 = tpu.matmul %114, %116, %cst_85 {dimension_numbers = #tpu.dot_dimension_numbers<[1], [0], [0], [1], [0, 0, 1, 1], [], []>} : vector<3x128xbf16>, vector<128x128xbf16>, vector<3x128xf32> -> vector<3x128xf32>
    %118 = arith.addf %113, %117 : vector<3x128xf32>
    %119 = vector.broadcast %101 : vector<1x128xf32> to vector<3x128xf32>
    %120 = arith.addf %118, %119 : vector<3x128xf32>
    %121 = arith.addf %120, %74 : vector<3x128xf32>
    %cst_86 = arith.constant 0.000000e+00 : f32
    %122 = vector.broadcast %cst_86 : f32 to vector<1x128xf32>
    %123 = tpu.concatenate %121, %122 in 0 : vector<3x128xf32>, vector<1x128xf32> -> vector<4x128xf32>
    %124 = vector.extract_strided_slice %123 {offsets = [0, 0], sizes = [2, 128], strides = [1, 1]} : vector<4x128xf32> to vector<2x128xf32>
    %125 = vector.extract_strided_slice %123 {offsets = [1, 0], sizes = [2, 128], strides = [1, 1]} : vector<4x128xf32> to vector<2x128xf32>
    %126 = arith.maximumf %124, %125 : vector<2x128xf32>
    %127 = vector.extract_strided_slice %123 {offsets = [2, 0], sizes = [2, 128], strides = [1, 1]} : vector<4x128xf32> to vector<2x128xf32>
    %128 = arith.maximumf %126, %127 : vector<2x128xf32>
    %c0_87 = arith.constant 0 : index
    %c0_88 = arith.constant 0 : index
    %129 = vector.load %arg9[%c0_87, %c0_88] : memref<8x128xf32, #tpu.memory_space<vmem>>, vector<2x128xf32>
    tpu.vector_store %arg9[%c0_87, %c0_88], %128 {strides = array<i32>} : memref<8x128xf32, #tpu.memory_space<vmem>>, vector<2x128xf32>,
    %c0_89 = arith.constant 0 : index
    %c0_90 = arith.constant 0 : index
    %130 = tpu.strided_load %arg9[%c0_89, %c0_90] {strides = array<i32: 2, 1>} : memref<8x128xf32, #tpu.memory_space<vmem>>, vector<1x128xf32>
    %cst_91 = arith.constant 0.000000e+00 : f32
    %131 = vector.broadcast %cst_91 : f32 to vector<1x128xf32>
    %cst_92 = arith.constant 0.000000e+00 : f32
    %132 = vector.broadcast %cst_92 : f32 to vector<1x128xf32>
    %133 = tpu.concatenate %131, %130, %132 in 0 : vector<1x128xf32>, vector<1x128xf32>, vector<1x128xf32> -> vector<3x128xf32>
    %c0_93 = arith.constant 0 : index
    %c0_94 = arith.constant 0 : index
    %134 = vector.load %arg5[%c0_93, %c0_94] : memref<1x128xf32, #tpu.memory_space<vmem>>, vector<1x128xf32>
    %cst_95 = arith.constant 0.000000e+00 : f32
    %135 = vector.broadcast %cst_95 : f32 to vector<3x128xf32>
    %136 = arith.maximumf %133, %135 : vector<3x128xf32>
    %137 = arith.truncf %136 : vector<3x128xf32> to vector<3x128xbf16>
    %138 = vector.extract_strided_slice %137 {offsets = [0, 0], sizes = [1, 128], strides = [1, 1]} : vector<3x128xbf16> to vector<1x128xbf16>
    %c0_96 = arith.constant 0 : index
    %c0_97 = arith.constant 0 : index
    %c0_98 = arith.constant 0 : index
    %139 = vector.load %arg4[%c0_96, %c0_97, %c0_98] : memref<3x128x128xbf16, #tpu.memory_space<vmem>>, vector<1x128x128xbf16>
    %140 = vector.shape_cast %139 : vector<1x128x128xbf16> to vector<128x128xbf16>
    %cst_99 = arith.constant dense<0.000000e+00> : vector<1x128xf32>
    %141 = tpu.matmul %138, %140, %cst_99 {dimension_numbers = #tpu.dot_dimension_numbers<[1], [0], [0], [1], [0, 0, 1, 1], [], []>} : vector<1x128xbf16>, vector<128x128xbf16>, vector<1x128xf32> -> vector<1x128xf32>
    %142 = vector.extract_strided_slice %137 {offsets = [1, 0], sizes = [1, 128], strides = [1, 1]} : vector<3x128xbf16> to vector<1x128xbf16>
    %c1_100 = arith.constant 1 : index
    %c0_101 = arith.constant 0 : index
    %c0_102 = arith.constant 0 : index
    %143 = vector.load %arg4[%c1_100, %c0_101, %c0_102] : memref<3x128x128xbf16, #tpu.memory_space<vmem>>, vector<1x128x128xbf16>
    %144 = vector.shape_cast %143 : vector<1x128x128xbf16> to vector<128x128xbf16>
    %cst_103 = arith.constant dense<0.000000e+00> : vector<1x128xf32>
    %145 = tpu.matmul %142, %144, %cst_103 {dimension_numbers = #tpu.dot_dimension_numbers<[1], [0], [0], [1], [0, 0, 1, 1], [], []>} : vector<1x128xbf16>, vector<128x128xbf16>, vector<1x128xf32> -> vector<1x128xf32>
    %146 = arith.addf %141, %145 : vector<1x128xf32>
    %147 = vector.extract_strided_slice %137 {offsets = [2, 0], sizes = [1, 128], strides = [1, 1]} : vector<3x128xbf16> to vector<1x128xbf16>
    %c2_104 = arith.constant 2 : index
    %c0_105 = arith.constant 0 : index
    %c0_106 = arith.constant 0 : index
    %148 = vector.load %arg4[%c2_104, %c0_105, %c0_106] : memref<3x128x128xbf16, #tpu.memory_space<vmem>>, vector<1x128x128xbf16>
    %149 = vector.shape_cast %148 : vector<1x128x128xbf16> to vector<128x128xbf16>
    %cst_107 = arith.constant dense<0.000000e+00> : vector<1x128xf32>
    %150 = tpu.matmul %147, %149, %cst_107 {dimension_numbers = #tpu.dot_dimension_numbers<[1], [0], [0], [1], [0, 0, 1, 1], [], []>} : vector<1x128xbf16>, vector<128x128xbf16>, vector<1x128xf32> -> vector<1x128xf32>
    %151 = arith.addf %146, %150 : vector<1x128xf32>
    %152 = arith.addf %151, %134 : vector<1x128xf32>
    %cst_108 = arith.constant 0.000000e+00 : f32
    %153 = vector.broadcast %cst_108 : f32 to vector<1x128xf32>
    %cst_109 = arith.constant 0.000000e+00 : f32
    %154 = vector.broadcast %cst_109 : f32 to vector<1x128xf32>
    %155 = tpu.concatenate %153, %152, %154 in 0 : vector<1x128xf32>, vector<1x128xf32>, vector<1x128xf32> -> vector<3x128xf32>
    %c0_110 = arith.constant 0 : index
    %c0_111 = arith.constant 0 : index
    %156 = vector.load %arg5[%c0_110, %c0_111] : memref<1x128xf32, #tpu.memory_space<vmem>>, vector<1x128xf32>
    %cst_112 = arith.constant 0.000000e+00 : f32
    %157 = vector.broadcast %cst_112 : f32 to vector<3x128xf32>
    %158 = arith.maximumf %155, %157 : vector<3x128xf32>
    %159 = arith.truncf %158 : vector<3x128xf32> to vector<3x128xbf16>
    %160 = vector.extract_strided_slice %159 {offsets = [0, 0], sizes = [1, 128], strides = [1, 1]} : vector<3x128xbf16> to vector<1x128xbf16>
    %c0_113 = arith.constant 0 : index
    %c0_114 = arith.constant 0 : index
    %c0_115 = arith.constant 0 : index
    %161 = vector.load %arg4[%c0_113, %c0_114, %c0_115] : memref<3x128x128xbf16, #tpu.memory_space<vmem>>, vector<1x128x128xbf16>
    %162 = vector.shape_cast %161 : vector<1x128x128xbf16> to vector<128x128xbf16>
    %cst_116 = arith.constant dense<0.000000e+00> : vector<1x128xf32>
    %163 = tpu.matmul %160, %162, %cst_116 {dimension_numbers = #tpu.dot_dimension_numbers<[1], [0], [0], [1], [0, 0, 1, 1], [], []>} : vector<1x128xbf16>, vector<128x128xbf16>, vector<1x128xf32> -> vector<1x128xf32>
    %164 = vector.extract_strided_slice %159 {offsets = [1, 0], sizes = [1, 128], strides = [1, 1]} : vector<3x128xbf16> to vector<1x128xbf16>
    %c1_117 = arith.constant 1 : index
    %c0_118 = arith.constant 0 : index
    %c0_119 = arith.constant 0 : index
    %165 = vector.load %arg4[%c1_117, %c0_118, %c0_119] : memref<3x128x128xbf16, #tpu.memory_space<vmem>>, vector<1x128x128xbf16>
    %166 = vector.shape_cast %165 : vector<1x128x128xbf16> to vector<128x128xbf16>
    %cst_120 = arith.constant dense<0.000000e+00> : vector<1x128xf32>
    %167 = tpu.matmul %164, %166, %cst_120 {dimension_numbers = #tpu.dot_dimension_numbers<[1], [0], [0], [1], [0, 0, 1, 1], [], []>} : vector<1x128xbf16>, vector<128x128xbf16>, vector<1x128xf32> -> vector<1x128xf32>
    %168 = arith.addf %163, %167 : vector<1x128xf32>
    %169 = vector.extract_strided_slice %159 {offsets = [2, 0], sizes = [1, 128], strides = [1, 1]} : vector<3x128xbf16> to vector<1x128xbf16>
    %c2_121 = arith.constant 2 : index
    %c0_122 = arith.constant 0 : index
    %c0_123 = arith.constant 0 : index
    %170 = vector.load %arg4[%c2_121, %c0_122, %c0_123] : memref<3x128x128xbf16, #tpu.memory_space<vmem>>, vector<1x128x128xbf16>
    %171 = vector.shape_cast %170 : vector<1x128x128xbf16> to vector<128x128xbf16>
    %cst_124 = arith.constant dense<0.000000e+00> : vector<1x128xf32>
    %172 = tpu.matmul %169, %171, %cst_124 {dimension_numbers = #tpu.dot_dimension_numbers<[1], [0], [0], [1], [0, 0, 1, 1], [], []>} : vector<1x128xbf16>, vector<128x128xbf16>, vector<1x128xf32> -> vector<1x128xf32>
    %173 = arith.addf %168, %172 : vector<1x128xf32>
    %174 = arith.addf %173, %156 : vector<1x128xf32>
    %175 = arith.addf %174, %130 : vector<1x128xf32>
    %176 = arith.truncf %175 : vector<1x128xf32> to vector<1x128xbf16>
    %c0_125 = arith.constant 0 : index
    %c0_126 = arith.constant 0 : index
    %177 = vector.load %arg6[%c0_125, %c0_126] : memref<128x128xbf16, #tpu.memory_space<vmem>>, vector<128x128xbf16>
    %cst_127 = arith.constant dense<0.000000e+00> : vector<1x128xf32>
    %178 = tpu.matmul %176, %177, %cst_127 {dimension_numbers = #tpu.dot_dimension_numbers<[1], [0], [0], [1], [0, 0, 1, 1], [], []>} : vector<1x128xbf16>, vector<128x128xbf16>, vector<1x128xf32> -> vector<1x128xf32>
    %c0_128 = arith.constant 0 : index
    %c0_129 = arith.constant 0 : index
    %179 = vector.load %arg7[%c0_128, %c0_129] : memref<1x128xf32, #tpu.memory_space<vmem>>, vector<1x128xf32>
    %180 = arith.addf %178, %179 : vector<1x128xf32>
    %c0_130 = arith.constant 0 : index
    %c0_131 = arith.constant 0 : index
    %c0_132 = arith.constant 0 : index
    %181 = vector.load %arg8[%c0_130, %c0_131, %c0_132] : memref<1x1x128xf32, #tpu.memory_space<vmem>>, vector<1x1x128xf32>
    %182 = vector.shape_cast %181 : vector<1x1x128xf32> to vector<1x128xf32>
    %183 = vector.shape_cast %180 : vector<1x128xf32> to vector<1x1x128xf32>
    tpu.vector_store %arg8[%c0_130, %c0_131, %c0_132], %183 {strides = array<i32>} : memref<1x1x128xf32, #tpu.memory_space<vmem>>, vector<1x1x128xf32>,
    return
  }
  func.func @transform_0(%arg0: i32) -> (i32, i32, i32) {
    %c0_i32 = arith.constant 0 : i32
    %c0_i32_0 = arith.constant 0 : i32
    %c0_i32_1 = arith.constant 0 : i32
    return %arg0, %c0_i32, %c0_i32_0 : i32, i32, i32
  }
  func.func @transform_1(%arg0: i32) -> (i32, i32, i32) {
    %c0_i32 = arith.constant 0 : i32
    %c0_i32_0 = arith.constant 0 : i32
    %c0_i32_1 = arith.constant 0 : i32
    %c0_i32_2 = arith.constant 0 : i32
    return %c0_i32, %c0_i32_0, %c0_i32_1 : i32, i32, i32
  }
  func.func @transform_2(%arg0: i32) -> (i32, i32) {
    %c0_i32 = arith.constant 0 : i32
    %c0_i32_0 = arith.constant 0 : i32
    %c0_i32_1 = arith.constant 0 : i32
    return %c0_i32, %c0_i32_0 : i32, i32
  }
  func.func @transform_3(%arg0: i32) -> (i32, i32, i32) {
    %c0_i32 = arith.constant 0 : i32
    %c0_i32_0 = arith.constant 0 : i32
    %c0_i32_1 = arith.constant 0 : i32
    %c0_i32_2 = arith.constant 0 : i32
    return %c0_i32, %c0_i32_0, %c0_i32_1 : i32, i32, i32
  }
  func.func @transform_4(%arg0: i32) -> (i32, i32) {
    %c0_i32 = arith.constant 0 : i32
    %c0_i32_0 = arith.constant 0 : i32
    %c0_i32_1 = arith.constant 0 : i32
    return %c0_i32, %c0_i32_0 : i32, i32
  }
  func.func @transform_5(%arg0: i32) -> (i32, i32) {
    %c0_i32 = arith.constant 0 : i32
    %c0_i32_0 = arith.constant 0 : i32
    %c0_i32_1 = arith.constant 0 : i32
    return %c0_i32, %c0_i32_0 : i32, i32
  }
  func.func @transform_6(%arg0: i32) -> (i32, i32) {
    %c0_i32 = arith.constant 0 : i32
    %c0_i32_0 = arith.constant 0 : i32
    %c0_i32_1 = arith.constant 0 : i32
    return %c0_i32, %c0_i32_0 : i32, i32
  }
  func.func @transform_7(%arg0: i32) -> (i32, i32, i32) {
    %c0_i32 = arith.constant 0 : i32
    %c0_i32_0 = arith.constant 0 : i32
    %c0_i32_1 = arith.constant 0 : i32
    return %arg0, %c0_i32, %c0_i32_0 : i32, i32, i32
  }
}

</mosaic_0001>

<llo_original>
// kernel: model_forward.2
$region0: #{model_forward.2}
  #allocation0 [shape = 'u32[]', space=smem, size = 0x4, offset = 0x4, fixed_abs, tag = 'smem constant byte address 0x4 - core index']
  #allocation1 [shape = 'u32[72,128]{1,0:T(1,128)}', space=vmem, size = 0x9000, scoped, tag = 'internal scratch']
  %s0 = inlined_call_operand.vmem [shape: f32[16,32], index: 0, kind: input, shape index: {}]
  %s1 = inlined_call_operand.vmem [shape: f32[2,1,8], index: 1, kind: input, shape index: {}]
  %s2 = inlined_call_operand.vmem [shape: bf16[2,32,96], index: 2, kind: input, shape index: {}]
  %s3 = inlined_call_operand.vmem [shape: f32[2,1,96], index: 3, kind: input, shape index: {}]
  %s4 = inlined_call_operand.vmem [shape: bf16[2,32,32], index: 4, kind: input, shape index: {}]
  %s5 = inlined_call_operand.vmem [shape: f32[2,1,32], index: 5, kind: input, shape index: {}]
  %s6 = inlined_call_operand.vmem [shape: f32[2,1,32], index: 6, kind: input, shape index: {}]
  %s7 = inlined_call_operand.vmem [shape: f32[2,1,32], index: 7, kind: input, shape index: {}]
  %s8 = inlined_call_operand.vmem [shape: bf16[2,32,64], index: 8, kind: input, shape index: {}]
  %s9 = inlined_call_operand.vmem [shape: f32[2,1,64], index: 9, kind: input, shape index: {}]
  %s10 = inlined_call_operand.vmem [shape: bf16[2,64,32], index: 10, kind: input, shape index: {}]
  %s11 = inlined_call_operand.vmem [shape: f32[2,1,32], index: 11, kind: input, shape index: {}]
  %s12 = inlined_call_operand.vmem [shape: f32[2,1,32], index: 12, kind: input, shape index: {}]
  %s13 = inlined_call_operand.vmem [shape: f32[2,1,32], index: 13, kind: input, shape index: {}]
  %s14 = inlined_call_operand.vmem [shape: f32[16,32], index: 14, kind: output, shape index: {}]
  %s15 = sld [smem:[#allocation0]]
  $region93: #{model_forward.2} parent=0
    _
  %s17 = ssub.s32 1, %s15
  %s18 = scalar_select 0, %s17, %s15
  loop: start=0, step=1, limit=4
  $region2: #{model_forward.2} parent=0 // loop_pre_header
    _
  $region3: #{model_forward.2} parent=0 // loop_header
    %s20 = sphi 0, %s24
    %p21 = scmp.ge.s32.totalorder %s20, 4
    %s28 = sphi 0, %s28
    %s30 = sphi 0, %s28
    %s31 = sphi 0, %s30
    %s45 = sphi 0, %s31
    %s49 = sphi 0, %s49
    %s51 = sphi 0, %s49
    %s52 = sphi 0, %s51
    %s66 = sphi 0, %s52
    %s72 = sphi 0, %s74
    %s75 = sphi 0, %s72
    %s76 = sphi 0, %s75
    %s92 = sphi 0, %s76
    %s98 = sphi 0, %s100
    %s101 = sphi 0, %s98
    %s102 = sphi 0, %s101
    %s118 = sphi 0, %s102
    %s124 = sphi 0, %s126
    %s127 = sphi 0, %s124
    %s128 = sphi 0, %s127
    %s144 = sphi 0, %s128
    %s150 = sphi 0, %s152
    %s153 = sphi 0, %s150
    %s154 = sphi 0, %s153
    %s170 = sphi 0, %s154
    %s176 = sphi 0, %s178
    %s179 = sphi 0, %s176
    %s180 = sphi 0, %s179
    %s196 = sphi 0, %s180
    %s202 = sphi 0, %s204
    %s205 = sphi 0, %s202
    %s206 = sphi 0, %s205
    %s222 = sphi 0, %s206
    %s228 = sphi 0, %s230
    %s231 = sphi 0, %s228
    %s232 = sphi 0, %s231
    %s248 = sphi 0, %s232
    %s254 = sphi 0, %s256
    %s257 = sphi 0, %s254
    %s258 = sphi 0, %s257
    %s274 = sphi 0, %s258
    %s280 = sphi 0, %s282
    %s283 = sphi 0, %s280
    %s284 = sphi 0, %s283
    %s300 = sphi 0, %s284
    %s306 = sphi 0, %s308
    %s309 = sphi 0, %s306
    %s310 = sphi 0, %s309
    %s326 = sphi 0, %s310
    %s332 = sphi 0, %s334
    %s335 = sphi 0, %s332
    %s336 = sphi 0, %s335
    %s352 = sphi 0, %s336
    %s358 = sphi 0, %s360
    %s361 = sphi 0, %s358
    %s362 = sphi 0, %s361
    %s378 = sphi 0, %s362
    %s382 = sphi 0, %s382
    %s384 = sphi 0, %s382
    %s385 = sphi 0, %s384
    %s399 = sphi 0, %s385
  $region4: #{model_forward.2} parent=0 // loop_header_branch
    %23 = sbr.rel (%p21) target = $region8
  $region5: #{model_forward.2} parent=0 // loop_body
    %s25 = ssub.s32 %s20, 1
    %s26 = ssub.s32 %s20, 2
    %s27 = sadd.s32 %s20, 1
    %s29 = sadd.s32 %s28, 1
    %p32 = scmp.eq.s32.totalorder %s20, 1
    %p33 = scmp.ne.s32.totalorder %s28, %s30
    %p34 = scmp.eq.s32.totalorder %s20, 0
    %p35 = por %p33, %p34
    %p36 = scmp.ne.s32.totalorder %s28, %s30
    %p37 = scmp.eq.s32.totalorder %s25, 1
    %p38 = por %p36, %p37
    %p39 = scmp.ne.s32.totalorder %s30, %s31
    %p40 = scmp.eq.s32.totalorder %s25, 0
    %p41 = por %p39, %p40
    %p42 = scmp.ne.s32.totalorder %s30, %s31
    %p43 = scmp.eq.s32.totalorder %s26, 1
    %p44 = por %p42, %p43
    %p46 = scmp.ne.s32.totalorder %s31, %s45
    %p47 = scmp.eq.s32.totalorder %s26, 0
    %p48 = por %p46, %p47
    %s50 = sadd.s32 %s49, 1
    %p53 = scmp.eq.s32.totalorder %s20, 1
    %p54 = scmp.ne.s32.totalorder %s49, %s51
    %p55 = scmp.eq.s32.totalorder %s20, 0
    %p56 = por %p54, %p55
    %p57 = scmp.ne.s32.totalorder %s49, %s51
    %p58 = scmp.eq.s32.totalorder %s25, 1
    %p59 = por %p57, %p58
    %p60 = scmp.ne.s32.totalorder %s51, %s52
    %p61 = scmp.eq.s32.totalorder %s25, 0
    %p62 = por %p60, %p61
    %p63 = scmp.ne.s32.totalorder %s51, %s52
    %p64 = scmp.eq.s32.totalorder %s26, 1
    %p65 = por %p63, %p64
    %p67 = scmp.ne.s32.totalorder %s52, %s66
    %p68 = scmp.eq.s32.totalorder %s26, 0
    %p69 = por %p67, %p68
    %s70 = ssub.s32 %s20, %s27
    %p71 = scmp.eq.s32.totalorder %s70, 0
    %s73 = sadd.s32 %s72, 1
    %s74 = scalar_select %p71, %s72, %s73
    %p77 = pneg %p71
    %p78 = scmp.eq.s32.totalorder %s20, 1
    %p79 = por %p77, %p78
    %p80 = scmp.ne.s32.totalorder %s72, %s75
    %p81 = scmp.eq.s32.totalorder %s20, 0
    %p82 = por %p80, %p81
    %p83 = scmp.ne.s32.totalorder %s72, %s75
    %p84 = scmp.eq.s32.totalorder %s25, 1
    %p85 = por %p83, %p84
    %p86 = scmp.ne.s32.totalorder %s75, %s76
    %p87 = scmp.eq.s32.totalorder %s25, 0
    %p88 = por %p86, %p87
    %p89 = scmp.ne.s32.totalorder %s75, %s76
    %p90 = scmp.eq.s32.totalorder %s26, 1
    %p91 = por %p89, %p90
    %p93 = scmp.ne.s32.totalorder %s76, %s92
    %p94 = scmp.eq.s32.totalorder %s26, 0
    %p95 = por %p93, %p94
    %s96 = ssub.s32 %s20, %s27
    %p97 = scmp.eq.s32.totalorder %s96, 0
    %s99 = sadd.s32 %s98, 1
    %s100 = scalar_select %p97, %s98, %s99
    %p103 = pneg %p97
    %p104 = scmp.eq.s32.totalorder %s20, 1
    %p105 = por %p103, %p104
    %p106 = scmp.ne.s32.totalorder %s98, %s101
    %p107 = scmp.eq.s32.totalorder %s20, 0
    %p108 = por %p106, %p107
    %p109 = scmp.ne.s32.totalorder %s98, %s101
    %p110 = scmp.eq.s32.totalorder %s25, 1
    %p111 = por %p109, %p110
    %p112 = scmp.ne.s32.totalorder %s101, %s102
    %p113 = scmp.eq.s32.totalorder %s25, 0
    %p114 = por %p112, %p113
    %p115 = scmp.ne.s32.totalorder %s101, %s102
    %p116 = scmp.eq.s32.totalorder %s26, 1
    %p117 = por %p115, %p116
    %p119 = scmp.ne.s32.totalorder %s102, %s118
    %p120 = scmp.eq.s32.totalorder %s26, 0
    %p121 = por %p119, %p120
    %s122 = ssub.s32 %s20, %s27
    %p123 = scmp.eq.s32.totalorder %s122, 0
    %s125 = sadd.s32 %s124, 1
    %s126 = scalar_select %p123, %s124, %s125
    %p129 = pneg %p123
    %p130 = scmp.eq.s32.totalorder %s20, 1
    %p131 = por %p129, %p130
    %p132 = scmp.ne.s32.totalorder %s124, %s127
    %p133 = scmp.eq.s32.totalorder %s20, 0
    %p134 = por %p132, %p133
    %p135 = scmp.ne.s32.totalorder %s124, %s127
    %p136 = scmp.eq.s32.totalorder %s25, 1
    %p137 = por %p135, %p136
    %p138 = scmp.ne.s32.totalorder %s127, %s128
    %p139 = scmp.eq.s32.totalorder %s25, 0
    %p140 = por %p138, %p139
    %p141 = scmp.ne.s32.totalorder %s127, %s128
    %p142 = scmp.eq.s32.totalorder %s26, 1
    %p143 = por %p141, %p142
    %p145 = scmp.ne.s32.totalorder %s128, %s144
    %p146 = scmp.eq.s32.totalorder %s26, 0
    %p147 = por %p145, %p146
    %s148 = ssub.s32 %s20, %s27
    %p149 = scmp.eq.s32.totalorder %s148, 0
    %s151 = sadd.s32 %s150, 1
    %s152 = scalar_select %p149, %s150, %s151
    %p155 = pneg %p149
    %p156 = scmp.eq.s32.totalorder %s20, 1
    %p157 = por %p155, %p156
    %p158 = scmp.ne.s32.totalorder %s150, %s153
    %p159 = scmp.eq.s32.totalorder %s20, 0
    %p160 = por %p158, %p159
    %p161 = scmp.ne.s32.totalorder %s150, %s153
    %p162 = scmp.eq.s32.totalorder %s25, 1
    %p163 = por %p161, %p162
    %p164 = scmp.ne.s32.totalorder %s153, %s154
    %p165 = scmp.eq.s32.totalorder %s25, 0
    %p166 = por %p164, %p165
    %p167 = scmp.ne.s32.totalorder %s153, %s154
    %p168 = scmp.eq.s32.totalorder %s26, 1
    %p169 = por %p167, %p168
    %p171 = scmp.ne.s32.totalorder %s154, %s170
    %p172 = scmp.eq.s32.totalorder %s26, 0
    %p173 = por %p171, %p172
    %s174 = ssub.s32 %s20, %s27
    %p175 = scmp.eq.s32.totalorder %s174, 0
    %s177 = sadd.s32 %s176, 1
    %s178 = scalar_select %p175, %s176, %s177
    %p181 = pneg %p175
    %p182 = scmp.eq.s32.totalorder %s20, 1
    %p183 = por %p181, %p182
    %p184 = scmp.ne.s32.totalorder %s176, %s179
    %p185 = scmp.eq.s32.totalorder %s20, 0
    %p186 = por %p184, %p185
    %p187 = scmp.ne.s32.totalorder %s176, %s179
    %p188 = scmp.eq.s32.totalorder %s25, 1
    %p189 = por %p187, %p188
    %p190 = scmp.ne.s32.totalorder %s179, %s180
    %p191 = scmp.eq.s32.totalorder %s25, 0
    %p192 = por %p190, %p191
    %p193 = scmp.ne.s32.totalorder %s179, %s180
    %p194 = scmp.eq.s32.totalorder %s26, 1
    %p195 = por %p193, %p194
    %p197 = scmp.ne.s32.totalorder %s180, %s196
    %p198 = scmp.eq.s32.totalorder %s26, 0
    %p199 = por %p197, %p198
    %s200 = ssub.s32 %s20, %s27
    %p201 = scmp.eq.s32.totalorder %s200, 0
    %s203 = sadd.s32 %s202, 1
    %s204 = scalar_select %p201, %s202, %s203
    %p207 = pneg %p201
    %p208 = scmp.eq.s32.totalorder %s20, 1
    %p209 = por %p207, %p208
    %p210 = scmp.ne.s32.totalorder %s202, %s205
    %p211 = scmp.eq.s32.totalorder %s20, 0
    %p212 = por %p210, %p211
    %p213 = scmp.ne.s32.totalorder %s202, %s205
    %p214 = scmp.eq.s32.totalorder %s25, 1
    %p215 = por %p213, %p214
    %p216 = scmp.ne.s32.totalorder %s205, %s206
    %p217 = scmp.eq.s32.totalorder %s25, 0
    %p218 = por %p216, %p217
    %p219 = scmp.ne.s32.totalorder %s205, %s206
    %p220 = scmp.eq.s32.totalorder %s26, 1
    %p221 = por %p219, %p220
    %p223 = scmp.ne.s32.totalorder %s206, %s222
    %p224 = scmp.eq.s32.totalorder %s26, 0
    %p225 = por %p223, %p224
    %s226 = ssub.s32 %s20, %s27
    %p227 = scmp.eq.s32.totalorder %s226, 0
    %s229 = sadd.s32 %s228, 1
    %s230 = scalar_select %p227, %s228, %s229
    %p233 = pneg %p227
    %p234 = scmp.eq.s32.totalorder %s20, 1
    %p235 = por %p233, %p234
    %p236 = scmp.ne.s32.totalorder %s228, %s231
    %p237 = scmp.eq.s32.totalorder %s20, 0
    %p238 = por %p236, %p237
    %p239 = scmp.ne.s32.totalorder %s228, %s231
    %p240 = scmp.eq.s32.totalorder %s25, 1
    %p241 = por %p239, %p240
    %p242 = scmp.ne.s32.totalorder %s231, %s232
    %p243 = scmp.eq.s32.totalorder %s25, 0
    %p244 = por %p242, %p243
    %p245 = scmp.ne.s32.totalorder %s231, %s232
    %p246 = scmp.eq.s32.totalorder %s26, 1
    %p247 = por %p245, %p246
    %p249 = scmp.ne.s32.totalorder %s232, %s248
    %p250 = scmp.eq.s32.totalorder %s26, 0
    %p251 = por %p249, %p250
    %s252 = ssub.s32 %s20, %s27
    %p253 = scmp.eq.s32.totalorder %s252, 0
    %s255 = sadd.s32 %s254, 1
    %s256 = scalar_select %p253, %s254, %s255
    %p259 = pneg %p253
    %p260 = scmp.eq.s32.totalorder %s20, 1
    %p261 = por %p259, %p260
    %p262 = scmp.ne.s32.totalorder %s254, %s257
    %p263 = scmp.eq.s32.totalorder %s20, 0
    %p264 = por %p262, %p263
    %p265 = scmp.ne.s32.totalorder %s254, %s257
    %p266 = scmp.eq.s32.totalorder %s25, 1
    %p267 = por %p265, %p266
    %p268 = scmp.ne.s32.totalorder %s257, %s258
    %p269 = scmp.eq.s32.totalorder %s25, 0
    %p270 = por %p268, %p269
    %p271 = scmp.ne.s32.totalorder %s257, %s258
    %p272 = scmp.eq.s32.totalorder %s26, 1
    %p273 = por %p271, %p272
    %p275 = scmp.ne.s32.totalorder %s258, %s274
    %p276 = scmp.eq.s32.totalorder %s26, 0
    %p277 = por %p275, %p276
    %s278 = ssub.s32 %s20, %s27
    %p279 = scmp.eq.s32.totalorder %s278, 0
    %s281 = sadd.s32 %s280, 1
    %s282 = scalar_select %p279, %s280, %s281
    %p285 = pneg %p279
    %p286 = scmp.eq.s32.totalorder %s20, 1
    %p287 = por %p285, %p286
    %p288 = scmp.ne.s32.totalorder %s280, %s283
    %p289 = scmp.eq.s32.totalorder %s20, 0
    %p290 = por %p288, %p289
    %p291 = scmp.ne.s32.totalorder %s280, %s283
    %p292 = scmp.eq.s32.totalorder %s25, 1
    %p293 = por %p291, %p292
    %p294 = scmp.ne.s32.totalorder %s283, %s284
    %p295 = scmp.eq.s32.totalorder %s25, 0
    %p296 = por %p294, %p295
    %p297 = scmp.ne.s32.totalorder %s283, %s284
    %p298 = scmp.eq.s32.totalorder %s26, 1
    %p299 = por %p297, %p298
    %p301 = scmp.ne.s32.totalorder %s284, %s300
    %p302 = scmp.eq.s32.totalorder %s26, 0
    %p303 = por %p301, %p302
    %s304 = ssub.s32 %s20, %s27
    %p305 = scmp.eq.s32.totalorder %s304, 0
    %s307 = sadd.s32 %s306, 1
    %s308 = scalar_select %p305, %s306, %s307
    %p311 = pneg %p305
    %p312 = scmp.eq.s32.totalorder %s20, 1
    %p313 = por %p311, %p312
    %p314 = scmp.ne.s32.totalorder %s306, %s309
    %p315 = scmp.eq.s32.totalorder %s20, 0
    %p316 = por %p314, %p315
    %p317 = scmp.ne.s32.totalorder %s306, %s309
    %p318 = scmp.eq.s32.totalorder %s25, 1
    %p319 = por %p317, %p318
    %p320 = scmp.ne.s32.totalorder %s309, %s310
    %p321 = scmp.eq.s32.totalorder %s25, 0
    %p322 = por %p320, %p321
    %p323 = scmp.ne.s32.totalorder %s309, %s310
    %p324 = scmp.eq.s32.totalorder %s26, 1
    %p325 = por %p323, %p324
    %p327 = scmp.ne.s32.totalorder %s310, %s326
    %p328 = scmp.eq.s32.totalorder %s26, 0
    %p329 = por %p327, %p328
    %s330 = ssub.s32 %s20, %s27
    %p331 = scmp.eq.s32.totalorder %s330, 0
    %s333 = sadd.s32 %s332, 1
    %s334 = scalar_select %p331, %s332, %s333
    %p337 = pneg %p331
    %p338 = scmp.eq.s32.totalorder %s20, 1
    %p339 = por %p337, %p338
    %p340 = scmp.ne.s32.totalorder %s332, %s335
    %p341 = scmp.eq.s32.totalorder %s20, 0
    %p342 = por %p340, %p341
    %p343 = scmp.ne.s32.totalorder %s332, %s335
    %p344 = scmp.eq.s32.totalorder %s25, 1
    %p345 = por %p343, %p344
    %p346 = scmp.ne.s32.totalorder %s335, %s336
    %p347 = scmp.eq.s32.totalorder %s25, 0
    %p348 = por %p346, %p347
    %p349 = scmp.ne.s32.totalorder %s335, %s336
    %p350 = scmp.eq.s32.totalorder %s26, 1
    %p351 = por %p349, %p350
    %p353 = scmp.ne.s32.totalorder %s336, %s352
    %p354 = scmp.eq.s32.totalorder %s26, 0
    %p355 = por %p353, %p354
    %s356 = ssub.s32 %s20, %s27
    %p357 = scmp.eq.s32.totalorder %s356, 0
    %s359 = sadd.s32 %s358, 1
    %s360 = scalar_select %p357, %s358, %s359
    %p363 = pneg %p357
    %p364 = scmp.eq.s32.totalorder %s20, 1
    %p365 = por %p363, %p364
    %p366 = scmp.ne.s32.totalorder %s358, %s361
    %p367 = scmp.eq.s32.totalorder %s20, 0
    %p368 = por %p366, %p367
    %p369 = scmp.ne.s32.totalorder %s358, %s361
    %p370 = scmp.eq.s32.totalorder %s25, 1
    %p371 = por %p369, %p370
    %p372 = scmp.ne.s32.totalorder %s361, %s362
    %p373 = scmp.eq.s32.totalorder %s25, 0
    %p374 = por %p372, %p373
    %p375 = scmp.ne.s32.totalorder %s361, %s362
    %p376 = scmp.eq.s32.totalorder %s26, 1
    %p377 = por %p375, %p376
    %p379 = scmp.ne.s32.totalorder %s362, %s378
    %p380 = scmp.eq.s32.totalorder %s26, 0
    %p381 = por %p379, %p380
    %s383 = sadd.s32 %s382, 1
    %p386 = scmp.eq.s32.totalorder %s20, 1
    %p387 = scmp.ne.s32.totalorder %s382, %s384
    %p388 = scmp.eq.s32.totalorder %s20, 0
    %p389 = por %p387, %p388
    %p390 = scmp.ne.s32.totalorder %s382, %s384
    %p391 = scmp.eq.s32.totalorder %s25, 1
    %p392 = por %p390, %p391
    %p393 = scmp.ne.s32.totalorder %s384, %s385
    %p394 = scmp.eq.s32.totalorder %s25, 0
    %p395 = por %p393, %p394
    %p396 = scmp.ne.s32.totalorder %s384, %s385
    %p397 = scmp.eq.s32.totalorder %s26, 1
    %p398 = por %p396, %p397
    %p400 = scmp.ne.s32.totalorder %s385, %s399
    %p401 = scmp.eq.s32.totalorder %s26, 0
    %p402 = por %p400, %p401
    %p403 = scmp.le.s32.totalorder 1, %s20
    %p404 = scmp.lt.s32.totalorder %s20, 3
    %p405 = pnand %p403, %p404
    %p406 = pneg %p405
    // Predicated region
    $region9: #{model_forward.2} parent=5 // pred_check
      _
    $region10: #{model_forward.2} parent=5 // pred_check_branch
      %408 = sbr.rel (%p405) target = $region12
    $region11: #{model_forward.2} parent=5 // pred_region
      %s409 = ssub.s32 %s20, 1
      // Predicated region
      $region13: #{model_forward.2} parent=11 // pred_check
        %p410 = pneg %p41
      $region14: #{model_forward.2} parent=11 // pred_check_branch
        %412 = sbr.rel (%p410) target = $region16
      $region15: #{model_forward.2} parent=11 // pred_region
        _
      $region16: #{model_forward.2} parent=11 // pred_fallthru
        _
      // Predicated region
      $region17: #{model_forward.2} parent=11 // pred_check
        %p413 = pneg %p62
      $region18: #{model_forward.2} parent=11 // pred_check_branch
        %415 = sbr.rel (%p413) target = $region20
      $region19: #{model_forward.2} parent=11 // pred_region
        _
      $region20: #{model_forward.2} parent=11 // pred_fallthru
        _
    $region12: #{model_forward.2} parent=5 // pred_fallthru
      _
    %p416 = scmp.lt.s32.totalorder %s20, 2
    // Predicated region
    $region21: #{model_forward.2} parent=5 // pred_check
      %p417 = pneg %p416
    $region22: #{model_forward.2} parent=5 // pred_check_branch
      %419 = sbr.rel (%p417) target = $region24
    $region23: #{model_forward.2} parent=5 // pred_region
      // Predicated region
      $region25: #{model_forward.2} parent=23 // pred_check
        %p420 = pneg %p82
      $region26: #{model_forward.2} parent=23 // pred_check_branch
        %422 = sbr.rel (%p420) target = $region28
      $region27: #{model_forward.2} parent=23 // pred_region
        %p423 = scmp.lt.s32.totalorder %s20, 1
        %s424 = scalar_select %p423, %s20, 1
        %s425 = smul.addr %s424, 4
        %s426 = smul.addr %s425, 4
        %s427 = scalar_lea.vmem %s2, %s426
      $region28: #{model_forward.2} parent=23 // pred_fallthru
        _
      // Predicated region
      $region29: #{model_forward.2} parent=23 // pred_check
        %p428 = pneg %p108
      $region30: #{model_forward.2} parent=23 // pred_check_branch
        %430 = sbr.rel (%p428) target = $region32
      $region31: #{model_forward.2} parent=23 // pred_region
        %p431 = scmp.lt.s32.totalorder %s20, 1
        %s432 = scalar_select %p431, %s20, 1
        %s433 = scalar_lea.vmem %s3, %s432
      $region32: #{model_forward.2} parent=23 // pred_fallthru
        _
      // Predicated region
      $region33: #{model_forward.2} parent=23 // pred_check
        %p434 = pneg %p134
      $region34: #{model_forward.2} parent=23 // pred_check_branch
        %436 = sbr.rel (%p434) target = $region36
      $region35: #{model_forward.2} parent=23 // pred_region
        %p437 = scmp.lt.s32.totalorder %s20, 1
        %s438 = scalar_select %p437, %s20, 1
        %s439 = smul.addr %s438, 4
        %s440 = smul.addr %s439, 4
        %s441 = scalar_lea.vmem %s4, %s440
      $region36: #{model_forward.2} parent=23 // pred_fallthru
        _
      // Predicated region
      $region37: #{model_forward.2} parent=23 // pred_check
        %p442 = pneg %p160
      $region38: #{model_forward.2} parent=23 // pred_check_branch
        %444 = sbr.rel (%p442) target = $region40
      $region39: #{model_forward.2} parent=23 // pred_region
        %p445 = scmp.lt.s32.totalorder %s20, 1
        %s446 = scalar_select %p445, %s20, 1
        %s447 = scalar_lea.vmem %s5, %s446
      $region40: #{model_forward.2} parent=23 // pred_fallthru
        _
      // Predicated region
      $region41: #{model_forward.2} parent=23 // pred_check
        %p448 = pneg %p186
      $region42: #{model_forward.2} parent=23 // pred_check_branch
        %450 = sbr.rel (%p448) target = $region44
      $region43: #{model_forward.2} parent=23 // pred_region
        %p451 = scmp.lt.s32.totalorder %s20, 1
        %s452 = scalar_select %p451, %s20, 1
        %s453 = scalar_lea.vmem %s6, %s452
      $region44: #{model_forward.2} parent=23 // pred_fallthru
        _
      // Predicated region
      $region45: #{model_forward.2} parent=23 // pred_check
        %p454 = pneg %p212
      $region46: #{model_forward.2} parent=23 // pred_check_branch
        %456 = sbr.rel (%p454) target = $region48
      $region47: #{model_forward.2} parent=23 // pred_region
        %p457 = scmp.lt.s32.totalorder %s20, 1
        %s458 = scalar_select %p457, %s20, 1
        %s459 = scalar_lea.vmem %s7, %s458
      $region48: #{model_forward.2} parent=23 // pred_fallthru
        _
      // Predicated region
      $region49: #{model_forward.2} parent=23 // pred_check
        %p460 = pneg %p238
      $region50: #{model_forward.2} parent=23 // pred_check_branch
        %462 = sbr.rel (%p460) target = $region52
      $region51: #{model_forward.2} parent=23 // pred_region
        %p463 = scmp.lt.s32.totalorder %s20, 1
        %s464 = scalar_select %p463, %s20, 1
        %s465 = smul.addr %s464, 4
        %s466 = smul.addr %s465, 4
        %s467 = scalar_lea.vmem %s8, %s466
      $region52: #{model_forward.2} parent=23 // pred_fallthru
        _
      // Predicated region
      $region53: #{model_forward.2} parent=23 // pred_check
        %p468 = pneg %p264
      $region54: #{model_forward.2} parent=23 // pred_check_branch
        %470 = sbr.rel (%p468) target = $region56
      $region55: #{model_forward.2} parent=23 // pred_region
        %p471 = scmp.lt.s32.totalorder %s20, 1
        %s472 = scalar_select %p471, %s20, 1
        %s473 = scalar_lea.vmem %s9, %s472
      $region56: #{model_forward.2} parent=23 // pred_fallthru
        _
      // Predicated region
      $region57: #{model_forward.2} parent=23 // pred_check
        %p474 = pneg %p290
      $region58: #{model_forward.2} parent=23 // pred_check_branch
        %476 = sbr.rel (%p474) target = $region60
      $region59: #{model_forward.2} parent=23 // pred_region
        %p477 = scmp.lt.s32.totalorder %s20, 1
        %s478 = scalar_select %p477, %s20, 1
        %s479 = smul.addr %s478, 8
        %s480 = smul.addr %s479, 4
        %s481 = scalar_lea.vmem %s10, %s480
      $region60: #{model_forward.2} parent=23 // pred_fallthru
        _
      // Predicated region
      $region61: #{model_forward.2} parent=23 // pred_check
        %p482 = pneg %p316
      $region62: #{model_forward.2} parent=23 // pred_check_branch
        %484 = sbr.rel (%p482) target = $region64
      $region63: #{model_forward.2} parent=23 // pred_region
        %p485 = scmp.lt.s32.totalorder %s20, 1
        %s486 = scalar_select %p485, %s20, 1
        %s487 = scalar_lea.vmem %s11, %s486
      $region64: #{model_forward.2} parent=23 // pred_fallthru
        _
      // Predicated region
      $region65: #{model_forward.2} parent=23 // pred_check
        %p488 = pneg %p342
      $region66: #{model_forward.2} parent=23 // pred_check_branch
        %490 = sbr.rel (%p488) target = $region68
      $region67: #{model_forward.2} parent=23 // pred_region
        %p491 = scmp.lt.s32.totalorder %s20, 1
        %s492 = scalar_select %p491, %s20, 1
        %s493 = scalar_lea.vmem %s12, %s492
      $region68: #{model_forward.2} parent=23 // pred_fallthru
        _
      // Predicated region
      $region69: #{model_forward.2} parent=23 // pred_check
        %p494 = pneg %p368
      $region70: #{model_forward.2} parent=23 // pred_check_branch
        %496 = sbr.rel (%p494) target = $region72
      $region71: #{model_forward.2} parent=23 // pred_region
        %p497 = scmp.lt.s32.totalorder %s20, 1
        %s498 = scalar_select %p497, %s20, 1
        %s499 = scalar_lea.vmem %s13, %s498
      $region72: #{model_forward.2} parent=23 // pred_fallthru
        _
    $region24: #{model_forward.2} parent=5 // pred_fallthru
      _
    %p500 = scmp.le.s32.totalorder 1, %s20
    %p501 = scmp.lt.s32.totalorder %s20, 3
    %p502 = pnand %p500, %p501
    %p503 = pneg %p502
    // Predicated region
    $region73: #{model_forward.2} parent=5 // pred_check
      _
    $region74: #{model_forward.2} parent=5 // pred_check_branch
      %505 = sbr.rel (%p502) target = $region76
    $region75: #{model_forward.2} parent=5 // pred_region
      %s506 = ssub.s32 %s20, 1
      %p507 = pneg %p41
      %p508 = pneg %p38
      %p509 = pneg %p62
      %p510 = pneg %p59
      %p511 = scmp.lt.s32.totalorder %s25, 1
      %s512 = scalar_select %p511, %s25, 1
      %s513 = smul.addr %s512, 4
      %s514 = smul.addr %s513, 4
      %s515 = scalar_lea.vmem %s2, %s514
      %p516 = pneg %p88
      %p517 = pneg %p85
      %p518 = scmp.lt.s32.totalorder %s25, 1
      %s519 = scalar_select %p518, %s25, 1
      %s520 = scalar_lea.vmem %s3, %s519
      %p521 = pneg %p114
      %p522 = pneg %p111
      %p523 = scmp.lt.s32.totalorder %s25, 1
      %s524 = scalar_select %p523, %s25, 1
      %s525 = smul.addr %s524, 4
      %s526 = smul.addr %s525, 4
      %s527 = scalar_lea.vmem %s4, %s526
      %p528 = pneg %p140
      %p529 = pneg %p137
      %p530 = scmp.lt.s32.totalorder %s25, 1
      %s531 = scalar_select %p530, %s25, 1
      %s532 = scalar_lea.vmem %s5, %s531
      %p533 = pneg %p166
      %p534 = pneg %p163
      %p535 = scmp.lt.s32.totalorder %s25, 1
      %s536 = scalar_select %p535, %s25, 1
      %s537 = scalar_lea.vmem %s6, %s536
      %p538 = pneg %p192
      %p539 = pneg %p189
      %p540 = scmp.lt.s32.totalorder %s25, 1
      %s541 = scalar_select %p540, %s25, 1
      %s542 = scalar_lea.vmem %s7, %s541
      %p543 = pneg %p218
      %p544 = pneg %p215
      %p545 = scmp.lt.s32.totalorder %s25, 1
      %s546 = scalar_select %p545, %s25, 1
      %s547 = smul.addr %s546, 4
      %s548 = smul.addr %s547, 4
      %s549 = scalar_lea.vmem %s8, %s548
      %p550 = pneg %p244
      %p551 = pneg %p241
      %p552 = scmp.lt.s32.totalorder %s25, 1
      %s553 = scalar_select %p552, %s25, 1
      %s554 = scalar_lea.vmem %s9, %s553
      %p555 = pneg %p270
      %p556 = pneg %p267
      %p557 = scmp.lt.s32.totalorder %s25, 1
      %s558 = scalar_select %p557, %s25, 1
      %s559 = smul.addr %s558, 8
      %s560 = smul.addr %s559, 4
      %s561 = scalar_lea.vmem %s10, %s560
      %p562 = pneg %p296
      %p563 = pneg %p293
      %p564 = scmp.lt.s32.totalorder %s25, 1
      %s565 = scalar_select %p564, %s25, 1
      %s566 = scalar_lea.vmem %s11, %s565
      %p567 = pneg %p322
      %p568 = pneg %p319
      %p569 = scmp.lt.s32.totalorder %s25, 1
      %s570 = scalar_select %p569, %s25, 1
      %s571 = scalar_lea.vmem %s12, %s570
      %p572 = pneg %p348
      %p573 = pneg %p345
      %p574 = scmp.lt.s32.totalorder %s25, 1
      %s575 = scalar_select %p574, %s25, 1
      %s576 = scalar_lea.vmem %s13, %s575
      %p577 = pneg %p374
      %p578 = pneg %p371
      %p579 = pneg %p395
      %p580 = pneg %p392
      %p581 = scmp.lt.s32.totalorder %s25, 1
      %s582 = scalar_select %p581, %s25, 1
      %s583 = smul.addr %s582, 4
      %s584 = smul.addr %s583, 4
      %s585 = scalar_lea.vmem %s2, %s584
      %p586 = scmp.lt.s32.totalorder %s25, 1
      %s587 = scalar_select %p586, %s25, 1
      %s588 = scalar_lea.vmem %s3, %s587
      %p589 = scmp.lt.s32.totalorder %s25, 1
      %s590 = scalar_select %p589, %s25, 1
      %s591 = smul.addr %s590, 4
      %s592 = smul.addr %s591, 4
      %s593 = scalar_lea.vmem %s4, %s592
      %p594 = scmp.lt.s32.totalorder %s25, 1
      %s595 = scalar_select %p594, %s25, 1
      %s596 = scalar_lea.vmem %s5, %s595
      %p597 = scmp.lt.s32.totalorder %s25, 1
      %s598 = scalar_select %p597, %s25, 1
      %s599 = scalar_lea.vmem %s6, %s598
      %p600 = scmp.lt.s32.totalorder %s25, 1
      %s601 = scalar_select %p600, %s25, 1
      %s602 = scalar_lea.vmem %s7, %s601
      %p603 = scmp.lt.s32.totalorder %s25, 1
      %s604 = scalar_select %p603, %s25, 1
      %s605 = smul.addr %s604, 4
      %s606 = smul.addr %s605, 4
      %s607 = scalar_lea.vmem %s8, %s606
      %p608 = scmp.lt.s32.totalorder %s25, 1
      %s609 = scalar_select %p608, %s25, 1
      %s610 = scalar_lea.vmem %s9, %s609
      %p611 = scmp.lt.s32.totalorder %s25, 1
      %s612 = scalar_select %p611, %s25, 1
      %s613 = smul.addr %s612, 8
      %s614 = smul.addr %s613, 4
      %s615 = scalar_lea.vmem %s10, %s614
      %p616 = scmp.lt.s32.totalorder %s25, 1
      %s617 = scalar_select %p616, %s25, 1
      %s618 = scalar_lea.vmem %s11, %s617
      %p619 = scmp.lt.s32.totalorder %s25, 1
      %s620 = scalar_select %p619, %s25, 1
      %s621 = scalar_lea.vmem %s12, %s620
      %p622 = scmp.lt.s32.totalorder %s25, 1
      %s623 = scalar_select %p622, %s25, 1
      %s624 = scalar_lea.vmem %s13, %s623
      %p626 = scmp.eq.s32.totalorder %s25, 0
      // Predicated region
      $region77: #{model_forward.2} parent=75 // pred_check
        %p627 = pneg %p626
      $region78: #{model_forward.2} parent=75 // pred_check_branch
        %629 = sbr.rel (%p627) target = $region80
      $region79: #{model_forward.2} parent=75 // pred_region
        %v630 = vld [vmem:[%s0] sm:$0xff]
        %v631 = vld [vmem:[%s0 + $0x8] sm:$0xff]
        %vm632 = vcmask 261120
        %633 = vst.msk [vmem:[%s14] sm:$0xff] %vm632, %v630
        %634 = vst.msk [vmem:[%s14 + $0x8] sm:$0xff] %vm632, %v631
      $region80: #{model_forward.2} parent=75 // pred_fallthru
        _
      %v635 = vld [vmem:[%s14] sm:$0xff]
      %v636 = vld [vmem:[%s14 + $0x8] sm:$0xff]
      %v637 = vpack.c.bf16 %v636, %v635
      %v638 = vld [vmem:[%s585] sm:$0xf]
      %v639 = vld [vmem:[%s585 + $0x4] sm:$0xf]
      %v640 = vld [vmem:[%s585 + $0x8] sm:$0xf]
      %v641 = vld [vmem:[%s585 + $0xc] sm:$0xf]
      %v642 = vld [vmem:[%s588] sm:$0x1]
      %v644 = vperm.slane %v642, 0
      %v650 = vunpack.c.l.b16 %v638
      %v651 = vunpack.c.l.b16 %v639
      %v652 = vunpack.c.l.b16 %v640
      %v653 = vunpack.c.l.b16 %v641
      %v654 = vpack.c.b16 %v651, %v650
      %v655 = vpack.c.b16 %v653, %v652
      %vm658 = vcmask 261120
      %v660 = vsel %vm658, %v637, 0
      %662 = vmatpush.bf16.msra.mxu0 0
      %663 = vmatpush.bf16.msra.mxu0 0
      %664 = vmatpush.bf16.msra.mxu0 0
      %665 = vmatpush.bf16.msra.mxu0 0
      %666 = vmatpush.bf16.msra.mxu0 0
      %667 = vmatpush.bf16.msra.mxu0 0
      %668 = vmatpush.bf16.msra.mxu0 %v655
      %669 = vmatpush.bf16.msra.mxu0 %v654
      %670 = vmatmul.bf16.gmra.mxu0 %v660
      %v671 = vpop.f32.mrf.mxu0
      %v672 = vadd.f32 %v644, %v671
      %v673 = vpop.f32.mrf.mxu0
      %v674 = vadd.f32 %v644, %v673
      %675 = vdwg.mxu0
      %v676 = vpack.c.bf16 %v672, %v672
      %v677 = vpack.c.bf16 %v674, %v674
      %v678 = vld [vmem:[%s1] sm:$0x1]
      %v679 = vld [vmem:[%s1 + $0x1] sm:$0x1]
      %v682 = vperm.slane %v678, 0
      %v683 = vperm.slane %v679, 0
      %v687 = vunpack.c.l.b16 %v676
      %v688 = vpack.c.b16 %v687, %v687
      %689 = vrot.lane.b32.xlu0 %v688, 96
      %v690 = vpop.permute.xlu0 %689
      %vm691 = vcmask 130048
      %v693 = vsel %vm691, %v676, 0
      %v696 = vsel %vm691, %v690, 0
      %698 = vmatpush.bf16.xpose.msra.mxu0 0
      %699 = vmatpush.bf16.xpose.msra.mxu0 0
      %700 = vmatpush.bf16.xpose.msra.mxu0 0
      %701 = vmatpush.bf16.xpose.msra.mxu0 0
      %702 = vmatpush.bf16.xpose.msra.mxu0 0
      %703 = vmatpush.bf16.xpose.msra.mxu0 0
      %704 = vmatpush.bf16.xpose.msra.mxu0 0
      %705 = vmatpush.bf16.xpose.msra.mxu0 %v696
      %706 = vmatmul.bf16.gmra.mxu0 %v693
      %v707 = vpop.f32.mrf.mxu0
      %v708 = vadd.f32 0.0, %v707
      %v709 = vpop.f32.mrf.mxu0
      %710 = vdwg.mxu0
      %v712 = vunpack.c.l.b16 %v677
      %v713 = vpack.c.b16 %v712, %v712
      %714 = vrot.lane.b32.xlu0 %v713, 96
      %v715 = vpop.permute.xlu0 %714
      %v717 = vsel %vm691, %v677, 0
      %v720 = vsel %vm691, %v715, 0
      %722 = vmatpush.bf16.xpose.msra.mxu0 0
      %723 = vmatpush.bf16.xpose.msra.mxu0 0
      %724 = vmatpush.bf16.xpose.msra.mxu0 0
      %725 = vmatpush.bf16.xpose.msra.mxu0 0
      %726 = vmatpush.bf16.xpose.msra.mxu0 0
      %727 = vmatpush.bf16.xpose.msra.mxu0 0
      %728 = vmatpush.bf16.xpose.msra.mxu0 0
      %729 = vmatpush.bf16.xpose.msra.mxu0 %v720
      %730 = vmatmul.bf16.gmra.mxu0 %v717
      %v731 = vpop.f32.mrf.mxu0
      %v732 = vadd.f32 0.0, %v731
      %v733 = vpop.f32.mrf.mxu0
      %734 = vdwg.mxu0
      %v735 = vmul.f32 %v708, 0.25
      %v736 = vmul.f32 %v732, 0.25
      %v737 = vadd.f32 %v735, %v682
      %v738 = vadd.f32 %v736, %v683
      %vm739 = vcmask 64512
      %v740 = vsel %vm739, %v737, -inf
      %741 = vmax.xlane.f32.xlu0 %v740
      %v742 = vpop.xlane.xlu0 %741
      %v743 = vsel %vm739, %v738, -inf
      %744 = vmax.xlane.f32.xlu0 %v743
      %v745 = vpop.xlane.xlu0 %744
      %v746 = vsub.f32 %v737, %v742
      %v747 = vsub.f32 %v738, %v745
      %v748 = vmul.f32 %v746, 1.442695
      %v749 = vpow.pop %v748
      %v750 = vmul.f32 %v747, 1.442695
      %v751 = vpow.pop %v750
      %v752 = vsel %vm739, %v749, 0.0
      %753 = vadd.xlane.f32.xlu0 %v752
      %v754 = vpop.xlane.xlu0 %753
      %v755 = vsel %vm739, %v751, 0.0
      %756 = vadd.xlane.f32.xlu0 %v755
      %v757 = vpop.xlane.xlu0 %756
      %v758 = vrcp.pop %v754
      %v759 = vmul.f32 %v754, %v758
      %v760 = vsub.f32 1.0, %v759
      %v761 = vmul.f32 %v758, %v760
      %v762 = vadd.f32 %v758, %v761
      %vm763 = vweird.f32 %v754
      %vm764 = vweird.f32 %v758
      %vm765 = vmor %vm763, %vm764
      %v766 = vsel %vm765, %v758, %v762
      %v767 = vand.u32 2147483647, %v754
      %vm768 = vcmp.eq.f32.partialorder %v767, 8.507059e+37
      %v769 = vand.u32 %v754, 2147483648
      %v770 = vor.u32 1.1754944e-38, %v769
      %v771 = vsel %vm768, %v770, %v766
      %v772 = vrcp.pop %v757
      %v773 = vmul.f32 %v757, %v772
      %v774 = vsub.f32 1.0, %v773
      %v775 = vmul.f32 %v772, %v774
      %v776 = vadd.f32 %v772, %v775
      %vm777 = vweird.f32 %v757
      %vm778 = vweird.f32 %v772
      %vm779 = vmor %vm777, %vm778
      %v780 = vsel %vm779, %v772, %v776
      %v781 = vand.u32 2147483647, %v757
      %vm782 = vcmp.eq.f32.partialorder %v781, 8.507059e+37
      %v783 = vand.u32 %v757, 2147483648
      %v784 = vor.u32 1.1754944e-38, %v783
      %v785 = vsel %vm782, %v784, %v780
      %v786 = vmul.f32 %v749, %v771
      %v787 = vmul.f32 %v751, %v785
      %v788 = vpack.c.bf16 %v786, %v786
      %v789 = vpack.c.bf16 %v787, %v787
      %790 = vrot.lane.b32.xlu0 %v688, 64
      %v791 = vpop.permute.xlu0 %790
      %v793 = vsel %vm739, %v788, 0
      %vm795 = vcmask 1043456
      %v797 = vsel %vm795, %v791, 0
      %799 = vmatpush.bf16.msra.mxu0 0
      %800 = vmatpush.bf16.msra.mxu0 0
      %801 = vmatpush.bf16.msra.mxu0 0
      %802 = vmatpush.bf16.msra.mxu0 0
      %803 = vmatpush.bf16.msra.mxu0 0
      %804 = vmatpush.bf16.msra.mxu0 0
      %805 = vmatpush.bf16.msra.mxu0 0
      %806 = vmatpush.bf16.msra.mxu0 %v797
      %807 = vmatmul.bf16.gmra.mxu0 %v793
      %v808 = vpop.f32.mrf.mxu0
      %v809 = vadd.f32 0.0, %v808
      %v810 = vpop.f32.mrf.mxu0
      %811 = vdwg.mxu0
      %812 = vrot.lane.b32.xlu0 %v713, 64
      %v813 = vpop.permute.xlu0 %812
      %v815 = vsel %vm739, %v789, 0
      %v818 = vsel %vm795, %v813, 0
      %820 = vmatpush.bf16.msra.mxu0 0
      %821 = vmatpush.bf16.msra.mxu0 0
      %822 = vmatpush.bf16.msra.mxu0 0
      %823 = vmatpush.bf16.msra.mxu0 0
      %824 = vmatpush.bf16.msra.mxu0 0
      %825 = vmatpush.bf16.msra.mxu0 0
      %826 = vmatpush.bf16.msra.mxu0 0
      %827 = vmatpush.bf16.msra.mxu0 %v818
      %828 = vmatmul.bf16.gmra.mxu0 %v815
      %v829 = vpop.f32.mrf.mxu0
      %v830 = vadd.f32 0.0, %v829
      %v831 = vpop.f32.mrf.mxu0
      %832 = vdwg.mxu0
      %833 = vrot.lane.b32.xlu0 %v688, 112
      %v834 = vpop.permute.xlu0 %833
      %835 = vrot.lane.b32.xlu0 %v688, 80
      %v836 = vpop.permute.xlu0 %835
      %v838 = vsel %vm691, %v834, 0
      %v841 = vsel %vm691, %v836, 0
      %843 = vmatpush.bf16.xpose.msra.mxu0 0
      %844 = vmatpush.bf16.xpose.msra.mxu0 0
      %845 = vmatpush.bf16.xpose.msra.mxu0 0
      %846 = vmatpush.bf16.xpose.msra.mxu0 0
      %847 = vmatpush.bf16.xpose.msra.mxu0 0
      %848 = vmatpush.bf16.xpose.msra.mxu0 0
      %849 = vmatpush.bf16.xpose.msra.mxu0 0
      %850 = vmatpush.bf16.xpose.msra.mxu0 %v841
      %851 = vmatmul.bf16.gmra.mxu0 %v838
      %v852 = vpop.f32.mrf.mxu0
      %v853 = vadd.f32 0.0, %v852
      %v854 = vpop.f32.mrf.mxu0
      %855 = vdwg.mxu0
      %856 = vrot.lane.b32.xlu0 %v713, 112
      %v857 = vpop.permute.xlu0 %856
      %858 = vrot.lane.b32.xlu0 %v713, 80
      %v859 = vpop.permute.xlu0 %858
      %v861 = vsel %vm691, %v857, 0
      %v864 = vsel %vm691, %v859, 0
      %866 = vmatpush.bf16.xpose.msra.mxu0 0
      %867 = vmatpush.bf16.xpose.msra.mxu0 0
      %868 = vmatpush.bf16.xpose.msra.mxu0 0
      %869 = vmatpush.bf16.xpose.msra.mxu0 0
      %870 = vmatpush.bf16.xpose.msra.mxu0 0
      %871 = vmatpush.bf16.xpose.msra.mxu0 0
      %872 = vmatpush.bf16.xpose.msra.mxu0 0
      %873 = vmatpush.bf16.xpose.msra.mxu0 %v864
      %874 = vmatmul.bf16.gmra.mxu0 %v861
      %v875 = vpop.f32.mrf.mxu0
      %v876 = vadd.f32 0.0, %v875
      %v877 = vpop.f32.mrf.mxu0
      %878 = vdwg.mxu0
      %v879 = vmul.f32 %v853, 0.25
      %v880 = vmul.f32 %v876, 0.25
      %v881 = vadd.f32 %v879, %v682
      %v882 = vadd.f32 %v880, %v683
      %v883 = vsel %vm739, %v881, -inf
      %884 = vmax.xlane.f32.xlu0 %v883
      %v885 = vpop.xlane.xlu0 %884
      %v886 = vsel %vm739, %v882, -inf
      %887 = vmax.xlane.f32.xlu0 %v886
      %v888 = vpop.xlane.xlu0 %887
      %v889 = vsub.f32 %v881, %v885
      %v890 = vsub.f32 %v882, %v888
      %v891 = vmul.f32 %v889, 1.442695
      %v892 = vpow.pop %v891
      %v893 = vmul.f32 %v890, 1.442695
      %v894 = vpow.pop %v893
      %v895 = vsel %vm739, %v892, 0.0
      %896 = vadd.xlane.f32.xlu0 %v895
      %v897 = vpop.xlane.xlu0 %896
      %v898 = vsel %vm739, %v894, 0.0
      %899 = vadd.xlane.f32.xlu0 %v898
      %v900 = vpop.xlane.xlu0 %899
      %v901 = vrcp.pop %v897
      %v902 = vmul.f32 %v897, %v901
      %v903 = vsub.f32 1.0, %v902
      %v904 = vmul.f32 %v901, %v903
      %v905 = vadd.f32 %v901, %v904
      %vm906 = vweird.f32 %v897
      %vm907 = vweird.f32 %v901
      %vm908 = vmor %vm906, %vm907
      %v909 = vsel %vm908, %v901, %v905
      %v910 = vand.u32 2147483647, %v897
      %vm911 = vcmp.eq.f32.partialorder %v910, 8.507059e+37
      %v912 = vand.u32 %v897, 2147483648
      %v913 = vor.u32 1.1754944e-38, %v912
      %v914 = vsel %vm911, %v913, %v909
      %v915 = vrcp.pop %v900
      %v916 = vmul.f32 %v900, %v915
      %v917 = vsub.f32 1.0, %v916
      %v918 = vmul.f32 %v915, %v917
      %v919 = vadd.f32 %v915, %v918
      %vm920 = vweird.f32 %v900
      %vm921 = vweird.f32 %v915
      %vm922 = vmor %vm920, %vm921
      %v923 = vsel %vm922, %v915, %v919
      %v924 = vand.u32 2147483647, %v900
      %vm925 = vcmp.eq.f32.partialorder %v924, 8.507059e+37
      %v926 = vand.u32 %v900, 2147483648
      %v927 = vor.u32 1.1754944e-38, %v926
      %v928 = vsel %vm925, %v927, %v923
      %v929 = vmul.f32 %v892, %v914
      %v930 = vmul.f32 %v894, %v928
      %v931 = vpack.c.bf16 %v929, %v929
      %v932 = vpack.c.bf16 %v930, %v930
      %933 = vrot.lane.b32.xlu0 %v688, 48
      %v934 = vpop.permute.xlu0 %933
      %v936 = vsel %vm739, %v931, 0
      %v939 = vsel %vm795, %v934, 0
      %941 = vmatpush.bf16.msra.mxu0 0
      %942 = vmatpush.bf16.msra.mxu0 0
      %943 = vmatpush.bf16.msra.mxu0 0
      %944 = vmatpush.bf16.msra.mxu0 0
      %945 = vmatpush.bf16.msra.mxu0 0
      %946 = vmatpush.bf16.msra.mxu0 0
      %947 = vmatpush.bf16.msra.mxu0 0
      %948 = vmatpush.bf16.msra.mxu0 %v939
      %949 = vmatmul.bf16.gmra.mxu0 %v936
      %v950 = vpop.f32.mrf.mxu0
      %v951 = vadd.f32 0.0, %v950
      %v952 = vpop.f32.mrf.mxu0
      %953 = vdwg.mxu0
      %954 = vrot.lane.b32.xlu0 %v713, 48
      %v955 = vpop.permute.xlu0 %954
      %v957 = vsel %vm739, %v932, 0
      %v960 = vsel %vm795, %v955, 0
      %962 = vmatpush.bf16.msra.mxu0 0
      %963 = vmatpush.bf16.msra.mxu0 0
      %964 = vmatpush.bf16.msra.mxu0 0
      %965 = vmatpush.bf16.msra.mxu0 0
      %966 = vmatpush.bf16.msra.mxu0 0
      %967 = vmatpush.bf16.msra.mxu0 0
      %968 = vmatpush.bf16.msra.mxu0 0
      %969 = vmatpush.bf16.msra.mxu0 %v960
      %970 = vmatmul.bf16.gmra.mxu0 %v957
      %v971 = vpop.f32.mrf.mxu0
      %v972 = vadd.f32 0.0, %v971
      %v973 = vpop.f32.mrf.mxu0
      %974 = vdwg.mxu0
      %977 = vrot.lane.b32.xlu0 %v951, 16
      %v978 = vpop.permute.xlu0 %977
      %979 = vrot.lane.b32.xlu0 %v972, 16
      %v980 = vpop.permute.xlu0 %979
      %v983 = vsel %vm691, %v809, %v978
      %v984 = vsel %vm691, %v830, %v980
      %v985 = vpack.c.bf16 %v984, %v983
      %v986 = vld [vmem:[%s593] sm:$0xf]
      %v987 = vld [vmem:[%s593 + $0x4] sm:$0xf]
      %v988 = vld [vmem:[%s593 + $0x8] sm:$0xf]
      %v989 = vld [vmem:[%s593 + $0xc] sm:$0xf]
      %v990 = vld [vmem:[%s596] sm:$0x1]
      %v992 = vperm.slane %v990, 0
      %v998 = vunpack.c.l.b16 %v986
      %v999 = vunpack.c.l.b16 %v987
      %v1000 = vunpack.c.l.b16 %v988
      %v1001 = vunpack.c.l.b16 %v989
      %v1002 = vpack.c.b16 %v999, %v998
      %v1003 = vpack.c.b16 %v1001, %v1000
      %v1007 = vsel %vm658, %v985, 0
      %1009 = vmatpush.bf16.msra.mxu0 0
      %1010 = vmatpush.bf16.msra.mxu0 0
      %1011 = vmatpush.bf16.msra.mxu0 0
      %1012 = vmatpush.bf16.msra.mxu0 0
      %1013 = vmatpush.bf16.msra.mxu0 0
      %1014 = vmatpush.bf16.msra.mxu0 0
      %1015 = vmatpush.bf16.msra.mxu0 %v1003
      %1016 = vmatpush.bf16.msra.mxu0 %v1002
      %1017 = vmatmul.bf16.gmra.mxu0 %v1007
      %v1018 = vpop.f32.mrf.mxu0
      %v1019 = vadd.f32 %v992, %v1018
      %v1020 = vpop.f32.mrf.mxu0
      %v1021 = vadd.f32 %v992, %v1020
      %1022 = vdwg.mxu0
      %v1023 = vadd.f32 %v635, %v1019
      %v1024 = vadd.f32 %v636, %v1021
      %v1025 = vld [vmem:[%s599] sm:$0x1]
      %v1026 = vld [vmem:[%s602] sm:$0x1]
      %v1027 = vsel %vm658, %v1023, 0.0
      %1028 = vadd.xlane.f32.xlu0 %v1027
      %v1029 = vpop.xlane.xlu0 %1028
      %v1030 = vsel %vm658, %v1024, 0.0
      %1031 = vadd.xlane.f32.xlu0 %v1030
      %v1032 = vpop.xlane.xlu0 %1031
      %v1033 = vrcp.pop 32.0
      %v1034 = vmul.f32 32.0, %v1033
      %v1035 = vsub.f32 1.0, %v1034
      %v1036 = vmul.f32 %v1033, %v1035
      %v1037 = vadd.f32 %v1033, %v1036
      %vm1038 = vweird.f32 %v1033
      %v1039 = vsel %vm1038, %v1033, %v1037
      %v1040 = vmul.f32 %v1029, %v1039
      %v1041 = vmul.f32 %v1032, %v1039
      %v1042 = vsub.f32 %v1023, %v1040
      %v1043 = vsub.f32 %v1024, %v1041
      %v1044 = vmul.f32 %v1042, %v1042
      %v1045 = vmul.f32 %v1043, %v1043
      %v1046 = vsel %vm658, %v1044, 0.0
      %1047 = vadd.xlane.f32.xlu0 %v1046
      %v1048 = vpop.xlane.xlu0 %1047
      %v1049 = vsel %vm658, %v1045, 0.0
      %1050 = vadd.xlane.f32.xlu0 %v1049
      %v1051 = vpop.xlane.xlu0 %1050
      %v1052 = vmul.f32 %v1048, %v1039
      %v1053 = vmul.f32 %v1051, %v1039
      %v1054 = vadd.f32 %v1052, 1e-12
      %v1055 = vadd.f32 %v1053, 1e-12
      %v1056 = vrsqrt.pop %v1054
      %v1057 = vmul.f32 %v1056, %v1054
      %v1058 = vmul.f32 %v1057, %v1056
      %v1059 = vmul.f32 0.5, %v1058
      %v1060 = vsub.f32 1.5, %v1059
      %v1061 = vmul.f32 %v1056, %v1060
      %vm1062 = vweird.f32 %v1054
      %vm1063 = vweird.f32 %v1056
      %vm1064 = vmor %vm1062, %vm1063
      %v1065 = vsel %vm1064, %v1056, %v1061
      %v1066 = vrsqrt.pop %v1055
      %v1067 = vmul.f32 %v1066, %v1055
      %v1068 = vmul.f32 %v1067, %v1066
      %v1069 = vmul.f32 0.5, %v1068
      %v1070 = vsub.f32 1.5, %v1069
      %v1071 = vmul.f32 %v1066, %v1070
      %vm1072 = vweird.f32 %v1055
      %vm1073 = vweird.f32 %v1066
      %vm1074 = vmor %vm1072, %vm1073
      %v1075 = vsel %vm1074, %v1066, %v1071
      %v1076 = vmul.f32 %v1042, %v1065
      %v1077 = vmul.f32 %v1043, %v1075
      %v1079 = vperm.slane %v1025, 0
      %v1081 = vmul.f32 %v1076, %v1079
      %v1082 = vmul.f32 %v1077, %v1079
      %v1084 = vperm.slane %v1026, 0
      %v1086 = vadd.f32 %v1081, %v1084
      %v1087 = vadd.f32 %v1082, %v1084
      %v1088 = vpack.c.bf16 %v1087, %v1086
      %v1089 = vld [vmem:[%s607] sm:$0xf]
      %v1090 = vld [vmem:[%s607 + $0x4] sm:$0xf]
      %v1091 = vld [vmem:[%s607 + $0x8] sm:$0xf]
      %v1092 = vld [vmem:[%s607 + $0xc] sm:$0xf]
      %v1093 = vld [vmem:[%s610] sm:$0x1]
      %v1095 = vperm.slane %v1093, 0
      %v1101 = vunpack.c.l.b16 %v1089
      %v1102 = vunpack.c.l.b16 %v1090
      %v1103 = vunpack.c.l.b16 %v1091
      %v1104 = vunpack.c.l.b16 %v1092
      %v1105 = vpack.c.b16 %v1102, %v1101
      %v1106 = vpack.c.b16 %v1104, %v1103
      %v1110 = vsel %vm658, %v1088, 0
      %1112 = vmatpush.bf16.msra.mxu0 0
      %1113 = vmatpush.bf16.msra.mxu0 0
      %1114 = vmatpush.bf16.msra.mxu0 0
      %1115 = vmatpush.bf16.msra.mxu0 0
      %1116 = vmatpush.bf16.msra.mxu0 0
      %1117 = vmatpush.bf16.msra.mxu0 0
      %1118 = vmatpush.bf16.msra.mxu0 %v1106
      %1119 = vmatpush.bf16.msra.mxu0 %v1105
      %1120 = vmatmul.bf16.gmra.mxu0 %v1110
      %v1121 = vpop.f32.mrf.mxu0
      %v1122 = vadd.f32 %v1095, %v1121
      %v1123 = vpop.f32.mrf.mxu0
      %v1124 = vadd.f32 %v1095, %v1123
      %1125 = vdwg.mxu0
      %v1126 = vmul.f32 %v1122, 0.5
      %v1127 = vmul.f32 %v1124, 0.5
      %v1128 = vmul.f32 %v1122, 0.044715
      %v1129 = vmul.f32 %v1124, 0.044715
      %v1130 = vmul.f32 %v1128, %v1122
      %v1131 = vmul.f32 %v1129, %v1124
      %v1132 = vmul.f32 %v1130, %v1122
      %v1133 = vmul.f32 %v1131, %v1124
      %v1134 = vadd.f32 %v1122, %v1132
      %v1135 = vadd.f32 %v1124, %v1133
      %v1136 = vmul.f32 %v1134, 0.7978846
      %v1137 = vmul.f32 %v1135, 0.7978846
      %v1138 = vtanh.pop %v1136
      %v1139 = vtanh.pop %v1137
      %v1140 = vadd.f32 %v1138, 1.0
      %v1141 = vadd.f32 %v1139, 1.0
      %v1142 = vmul.f32 %v1126, %v1140
      %v1143 = vmul.f32 %v1127, %v1141
      %v1144 = vpack.c.bf16 %v1143, %v1142
      %v1145 = vld [vmem:[%s615] sm:$0xf]
      %v1146 = vld [vmem:[%s615 + $0x4] sm:$0xf]
      %v1147 = vld [vmem:[%s615 + $0x8] sm:$0xf]
      %v1148 = vld [vmem:[%s615 + $0xc] sm:$0xf]
      %v1149 = vld [vmem:[%s615 + $0x10] sm:$0xf]
      %v1150 = vld [vmem:[%s615 + $0x14] sm:$0xf]
      %v1151 = vld [vmem:[%s615 + $0x18] sm:$0xf]
      %v1152 = vld [vmem:[%s615 + $0x1c] sm:$0xf]
      %v1153 = vld [vmem:[%s618] sm:$0x1]
      %v1155 = vperm.slane %v1153, 0
      %v1165 = vunpack.c.l.b16 %v1145
      %v1166 = vunpack.c.l.b16 %v1146
      %v1167 = vunpack.c.l.b16 %v1147
      %v1168 = vunpack.c.l.b16 %v1148
      %v1169 = vunpack.c.l.b16 %v1149
      %v1170 = vunpack.c.l.b16 %v1150
      %v1171 = vunpack.c.l.b16 %v1151
      %v1172 = vunpack.c.l.b16 %v1152
      %v1173 = vpack.c.b16 %v1166, %v1165
      %v1174 = vpack.c.b16 %v1168, %v1167
      %v1175 = vpack.c.b16 %v1170, %v1169
      %v1176 = vpack.c.b16 %v1172, %v1171
      %vm1181 = vcmask 523264
      %v1183 = vsel %vm1181, %v1144, 0
      %1185 = vmatpush.bf16.msra.mxu0 0
      %1186 = vmatpush.bf16.msra.mxu0 0
      %1187 = vmatpush.bf16.msra.mxu0 0
      %1188 = vmatpush.bf16.msra.mxu0 0
      %1189 = vmatpush.bf16.msra.mxu0 %v1176
      %1190 = vmatpush.bf16.msra.mxu0 %v1175
      %1191 = vmatpush.bf16.msra.mxu0 %v1174
      %1192 = vmatpush.bf16.msra.mxu0 %v1173
      %1193 = vmatmul.bf16.gmra.mxu0 %v1183
      %v1194 = vpop.f32.mrf.mxu0
      %v1195 = vadd.f32 %v1155, %v1194
      %v1196 = vpop.f32.mrf.mxu0
      %v1197 = vadd.f32 %v1155, %v1196
      %1198 = vdwg.mxu0
      %v1199 = vadd.f32 %v1086, %v1195
      %v1200 = vadd.f32 %v1087, %v1197
      %v1201 = vld [vmem:[%s621] sm:$0x1]
      %v1202 = vld [vmem:[%s624] sm:$0x1]
      %v1203 = vsel %vm658, %v1199, 0.0
      %1204 = vadd.xlane.f32.xlu0 %v1203
      %v1205 = vpop.xlane.xlu0 %1204
      %v1206 = vsel %vm658, %v1200, 0.0
      %1207 = vadd.xlane.f32.xlu0 %v1206
      %v1208 = vpop.xlane.xlu0 %1207
      %v1209 = vmul.f32 %v1205, %v1039
      %v1210 = vmul.f32 %v1208, %v1039
      %v1211 = vsub.f32 %v1199, %v1209
      %v1212 = vsub.f32 %v1200, %v1210
      %v1213 = vmul.f32 %v1211, %v1211
      %v1214 = vmul.f32 %v1212, %v1212
      %v1215 = vsel %vm658, %v1213, 0.0
      %1216 = vadd.xlane.f32.xlu0 %v1215
      %v1217 = vpop.xlane.xlu0 %1216
      %v1218 = vsel %vm658, %v1214, 0.0
      %1219 = vadd.xlane.f32.xlu0 %v1218
      %v1220 = vpop.xlane.xlu0 %1219
      %v1221 = vmul.f32 %v1217, %v1039
      %v1222 = vmul.f32 %v1220, %v1039
      %v1223 = vadd.f32 %v1221, 1e-12
      %v1224 = vadd.f32 %v1222, 1e-12
      %v1225 = vrsqrt.pop %v1223
      %v1226 = vmul.f32 %v1225, %v1223
      %v1227 = vmul.f32 %v1226, %v1225
      %v1228 = vmul.f32 0.5, %v1227
      %v1229 = vsub.f32 1.5, %v1228
      %v1230 = vmul.f32 %v1225, %v1229
      %vm1231 = vweird.f32 %v1223
      %vm1232 = vweird.f32 %v1225
      %vm1233 = vmor %vm1231, %vm1232
      %v1234 = vsel %vm1233, %v1225, %v1230
      %v1235 = vrsqrt.pop %v1224
      %v1236 = vmul.f32 %v1235, %v1224
      %v1237 = vmul.f32 %v1236, %v1235
      %v1238 = vmul.f32 0.5, %v1237
      %v1239 = vsub.f32 1.5, %v1238
      %v1240 = vmul.f32 %v1235, %v1239
      %vm1241 = vweird.f32 %v1224
      %vm1242 = vweird.f32 %v1235
      %vm1243 = vmor %vm1241, %vm1242
      %v1244 = vsel %vm1243, %v1235, %v1240
      %v1245 = vmul.f32 %v1211, %v1234
      %v1246 = vmul.f32 %v1212, %v1244
      %v1248 = vperm.slane %v1201, 0
      %v1250 = vmul.f32 %v1245, %v1248
      %v1251 = vmul.f32 %v1246, %v1248
      %v1253 = vperm.slane %v1202, 0
      %v1255 = vadd.f32 %v1250, %v1253
      %v1256 = vadd.f32 %v1251, %v1253
      %1257 = vst.msk [vmem:[%s14] sm:$0xff] %vm658, %v1255
      %1258 = vst.msk [vmem:[%s14 + $0x8] sm:$0xff] %vm658, %v1256
      // Predicated region
      $region81: #{model_forward.2} parent=75 // pred_check
        %p1259 = pneg %p392
      $region82: #{model_forward.2} parent=75 // pred_check_branch
        %1261 = sbr.rel (%p1259) target = $region84
      $region83: #{model_forward.2} parent=75 // pred_region
        _
      $region84: #{model_forward.2} parent=75 // pred_fallthru
        _
      // Predicated region
      $region85: #{model_forward.2} parent=75 // pred_check
        %p1262 = pneg %p392
      $region86: #{model_forward.2} parent=75 // pred_check_branch
        %1264 = sbr.rel (%p1262) target = $region88
      $region87: #{model_forward.2} parent=75 // pred_region
        _
      $region88: #{model_forward.2} parent=75 // pred_fallthru
        _
    $region76: #{model_forward.2} parent=5 // pred_fallthru
      _
    %p1265 = scmp.le.s32.totalorder 2, %s20
    // Predicated region
    $region89: #{model_forward.2} parent=5 // pred_check
      %p1266 = pneg %p1265
    $region90: #{model_forward.2} parent=5 // pred_check_branch
      %1268 = sbr.rel (%p1266) target = $region92
    $region91: #{model_forward.2} parent=5 // pred_region
      %s1269 = ssub.s32 %s20, 2
    $region92: #{model_forward.2} parent=5 // pred_fallthru
      _
  $region6: #{model_forward.2} parent=0 // loop_footer
    %s24 = sadd.s32 1, %s20
  $region7: #{model_forward.2} parent=0 // loop_footer_branch
    %19 = sbr.rel target = $region3
  $region8: #{model_forward.2} parent=0 // loop_exit
    _

// kernel: model_forward.3
$region0: #{model_forward.3}
  #allocation0 [shape = 'u32[]', space=smem, size = 0x4, offset = 0x4, fixed_abs, tag = 'smem constant byte address 0x4 - core index']
  #allocation1 [shape = 'u32[72,128]{1,0:T(1,128)}', space=vmem, size = 0x9000, scoped, tag = 'internal scratch']
  #allocation2 [shape = 'f32[8,128]{1,0:T(8,128)}', space=vmem, size = 0x1000, scoped, tag = 'scratch operand']
  %s0 = inlined_call_operand.vmem [shape: f32[2,8,32], index: 0, kind: input, shape index: {}]
  %s1 = inlined_call_operand.vmem [shape: bf16[3,32,128], index: 1, kind: input, shape index: {}]
  %s2 = inlined_call_operand.vmem [shape: f32[1,128], index: 2, kind: input, shape index: {}]
  %s3 = inlined_call_operand.vmem [shape: bf16[3,128,128], index: 3, kind: input, shape index: {}]
  %s4 = inlined_call_operand.vmem [shape: f32[1,128], index: 4, kind: input, shape index: {}]
  %s5 = inlined_call_operand.vmem [shape: bf16[128,128], index: 5, kind: input, shape index: {}]
  %s6 = inlined_call_operand.vmem [shape: f32[1,128], index: 6, kind: input, shape index: {}]
  %s7 = inlined_call_operand.hbm [shape: f32[2,1,128], index: 7, kind: output, shape index: {}]
  %s8 = sld [smem:[#allocation0]]
  $region61: #{model_forward.3} parent=0
    _
  %s10 = ssub.s32 1, %s8
  %s11 = scalar_select 0, %s10, %s8
  $region1: #{model_forward.3} parent=0
    #allocation3 [shape = 'u8[1024]{0}', space=vmem, size = 0x400, scoped, tag = 'output window, operand 0']
    #allocation4 [shape = 's32[2]{0}', space=sflag, size = 0x8, scoped, tag = 'scoped memory for model_forward.3']
    %12 = vsyncpa [#allocation4], 0
    %s13 = scalar_lea.sflag [#allocation4], 1
    %14 = vsyncpa %s13, 0
    loop: start=0, step=1, limit=4
    $region2: #{model_forward.3} parent=1 // loop_pre_header
      _
    $region3: #{model_forward.3} parent=1 // loop_header
      %s16 = sphi 0, %s20
      %p17 = scmp.ge.s32.totalorder %s16, 4
      %s26 = sphi 0, %s28
      %s29 = sphi 0, %s26
      %s30 = sphi 0, %s29
      %s46 = sphi 0, %s30
      %s50 = sphi 0, %s50
      %s52 = sphi 0, %s50
      %s53 = sphi 0, %s52
      %s67 = sphi 0, %s53
      %s71 = sphi 0, %s71
      %s73 = sphi 0, %s71
      %s74 = sphi 0, %s73
      %s88 = sphi 0, %s74
      %s92 = sphi 0, %s92
      %s94 = sphi 0, %s92
      %s95 = sphi 0, %s94
      %s109 = sphi 0, %s95
      %s113 = sphi 0, %s113
      %s115 = sphi 0, %s113
      %s116 = sphi 0, %s115
      %s130 = sphi 0, %s116
      %s134 = sphi 0, %s134
      %s136 = sphi 0, %s134
      %s137 = sphi 0, %s136
      %s151 = sphi 0, %s137
      %s155 = sphi 0, %s155
      %s157 = sphi 0, %s155
      %s158 = sphi 0, %s157
      %s172 = sphi 0, %s158
      %s178 = sphi 0, %s180
      %s181 = sphi 0, %s178
      %s182 = sphi 0, %s181
      %s198 = sphi 0, %s182
    $region4: #{model_forward.3} parent=1 // loop_header_branch
      %19 = sbr.rel (%p17) target = $region8
    $region5: #{model_forward.3} parent=1 // loop_body
      %s21 = ssub.s32 %s16, 1
      %s22 = ssub.s32 %s16, 2
      %s23 = sadd.s32 %s16, 1
      %s24 = ssub.s32 %s16, %s23
      %p25 = scmp.eq.s32.totalorder %s24, 0
      %s27 = sadd.s32 %s26, 1
      %s28 = scalar_select %p25, %s26, %s27
      %p31 = pneg %p25
      %p32 = scmp.eq.s32.totalorder %s16, 1
      %p33 = por %p31, %p32
      %p34 = scmp.ne.s32.totalorder %s26, %s29
      %p35 = scmp.eq.s32.totalorder %s16, 0
      %p36 = por %p34, %p35
      %p37 = scmp.ne.s32.totalorder %s26, %s29
      %p38 = scmp.eq.s32.totalorder %s21, 1
      %p39 = por %p37, %p38
      %p40 = scmp.ne.s32.totalorder %s29, %s30
      %p41 = scmp.eq.s32.totalorder %s21, 0
      %p42 = por %p40, %p41
      %p43 = scmp.ne.s32.totalorder %s29, %s30
      %p44 = scmp.eq.s32.totalorder %s22, 1
      %p45 = por %p43, %p44
      %p47 = scmp.ne.s32.totalorder %s30, %s46
      %p48 = scmp.eq.s32.totalorder %s22, 0
      %p49 = por %p47, %p48
      %s51 = sadd.s32 %s50, 1
      %p54 = scmp.eq.s32.totalorder %s16, 1
      %p55 = scmp.ne.s32.totalorder %s50, %s52
      %p56 = scmp.eq.s32.totalorder %s16, 0
      %p57 = por %p55, %p56
      %p58 = scmp.ne.s32.totalorder %s50, %s52
      %p59 = scmp.eq.s32.totalorder %s21, 1
      %p60 = por %p58, %p59
      %p61 = scmp.ne.s32.totalorder %s52, %s53
      %p62 = scmp.eq.s32.totalorder %s21, 0
      %p63 = por %p61, %p62
      %p64 = scmp.ne.s32.totalorder %s52, %s53
      %p65 = scmp.eq.s32.totalorder %s22, 1
      %p66 = por %p64, %p65
      %p68 = scmp.ne.s32.totalorder %s53, %s67
      %p69 = scmp.eq.s32.totalorder %s22, 0
      %p70 = por %p68, %p69
      %s72 = sadd.s32 %s71, 1
      %p75 = scmp.eq.s32.totalorder %s16, 1
      %p76 = scmp.ne.s32.totalorder %s71, %s73
      %p77 = scmp.eq.s32.totalorder %s16, 0
      %p78 = por %p76, %p77
      %p79 = scmp.ne.s32.totalorder %s71, %s73
      %p80 = scmp.eq.s32.totalorder %s21, 1
      %p81 = por %p79, %p80
      %p82 = scmp.ne.s32.totalorder %s73, %s74
      %p83 = scmp.eq.s32.totalorder %s21, 0
      %p84 = por %p82, %p83
      %p85 = scmp.ne.s32.totalorder %s73, %s74
      %p86 = scmp.eq.s32.totalorder %s22, 1
      %p87 = por %p85, %p86
      %p89 = scmp.ne.s32.totalorder %s74, %s88
      %p90 = scmp.eq.s32.totalorder %s22, 0
      %p91 = por %p89, %p90
      %s93 = sadd.s32 %s92, 1
      %p96 = scmp.eq.s32.totalorder %s16, 1
      %p97 = scmp.ne.s32.totalorder %s92, %s94
      %p98 = scmp.eq.s32.totalorder %s16, 0
      %p99 = por %p97, %p98
      %p100 = scmp.ne.s32.totalorder %s92, %s94
      %p101 = scmp.eq.s32.totalorder %s21, 1
      %p102 = por %p100, %p101
      %p103 = scmp.ne.s32.totalorder %s94, %s95
      %p104 = scmp.eq.s32.totalorder %s21, 0
      %p105 = por %p103, %p104
      %p106 = scmp.ne.s32.totalorder %s94, %s95
      %p107 = scmp.eq.s32.totalorder %s22, 1
      %p108 = por %p106, %p107
      %p110 = scmp.ne.s32.totalorder %s95, %s109
      %p111 = scmp.eq.s32.totalorder %s22, 0
      %p112 = por %p110, %p111
      %s114 = sadd.s32 %s113, 1
      %p117 = scmp.eq.s32.totalorder %s16, 1
      %p118 = scmp.ne.s32.totalorder %s113, %s115
      %p119 = scmp.eq.s32.totalorder %s16, 0
      %p120 = por %p118, %p119
      %p121 = scmp.ne.s32.totalorder %s113, %s115
      %p122 = scmp.eq.s32.totalorder %s21, 1
      %p123 = por %p121, %p122
      %p124 = scmp.ne.s32.totalorder %s115, %s116
      %p125 = scmp.eq.s32.totalorder %s21, 0
      %p126 = por %p124, %p125
      %p127 = scmp.ne.s32.totalorder %s115, %s116
      %p128 = scmp.eq.s32.totalorder %s22, 1
      %p129 = por %p127, %p128
      %p131 = scmp.ne.s32.totalorder %s116, %s130
      %p132 = scmp.eq.s32.totalorder %s22, 0
      %p133 = por %p131, %p132
      %s135 = sadd.s32 %s134, 1
      %p138 = scmp.eq.s32.totalorder %s16, 1
      %p139 = scmp.ne.s32.totalorder %s134, %s136
      %p140 = scmp.eq.s32.totalorder %s16, 0
      %p141 = por %p139, %p140
      %p142 = scmp.ne.s32.totalorder %s134, %s136
      %p143 = scmp.eq.s32.totalorder %s21, 1
      %p144 = por %p142, %p143
      %p145 = scmp.ne.s32.totalorder %s136, %s137
      %p146 = scmp.eq.s32.totalorder %s21, 0
      %p147 = por %p145, %p146
      %p148 = scmp.ne.s32.totalorder %s136, %s137
      %p149 = scmp.eq.s32.totalorder %s22, 1
      %p150 = por %p148, %p149
      %p152 = scmp.ne.s32.totalorder %s137, %s151
      %p153 = scmp.eq.s32.totalorder %s22, 0
      %p154 = por %p152, %p153
      %s156 = sadd.s32 %s155, 1
      %p159 = scmp.eq.s32.totalorder %s16, 1
      %p160 = scmp.ne.s32.totalorder %s155, %s157
      %p161 = scmp.eq.s32.totalorder %s16, 0
      %p162 = por %p160, %p161
      %p163 = scmp.ne.s32.totalorder %s155, %s157
      %p164 = scmp.eq.s32.totalorder %s21, 1
      %p165 = por %p163, %p164
      %p166 = scmp.ne.s32.totalorder %s157, %s158
      %p167 = scmp.eq.s32.totalorder %s21, 0
      %p168 = por %p166, %p167
      %p169 = scmp.ne.s32.totalorder %s157, %s158
      %p170 = scmp.eq.s32.totalorder %s22, 1
      %p171 = por %p169, %p170
      %p173 = scmp.ne.s32.totalorder %s158, %s172
      %p174 = scmp.eq.s32.totalorder %s22, 0
      %p175 = por %p173, %p174
      %s176 = ssub.s32 %s16, %s23
      %p177 = scmp.eq.s32.totalorder %s176, 0
      %s179 = sadd.s32 %s178, 1
      %s180 = scalar_select %p177, %s178, %s179
      %p183 = pneg %p177
      %p184 = scmp.eq.s32.totalorder %s16, 1
      %p185 = por %p183, %p184
      %p186 = scmp.ne.s32.totalorder %s178, %s181
      %p187 = scmp.eq.s32.totalorder %s16, 0
      %p188 = por %p186, %p187
      %p189 = scmp.ne.s32.totalorder %s178, %s181
      %p190 = scmp.eq.s32.totalorder %s21, 1
      %p191 = por %p189, %p190
      %p192 = scmp.ne.s32.totalorder %s181, %s182
      %p193 = scmp.eq.s32.totalorder %s21, 0
      %p194 = por %p192, %p193
      %p195 = scmp.ne.s32.totalorder %s181, %s182
      %p196 = scmp.eq.s32.totalorder %s22, 1
      %p197 = por %p195, %p196
      %p199 = scmp.ne.s32.totalorder %s182, %s198
      %p200 = scmp.eq.s32.totalorder %s22, 0
      %p201 = por %p199, %p200
      %p202 = scmp.le.s32.totalorder 1, %s16
      %p203 = scmp.lt.s32.totalorder %s16, 3
      %p204 = pnand %p202, %p203
      %p205 = pneg %p204
      // Predicated region
      $region9: #{model_forward.3} parent=5 // pred_check
        _
      $region10: #{model_forward.3} parent=5 // pred_check_branch
        %207 = sbr.rel (%p204) target = $region12
      $region11: #{model_forward.3} parent=5 // pred_region
        %s208 = ssub.s32 %s16, 1
        // Predicated region
        $region13: #{model_forward.3} parent=11 // pred_check
          %p209 = pneg %p63
        $region14: #{model_forward.3} parent=11 // pred_check_branch
          %211 = sbr.rel (%p209) target = $region16
        $region15: #{model_forward.3} parent=11 // pred_region
          _
        $region16: #{model_forward.3} parent=11 // pred_fallthru
          _
        // Predicated region
        $region17: #{model_forward.3} parent=11 // pred_check
          %p212 = pneg %p84
        $region18: #{model_forward.3} parent=11 // pred_check_branch
          %214 = sbr.rel (%p212) target = $region20
        $region19: #{model_forward.3} parent=11 // pred_region
          _
        $region20: #{model_forward.3} parent=11 // pred_fallthru
          _
        // Predicated region
        $region21: #{model_forward.3} parent=11 // pred_check
          %p215 = pneg %p105
        $region22: #{model_forward.3} parent=11 // pred_check_branch
          %217 = sbr.rel (%p215) target = $region24
        $region23: #{model_forward.3} parent=11 // pred_region
          _
        $region24: #{model_forward.3} parent=11 // pred_fallthru
          _
        // Predicated region
        $region25: #{model_forward.3} parent=11 // pred_check
          %p218 = pneg %p126
        $region26: #{model_forward.3} parent=11 // pred_check_branch
          %220 = sbr.rel (%p218) target = $region28
        $region27: #{model_forward.3} parent=11 // pred_region
          _
        $region28: #{model_forward.3} parent=11 // pred_fallthru
          _
        // Predicated region
        $region29: #{model_forward.3} parent=11 // pred_check
          %p221 = pneg %p147
        $region30: #{model_forward.3} parent=11 // pred_check_branch
          %223 = sbr.rel (%p221) target = $region32
        $region31: #{model_forward.3} parent=11 // pred_region
          _
        $region32: #{model_forward.3} parent=11 // pred_fallthru
          _
        // Predicated region
        $region33: #{model_forward.3} parent=11 // pred_check
          %p224 = pneg %p168
        $region34: #{model_forward.3} parent=11 // pred_check_branch
          %226 = sbr.rel (%p224) target = $region36
        $region35: #{model_forward.3} parent=11 // pred_region
          _
        $region36: #{model_forward.3} parent=11 // pred_fallthru
          _
      $region12: #{model_forward.3} parent=5 // pred_fallthru
        _
      %p227 = scmp.lt.s32.totalorder %s16, 2
      // Predicated region
      $region37: #{model_forward.3} parent=5 // pred_check
        %p228 = pneg %p227
      $region38: #{model_forward.3} parent=5 // pred_check_branch
        %230 = sbr.rel (%p228) target = $region40
      $region39: #{model_forward.3} parent=5 // pred_region
        // Predicated region
        $region41: #{model_forward.3} parent=39 // pred_check
          %p231 = pneg %p36
        $region42: #{model_forward.3} parent=39 // pred_check_branch
          %233 = sbr.rel (%p231) target = $region44
        $region43: #{model_forward.3} parent=39 // pred_region
          %p234 = scmp.lt.s32.totalorder %s16, 1
          %s235 = scalar_select %p234, %s16, 1
          %s236 = smul.addr %s235, 8
          %s237 = scalar_lea.vmem %s0, %s236
        $region44: #{model_forward.3} parent=39 // pred_fallthru
          _
      $region40: #{model_forward.3} parent=5 // pred_fallthru
        _
      %p238 = scmp.le.s32.totalorder 1, %s16
      %p239 = scmp.lt.s32.totalorder %s16, 3
      %p240 = pnand %p238, %p239
      %p241 = pneg %p240
      // Predicated region
      $region45: #{model_forward.3} parent=5 // pred_check
        _
      $region46: #{model_forward.3} parent=5 // pred_check_branch
        %243 = sbr.rel (%p240) target = $region48
      $region47: #{model_forward.3} parent=5 // pred_region
        %s244 = ssub.s32 %s16, 1
        %p245 = scmp.lt.s32.totalorder %s21, 1
        %s246 = scalar_select %p245, %s21, 1
        %s247 = smul.addr %s246, 8
        %s248 = scalar_lea.vmem %s0, %s247
        %p249 = pneg %p42
        %p250 = pneg %p39
        %p251 = pneg %p63
        %p252 = pneg %p60
        %p253 = pneg %p84
        %p254 = pneg %p81
        %p255 = pneg %p105
        %p256 = pneg %p102
        %p257 = pneg %p126
        %p258 = pneg %p123
        %p259 = pneg %p147
        %p260 = pneg %p144
        %p261 = pneg %p168
        %p262 = pneg %p165
        %p263 = pneg %p194
        %p264 = pneg %p191
        %s265 = sand.u32 %s181, 1
        %s266 = scalar_lea.sflag [#allocation4], %s265
        %s267 = sand.u32 %s181, 1
        %s268 = scalar_lea.vmem [#allocation3], %s267
        %p269 = scmp.lt.s32.totalorder %s21, 1
        %s270 = scalar_select %p269, %s21, 1
        %s271 = smul.addr %s270, 8
        %s272 = scalar_lea.vmem %s0, %s271
        %v274 = vld [vmem:[%s272] sm:$0xff]
        %v275 = vld [vmem:[%s2] sm:$0x1]
        %v276 = vpack.c.bf16 %v274, %v274
        %v277 = vld [vmem:[%s1] sm:$0xf]
        %v278 = vld [vmem:[%s1 + $0x4] sm:$0xf]
        %v279 = vld [vmem:[%s1 + $0x8] sm:$0xf]
        %v280 = vld [vmem:[%s1 + $0xc] sm:$0xf]
        %s281 = scalar_lea.vmem %s1, 16
        %v282 = vld [vmem:[%s281] sm:$0xf]
        %v283 = vld [vmem:[%s281 + $0x4] sm:$0xf]
        %v284 = vld [vmem:[%s281 + $0x8] sm:$0xf]
        %v285 = vld [vmem:[%s281 + $0xc] sm:$0xf]
        %v287 = vunpack.c.l.b16 %v276
        %v288 = vpack.c.b16 %v287, %v287
        %v290 = vshrl.u32 %v288, 16
        %v292 = vshll.u32 %v288, 16
        %v294 = vrot.slane %v292, 1
        %v295 = vor.u32 %v290, %v294
        %v300 = vunpack.c.l.b16 %v282
        %v301 = vunpack.c.l.b16 %v283
        %v302 = vunpack.c.l.b16 %v284
        %v303 = vunpack.c.l.b16 %v285
        %v304 = vpack.c.b16 %v301, %v300
        %v305 = vpack.c.b16 %v303, %v302
        %vm308 = vcmask 261120
        %v310 = vsel %vm308, %v295, 0
        %312 = vmatpush.bf16.msra.mxu0 0
        %313 = vmatpush.bf16.msra.mxu0 0
        %314 = vmatpush.bf16.msra.mxu0 0
        %315 = vmatpush.bf16.msra.mxu0 0
        %316 = vmatpush.bf16.msra.mxu0 0
        %317 = vmatpush.bf16.msra.mxu0 0
        %318 = vmatpush.bf16.msra.mxu0 %v305
        %319 = vmatpush.bf16.msra.mxu0 %v304
        %320 = vmatmul.bf16.gmra.mxu0 %v310
        %v321 = vpop.f32.mrf.mxu0
        %v322 = vadd.f32 0.0, %v321
        %v323 = vpop.f32.mrf.mxu0
        %324 = vdwg.mxu0
        %v329 = vunpack.c.l.b16 %v277
        %v330 = vunpack.c.l.b16 %v278
        %v331 = vunpack.c.l.b16 %v279
        %v332 = vunpack.c.l.b16 %v280
        %v333 = vpack.c.b16 %v330, %v329
        %v334 = vpack.c.b16 %v332, %v331
        %v338 = vsel %vm308, %v276, 0
        %340 = vmatpush.bf16.msra.mxu0 0
        %341 = vmatpush.bf16.msra.mxu0 0
        %342 = vmatpush.bf16.msra.mxu0 0
        %343 = vmatpush.bf16.msra.mxu0 0
        %344 = vmatpush.bf16.msra.mxu0 0
        %345 = vmatpush.bf16.msra.mxu0 0
        %346 = vmatpush.bf16.msra.mxu0 %v334
        %347 = vmatpush.bf16.msra.mxu0 %v333
        %348 = vmatmul.bf16.gmra.mxu0 %v338
        %v349 = vpop.f32.mrf.mxu0
        %v350 = vadd.f32 %v322, %v349
        %v351 = vpop.f32.mrf.mxu0
        %352 = vdwg.mxu0
        %s353 = scalar_lea.vmem %s1, 32
        %v354 = vld [vmem:[%s353] sm:$0xf]
        %v355 = vld [vmem:[%s353 + $0x4] sm:$0xf]
        %v356 = vld [vmem:[%s353 + $0x8] sm:$0xf]
        %v357 = vld [vmem:[%s353 + $0xc] sm:$0xf]
        %v358 = vrot.slane %v288, 1
        %v363 = vunpack.c.l.b16 %v354
        %v364 = vunpack.c.l.b16 %v355
        %v365 = vunpack.c.l.b16 %v356
        %v366 = vunpack.c.l.b16 %v357
        %v367 = vpack.c.b16 %v364, %v363
        %v368 = vpack.c.b16 %v366, %v365
        %v372 = vsel %vm308, %v358, 0
        %374 = vmatpush.bf16.msra.mxu0 0
        %375 = vmatpush.bf16.msra.mxu0 0
        %376 = vmatpush.bf16.msra.mxu0 0
        %377 = vmatpush.bf16.msra.mxu0 0
        %378 = vmatpush.bf16.msra.mxu0 0
        %379 = vmatpush.bf16.msra.mxu0 0
        %380 = vmatpush.bf16.msra.mxu0 %v368
        %381 = vmatpush.bf16.msra.mxu0 %v367
        %382 = vmatmul.bf16.gmra.mxu0 %v372
        %v383 = vpop.f32.mrf.mxu0
        %v384 = vadd.f32 0.0, %v383
        %v385 = vpop.f32.mrf.mxu0
        %386 = vdwg.mxu0
        %v387 = vadd.f32 %v350, %v384
        %v389 = vperm.slane %v275, 0
        %v391 = vadd.f32 %v387, %v389
        %v393 = vrot.slane %v391, 7
        %vm395 = vcmask 1040384
        %v396 = vsel %vm395, 0.0, %v393
        %vm397 = vcmask 1046528
        %v398 = vsel %vm397, %v396, 0.0
        %v399 = vld [vmem:[%s4] sm:$0x1]
        %v400 = vmax.f32 %v398, 0.0
        %v401 = vpack.c.bf16 %v400, %v400
        %v402 = vld [vmem:[%s3] sm:$0xf]
        %v403 = vld [vmem:[%s3 + $0x4] sm:$0xf]
        %v404 = vld [vmem:[%s3 + $0x8] sm:$0xf]
        %v405 = vld [vmem:[%s3 + $0xc] sm:$0xf]
        %v406 = vld [vmem:[%s3 + $0x10] sm:$0xf]
        %v407 = vld [vmem:[%s3 + $0x14] sm:$0xf]
        %v408 = vld [vmem:[%s3 + $0x18] sm:$0xf]
        %v409 = vld [vmem:[%s3 + $0x1c] sm:$0xf]
        %v410 = vld [vmem:[%s3 + $0x20] sm:$0xf]
        %v411 = vld [vmem:[%s3 + $0x24] sm:$0xf]
        %v412 = vld [vmem:[%s3 + $0x28] sm:$0xf]
        %v413 = vld [vmem:[%s3 + $0x2c] sm:$0xf]
        %v414 = vld [vmem:[%s3 + $0x30] sm:$0xf]
        %v415 = vld [vmem:[%s3 + $0x34] sm:$0xf]
        %v416 = vld [vmem:[%s3 + $0x38] sm:$0xf]
        %v417 = vld [vmem:[%s3 + $0x3c] sm:$0xf]
        %s418 = scalar_lea.vmem %s3, 64
        %v419 = vld [vmem:[%s418] sm:$0xf]
        %v420 = vld [vmem:[%s418 + $0x4] sm:$0xf]
        %v421 = vld [vmem:[%s418 + $0x8] sm:$0xf]
        %v422 = vld [vmem:[%s418 + $0xc] sm:$0xf]
        %v423 = vld [vmem:[%s418 + $0x10] sm:$0xf]
        %v424 = vld [vmem:[%s418 + $0x14] sm:$0xf]
        %v425 = vld [vmem:[%s418 + $0x18] sm:$0xf]
        %v426 = vld [vmem:[%s418 + $0x1c] sm:$0xf]
        %v427 = vld [vmem:[%s418 + $0x20] sm:$0xf]
        %v428 = vld [vmem:[%s418 + $0x24] sm:$0xf]
        %v429 = vld [vmem:[%s418 + $0x28] sm:$0xf]
        %v430 = vld [vmem:[%s418 + $0x2c] sm:$0xf]
        %v431 = vld [vmem:[%s418 + $0x30] sm:$0xf]
        %v432 = vld [vmem:[%s418 + $0x34] sm:$0xf]
        %v433 = vld [vmem:[%s418 + $0x38] sm:$0xf]
        %v434 = vld [vmem:[%s418 + $0x3c] sm:$0xf]
        %v436 = vunpack.c.l.b16 %v401
        %v437 = vpack.c.b16 %v436, %v436
        %v439 = vshrl.u32 %v437, 16
        %v441 = vshll.u32 %v437, 16
        %v443 = vrot.slane %v441, 1
        %v444 = vor.u32 %v439, %v443
        %v462 = vunpack.c.l.b16 %v419
        %v463 = vunpack.c.l.b16 %v420
        %v464 = vunpack.c.l.b16 %v421
        %v465 = vunpack.c.l.b16 %v422
        %v466 = vunpack.c.l.b16 %v423
        %v467 = vunpack.c.l.b16 %v424
        %v468 = vunpack.c.l.b16 %v425
        %v469 = vunpack.c.l.b16 %v426
        %v470 = vunpack.c.l.b16 %v427
        %v471 = vunpack.c.l.b16 %v428
        %v472 = vunpack.c.l.b16 %v429
        %v473 = vunpack.c.l.b16 %v430
        %v474 = vunpack.c.l.b16 %v431
        %v475 = vunpack.c.l.b16 %v432
        %v476 = vunpack.c.l.b16 %v433
        %v477 = vunpack.c.l.b16 %v434
        %v478 = vpack.c.b16 %v463, %v462
        %v479 = vpack.c.b16 %v465, %v464
        %v480 = vpack.c.b16 %v467, %v466
        %v481 = vpack.c.b16 %v469, %v468
        %v482 = vpack.c.b16 %v471, %v470
        %v483 = vpack.c.b16 %v473, %v472
        %v484 = vpack.c.b16 %v475, %v474
        %v485 = vpack.c.b16 %v477, %v476
        %494 = vmatpush.bf16.msra.mxu0 %v485
        %495 = vmatpush.bf16.msra.mxu0 %v484
        %496 = vmatpush.bf16.msra.mxu0 %v483
        %497 = vmatpush.bf16.msra.mxu0 %v482
        %498 = vmatpush.bf16.msra.mxu0 %v481
        %499 = vmatpush.bf16.msra.mxu0 %v480
        %500 = vmatpush.bf16.msra.mxu0 %v479
        %501 = vmatpush.bf16.msra.mxu0 %v478
        %502 = vmatmul.bf16.gmra.mxu0 %v444
        %v503 = vpop.f32.mrf.mxu0
        %v504 = vadd.f32 0.0, %v503
        %v505 = vpop.f32.mrf.mxu0
        %506 = vdwg.mxu0
        %v523 = vunpack.c.l.b16 %v402
        %v524 = vunpack.c.l.b16 %v403
        %v525 = vunpack.c.l.b16 %v404
        %v526 = vunpack.c.l.b16 %v405
        %v527 = vunpack.c.l.b16 %v406
        %v528 = vunpack.c.l.b16 %v407
        %v529 = vunpack.c.l.b16 %v408
        %v530 = vunpack.c.l.b16 %v409
        %v531 = vunpack.c.l.b16 %v410
        %v532 = vunpack.c.l.b16 %v411
        %v533 = vunpack.c.l.b16 %v412
        %v534 = vunpack.c.l.b16 %v413
        %v535 = vunpack.c.l.b16 %v414
        %v536 = vunpack.c.l.b16 %v415
        %v537 = vunpack.c.l.b16 %v416
        %v538 = vunpack.c.l.b16 %v417
        %v539 = vpack.c.b16 %v524, %v523
        %v540 = vpack.c.b16 %v526, %v525
        %v541 = vpack.c.b16 %v528, %v527
        %v542 = vpack.c.b16 %v530, %v529
        %v543 = vpack.c.b16 %v532, %v531
        %v544 = vpack.c.b16 %v534, %v533
        %v545 = vpack.c.b16 %v536, %v535
        %v546 = vpack.c.b16 %v538, %v537
        %555 = vmatpush.bf16.msra.mxu0 %v546
        %556 = vmatpush.bf16.msra.mxu0 %v545
        %557 = vmatpush.bf16.msra.mxu0 %v544
        %558 = vmatpush.bf16.msra.mxu0 %v543
        %559 = vmatpush.bf16.msra.mxu0 %v542
        %560 = vmatpush.bf16.msra.mxu0 %v541
        %561 = vmatpush.bf16.msra.mxu0 %v540
        %562 = vmatpush.bf16.msra.mxu0 %v539
        %563 = vmatmul.bf16.gmra.mxu0 %v401
        %v564 = vpop.f32.mrf.mxu0
        %v565 = vadd.f32 %v504, %v564
        %v566 = vpop.f32.mrf.mxu0
        %567 = vdwg.mxu0
        %s568 = scalar_lea.vmem %s3, 128
        %v569 = vld [vmem:[%s568] sm:$0xf]
        %v570 = vld [vmem:[%s568 + $0x4] sm:$0xf]
        %v571 = vld [vmem:[%s568 + $0x8] sm:$0xf]
        %v572 = vld [vmem:[%s568 + $0xc] sm:$0xf]
        %v573 = vld [vmem:[%s568 + $0x10] sm:$0xf]
        %v574 = vld [vmem:[%s568 + $0x14] sm:$0xf]
        %v575 = vld [vmem:[%s568 + $0x18] sm:$0xf]
        %v576 = vld [vmem:[%s568 + $0x1c] sm:$0xf]
        %v577 = vld [vmem:[%s568 + $0x20] sm:$0xf]
        %v578 = vld [vmem:[%s568 + $0x24] sm:$0xf]
        %v579 = vld [vmem:[%s568 + $0x28] sm:$0xf]
        %v580 = vld [vmem:[%s568 + $0x2c] sm:$0xf]
        %v581 = vld [vmem:[%s568 + $0x30] sm:$0xf]
        %v582 = vld [vmem:[%s568 + $0x34] sm:$0xf]
        %v583 = vld [vmem:[%s568 + $0x38] sm:$0xf]
        %v584 = vld [vmem:[%s568 + $0x3c] sm:$0xf]
        %v585 = vrot.slane %v437, 1
        %v603 = vunpack.c.l.b16 %v569
        %v604 = vunpack.c.l.b16 %v570
        %v605 = vunpack.c.l.b16 %v571
        %v606 = vunpack.c.l.b16 %v572
        %v607 = vunpack.c.l.b16 %v573
        %v608 = vunpack.c.l.b16 %v574
        %v609 = vunpack.c.l.b16 %v575
        %v610 = vunpack.c.l.b16 %v576
        %v611 = vunpack.c.l.b16 %v577
        %v612 = vunpack.c.l.b16 %v578
        %v613 = vunpack.c.l.b16 %v579
        %v614 = vunpack.c.l.b16 %v580
        %v615 = vunpack.c.l.b16 %v581
        %v616 = vunpack.c.l.b16 %v582
        %v617 = vunpack.c.l.b16 %v583
        %v618 = vunpack.c.l.b16 %v584
        %v619 = vpack.c.b16 %v604, %v603
        %v620 = vpack.c.b16 %v606, %v605
        %v621 = vpack.c.b16 %v608, %v607
        %v622 = vpack.c.b16 %v610, %v609
        %v623 = vpack.c.b16 %v612, %v611
        %v624 = vpack.c.b16 %v614, %v613
        %v625 = vpack.c.b16 %v616, %v615
        %v626 = vpack.c.b16 %v618, %v617
        %635 = vmatpush.bf16.msra.mxu0 %v626
        %636 = vmatpush.bf16.msra.mxu0 %v625
        %637 = vmatpush.bf16.msra.mxu0 %v624
        %638 = vmatpush.bf16.msra.mxu0 %v623
        %639 = vmatpush.bf16.msra.mxu0 %v622
        %640 = vmatpush.bf16.msra.mxu0 %v621
        %641 = vmatpush.bf16.msra.mxu0 %v620
        %642 = vmatpush.bf16.msra.mxu0 %v619
        %643 = vmatmul.bf16.gmra.mxu0 %v585
        %v644 = vpop.f32.mrf.mxu0
        %v645 = vadd.f32 0.0, %v644
        %v646 = vpop.f32.mrf.mxu0
        %647 = vdwg.mxu0
        %v648 = vadd.f32 %v565, %v645
        %v650 = vperm.slane %v399, 0
        %v652 = vadd.f32 %v648, %v650
        %v654 = vrot.slane %v652, 7
        %v656 = vsel %vm395, 0.0, %v654
        %v657 = vsel %vm397, %v656, 0.0
        %v658 = vmax.f32 %v657, 0.0
        %v659 = vpack.c.bf16 %v658, %v658
        %v661 = vunpack.c.l.b16 %v659
        %v662 = vpack.c.b16 %v661, %v661
        %v664 = vshrl.u32 %v662, 16
        %v666 = vshll.u32 %v662, 16
        %v668 = vrot.slane %v666, 1
        %v669 = vor.u32 %v664, %v668
        %671 = vmatpush.bf16.msra.mxu0 %v485
        %672 = vmatpush.bf16.msra.mxu0 %v484
        %673 = vmatpush.bf16.msra.mxu0 %v483
        %674 = vmatpush.bf16.msra.mxu0 %v482
        %675 = vmatpush.bf16.msra.mxu0 %v481
        %676 = vmatpush.bf16.msra.mxu0 %v480
        %677 = vmatpush.bf16.msra.mxu0 %v479
        %678 = vmatpush.bf16.msra.mxu0 %v478
        %679 = vmatmul.bf16.gmra.mxu0 %v669
        %v680 = vpop.f32.mrf.mxu0
        %v681 = vadd.f32 0.0, %v680
        %v682 = vpop.f32.mrf.mxu0
        %683 = vdwg.mxu0
        %684 = vmatpush.bf16.msra.mxu0 %v546
        %685 = vmatpush.bf16.msra.mxu0 %v545
        %686 = vmatpush.bf16.msra.mxu0 %v544
        %687 = vmatpush.bf16.msra.mxu0 %v543
        %688 = vmatpush.bf16.msra.mxu0 %v542
        %689 = vmatpush.bf16.msra.mxu0 %v541
        %690 = vmatpush.bf16.msra.mxu0 %v540
        %691 = vmatpush.bf16.msra.mxu0 %v539
        %692 = vmatmul.bf16.gmra.mxu0 %v659
        %v693 = vpop.f32.mrf.mxu0
        %v694 = vadd.f32 %v681, %v693
        %v695 = vpop.f32.mrf.mxu0
        %696 = vdwg.mxu0
        %v697 = vrot.slane %v662, 1
        %699 = vmatpush.bf16.msra.mxu0 %v626
        %700 = vmatpush.bf16.msra.mxu0 %v625
        %701 = vmatpush.bf16.msra.mxu0 %v624
        %702 = vmatpush.bf16.msra.mxu0 %v623
        %703 = vmatpush.bf16.msra.mxu0 %v622
        %704 = vmatpush.bf16.msra.mxu0 %v621
        %705 = vmatpush.bf16.msra.mxu0 %v620
        %706 = vmatpush.bf16.msra.mxu0 %v619
        %707 = vmatmul.bf16.gmra.mxu0 %v697
        %v708 = vpop.f32.mrf.mxu0
        %v709 = vadd.f32 0.0, %v708
        %v710 = vpop.f32.mrf.mxu0
        %711 = vdwg.mxu0
        %v712 = vadd.f32 %v694, %v709
        %v713 = vadd.f32 %v712, %v650
        %vm714 = vcmask 1045504
        %v715 = vsel %vm714, %v713, 0.0
        %v717 = vrot.slane %v715, 1
        %v719 = vmax.f32 %v715, %v717
        %v720 = vrot.slane %v715, 2
        %v722 = vmax.f32 %v719, %v720
        %723 = vst [vmem:[#allocation2] sm:$0x1f] %v722
        %v724 = vld [vmem:[#allocation2] ss:$2 sm:$0x7]
        %v726 = vrot.slane %v724, 7
        %v728 = vsel %vm395, 0.0, %v726
        %vm729 = vcmask 1043456
        %v730 = vsel %vm729, %v728, 0.0
        %v731 = vld [vmem:[%s4] sm:$0x1]
        %v732 = vmax.f32 %v730, 0.0
        %v733 = vpack.c.bf16 %v732, %v732
        %v734 = vld [vmem:[%s3] sm:$0xf]
        %v735 = vld [vmem:[%s3 + $0x4] sm:$0xf]
        %v736 = vld [vmem:[%s3 + $0x8] sm:$0xf]
        %v737 = vld [vmem:[%s3 + $0xc] sm:$0xf]
        %v738 = vld [vmem:[%s3 + $0x10] sm:$0xf]
        %v739 = vld [vmem:[%s3 + $0x14] sm:$0xf]
        %v740 = vld [vmem:[%s3 + $0x18] sm:$0xf]
        %v741 = vld [vmem:[%s3 + $0x1c] sm:$0xf]
        %v742 = vld [vmem:[%s3 + $0x20] sm:$0xf]
        %v743 = vld [vmem:[%s3 + $0x24] sm:$0xf]
        %v744 = vld [vmem:[%s3 + $0x28] sm:$0xf]
        %v745 = vld [vmem:[%s3 + $0x2c] sm:$0xf]
        %v746 = vld [vmem:[%s3 + $0x30] sm:$0xf]
        %v747 = vld [vmem:[%s3 + $0x34] sm:$0xf]
        %v748 = vld [vmem:[%s3 + $0x38] sm:$0xf]
        %v749 = vld [vmem:[%s3 + $0x3c] sm:$0xf]
        %v750 = vld [vmem:[%s418] sm:$0xf]
        %v751 = vld [vmem:[%s418 + $0x4] sm:$0xf]
        %v752 = vld [vmem:[%s418 + $0x8] sm:$0xf]
        %v753 = vld [vmem:[%s418 + $0xc] sm:$0xf]
        %v754 = vld [vmem:[%s418 + $0x10] sm:$0xf]
        %v755 = vld [vmem:[%s418 + $0x14] sm:$0xf]
        %v756 = vld [vmem:[%s418 + $0x18] sm:$0xf]
        %v757 = vld [vmem:[%s418 + $0x1c] sm:$0xf]
        %v758 = vld [vmem:[%s418 + $0x20] sm:$0xf]
        %v759 = vld [vmem:[%s418 + $0x24] sm:$0xf]
        %v760 = vld [vmem:[%s418 + $0x28] sm:$0xf]
        %v761 = vld [vmem:[%s418 + $0x2c] sm:$0xf]
        %v762 = vld [vmem:[%s418 + $0x30] sm:$0xf]
        %v763 = vld [vmem:[%s418 + $0x34] sm:$0xf]
        %v764 = vld [vmem:[%s418 + $0x38] sm:$0xf]
        %v765 = vld [vmem:[%s418 + $0x3c] sm:$0xf]
        %v767 = vunpack.c.l.b16 %v733
        %v768 = vpack.c.b16 %v767, %v767
        %v770 = vshrl.u32 %v768, 16
        %v772 = vshll.u32 %v768, 16
        %v774 = vrot.slane %v772, 1
        %v775 = vor.u32 %v770, %v774
        %v793 = vunpack.c.l.b16 %v750
        %v794 = vunpack.c.l.b16 %v751
        %v795 = vunpack.c.l.b16 %v752
        %v796 = vunpack.c.l.b16 %v753
        %v797 = vunpack.c.l.b16 %v754
        %v798 = vunpack.c.l.b16 %v755
        %v799 = vunpack.c.l.b16 %v756
        %v800 = vunpack.c.l.b16 %v757
        %v801 = vunpack.c.l.b16 %v758
        %v802 = vunpack.c.l.b16 %v759
        %v803 = vunpack.c.l.b16 %v760
        %v804 = vunpack.c.l.b16 %v761
        %v805 = vunpack.c.l.b16 %v762
        %v806 = vunpack.c.l.b16 %v763
        %v807 = vunpack.c.l.b16 %v764
        %v808 = vunpack.c.l.b16 %v765
        %v809 = vpack.c.b16 %v794, %v793
        %v810 = vpack.c.b16 %v796, %v795
        %v811 = vpack.c.b16 %v798, %v797
        %v812 = vpack.c.b16 %v800, %v799
        %v813 = vpack.c.b16 %v802, %v801
        %v814 = vpack.c.b16 %v804, %v803
        %v815 = vpack.c.b16 %v806, %v805
        %v816 = vpack.c.b16 %v808, %v807
        %825 = vmatpush.bf16.msra.mxu0 %v816
        %826 = vmatpush.bf16.msra.mxu0 %v815
        %827 = vmatpush.bf16.msra.mxu0 %v814
        %828 = vmatpush.bf16.msra.mxu0 %v813
        %829 = vmatpush.bf16.msra.mxu0 %v812
        %830 = vmatpush.bf16.msra.mxu0 %v811
        %831 = vmatpush.bf16.msra.mxu0 %v810
        %832 = vmatpush.bf16.msra.mxu0 %v809
        %833 = vmatmul.bf16.gmra.mxu0 %v775
        %v834 = vpop.f32.mrf.mxu0
        %v835 = vadd.f32 0.0, %v834
        %v836 = vpop.f32.mrf.mxu0
        %837 = vdwg.mxu0
        %v854 = vunpack.c.l.b16 %v734
        %v855 = vunpack.c.l.b16 %v735
        %v856 = vunpack.c.l.b16 %v736
        %v857 = vunpack.c.l.b16 %v737
        %v858 = vunpack.c.l.b16 %v738
        %v859 = vunpack.c.l.b16 %v739
        %v860 = vunpack.c.l.b16 %v740
        %v861 = vunpack.c.l.b16 %v741
        %v862 = vunpack.c.l.b16 %v742
        %v863 = vunpack.c.l.b16 %v743
        %v864 = vunpack.c.l.b16 %v744
        %v865 = vunpack.c.l.b16 %v745
        %v866 = vunpack.c.l.b16 %v746
        %v867 = vunpack.c.l.b16 %v747
        %v868 = vunpack.c.l.b16 %v748
        %v869 = vunpack.c.l.b16 %v749
        %v870 = vpack.c.b16 %v855, %v854
        %v871 = vpack.c.b16 %v857, %v856
        %v872 = vpack.c.b16 %v859, %v858
        %v873 = vpack.c.b16 %v861, %v860
        %v874 = vpack.c.b16 %v863, %v862
        %v875 = vpack.c.b16 %v865, %v864
        %v876 = vpack.c.b16 %v867, %v866
        %v877 = vpack.c.b16 %v869, %v868
        %886 = vmatpush.bf16.msra.mxu0 %v877
        %887 = vmatpush.bf16.msra.mxu0 %v876
        %888 = vmatpush.bf16.msra.mxu0 %v875
        %889 = vmatpush.bf16.msra.mxu0 %v874
        %890 = vmatpush.bf16.msra.mxu0 %v873
        %891 = vmatpush.bf16.msra.mxu0 %v872
        %892 = vmatpush.bf16.msra.mxu0 %v871
        %893 = vmatpush.bf16.msra.mxu0 %v870
        %894 = vmatmul.bf16.gmra.mxu0 %v733
        %v895 = vpop.f32.mrf.mxu0
        %v896 = vadd.f32 %v835, %v895
        %v897 = vpop.f32.mrf.mxu0
        %898 = vdwg.mxu0
        %v899 = vld [vmem:[%s568] sm:$0xf]
        %v900 = vld [vmem:[%s568 + $0x4] sm:$0xf]
        %v901 = vld [vmem:[%s568 + $0x8] sm:$0xf]
        %v902 = vld [vmem:[%s568 + $0xc] sm:$0xf]
        %v903 = vld [vmem:[%s568 + $0x10] sm:$0xf]
        %v904 = vld [vmem:[%s568 + $0x14] sm:$0xf]
        %v905 = vld [vmem:[%s568 + $0x18] sm:$0xf]
        %v906 = vld [vmem:[%s568 + $0x1c] sm:$0xf]
        %v907 = vld [vmem:[%s568 + $0x20] sm:$0xf]
        %v908 = vld [vmem:[%s568 + $0x24] sm:$0xf]
        %v909 = vld [vmem:[%s568 + $0x28] sm:$0xf]
        %v910 = vld [vmem:[%s568 + $0x2c] sm:$0xf]
        %v911 = vld [vmem:[%s568 + $0x30] sm:$0xf]
        %v912 = vld [vmem:[%s568 + $0x34] sm:$0xf]
        %v913 = vld [vmem:[%s568 + $0x38] sm:$0xf]
        %v914 = vld [vmem:[%s568 + $0x3c] sm:$0xf]
        %v915 = vrot.slane %v768, 1
        %v933 = vunpack.c.l.b16 %v899
        %v934 = vunpack.c.l.b16 %v900
        %v935 = vunpack.c.l.b16 %v901
        %v936 = vunpack.c.l.b16 %v902
        %v937 = vunpack.c.l.b16 %v903
        %v938 = vunpack.c.l.b16 %v904
        %v939 = vunpack.c.l.b16 %v905
        %v940 = vunpack.c.l.b16 %v906
        %v941 = vunpack.c.l.b16 %v907
        %v942 = vunpack.c.l.b16 %v908
        %v943 = vunpack.c.l.b16 %v909
        %v944 = vunpack.c.l.b16 %v910
        %v945 = vunpack.c.l.b16 %v911
        %v946 = vunpack.c.l.b16 %v912
        %v947 = vunpack.c.l.b16 %v913
        %v948 = vunpack.c.l.b16 %v914
        %v949 = vpack.c.b16 %v934, %v933
        %v950 = vpack.c.b16 %v936, %v935
        %v951 = vpack.c.b16 %v938, %v937
        %v952 = vpack.c.b16 %v940, %v939
        %v953 = vpack.c.b16 %v942, %v941
        %v954 = vpack.c.b16 %v944, %v943
        %v955 = vpack.c.b16 %v946, %v945
        %v956 = vpack.c.b16 %v948, %v947
        %965 = vmatpush.bf16.msra.mxu0 %v956
        %966 = vmatpush.bf16.msra.mxu0 %v955
        %967 = vmatpush.bf16.msra.mxu0 %v954
        %968 = vmatpush.bf16.msra.mxu0 %v953
        %969 = vmatpush.bf16.msra.mxu0 %v952
        %970 = vmatpush.bf16.msra.mxu0 %v951
        %971 = vmatpush.bf16.msra.mxu0 %v950
        %972 = vmatpush.bf16.msra.mxu0 %v949
        %973 = vmatmul.bf16.gmra.mxu0 %v915
        %v974 = vpop.f32.mrf.mxu0
        %v975 = vadd.f32 0.0, %v974
        %v976 = vpop.f32.mrf.mxu0
        %977 = vdwg.mxu0
        %v978 = vadd.f32 %v896, %v975
        %v980 = vperm.slane %v731, 0
        %v982 = vadd.f32 %v978, %v980
        %v984 = vrot.slane %v982, 7
        %v986 = vsel %vm395, 0.0, %v984
        %v987 = vsel %vm729, %v986, 0.0
        %v988 = vmax.f32 %v987, 0.0
        %v989 = vpack.c.bf16 %v988, %v988
        %v991 = vunpack.c.l.b16 %v989
        %v992 = vpack.c.b16 %v991, %v991
        %v994 = vshrl.u32 %v992, 16
        %v996 = vshll.u32 %v992, 16
        %v998 = vrot.slane %v996, 1
        %v999 = vor.u32 %v994, %v998
        %1001 = vmatpush.bf16.msra.mxu0 %v816
        %1002 = vmatpush.bf16.msra.mxu0 %v815
        %1003 = vmatpush.bf16.msra.mxu0 %v814
        %1004 = vmatpush.bf16.msra.mxu0 %v813
        %1005 = vmatpush.bf16.msra.mxu0 %v812
        %1006 = vmatpush.bf16.msra.mxu0 %v811
        %1007 = vmatpush.bf16.msra.mxu0 %v810
        %1008 = vmatpush.bf16.msra.mxu0 %v809
        %1009 = vmatmul.bf16.gmra.mxu0 %v999
        %v1010 = vpop.f32.mrf.mxu0
        %v1011 = vadd.f32 0.0, %v1010
        %v1012 = vpop.f32.mrf.mxu0
        %1013 = vdwg.mxu0
        %1014 = vmatpush.bf16.msra.mxu0 %v877
        %1015 = vmatpush.bf16.msra.mxu0 %v876
        %1016 = vmatpush.bf16.msra.mxu0 %v875
        %1017 = vmatpush.bf16.msra.mxu0 %v874
        %1018 = vmatpush.bf16.msra.mxu0 %v873
        %1019 = vmatpush.bf16.msra.mxu0 %v872
        %1020 = vmatpush.bf16.msra.mxu0 %v871
        %1021 = vmatpush.bf16.msra.mxu0 %v870
        %1022 = vmatmul.bf16.gmra.mxu0 %v989
        %v1023 = vpop.f32.mrf.mxu0
        %v1024 = vadd.f32 %v1011, %v1023
        %v1025 = vpop.f32.mrf.mxu0
        %1026 = vdwg.mxu0
        %v1027 = vrot.slane %v992, 1
        %1029 = vmatpush.bf16.msra.mxu0 %v956
        %1030 = vmatpush.bf16.msra.mxu0 %v955
        %1031 = vmatpush.bf16.msra.mxu0 %v954
        %1032 = vmatpush.bf16.msra.mxu0 %v953
        %1033 = vmatpush.bf16.msra.mxu0 %v952
        %1034 = vmatpush.bf16.msra.mxu0 %v951
        %1035 = vmatpush.bf16.msra.mxu0 %v950
        %1036 = vmatpush.bf16.msra.mxu0 %v949
        %1037 = vmatmul.bf16.gmra.mxu0 %v1027
        %v1038 = vpop.f32.mrf.mxu0
        %v1039 = vadd.f32 0.0, %v1038
        %v1040 = vpop.f32.mrf.mxu0
        %1041 = vdwg.mxu0
        %v1042 = vadd.f32 %v1024, %v1039
        %v1043 = vadd.f32 %v1042, %v980
        %v1044 = vadd.f32 %v1043, %v724
        %vm1045 = vcmask 1042432
        %v1046 = vsel %vm1045, %v1044, 0.0
        %v1048 = vrot.slane %v1046, 1
        %v1050 = vmax.f32 %v1046, %v1048
        %v1051 = vrot.slane %v1046, 2
        %v1053 = vmax.f32 %v1050, %v1051
        %1054 = vst [vmem:[#allocation2] sm:$0x3] %v1053
        %v1055 = vld [vmem:[#allocation2] ss:$2 sm:$0x1]
        %v1057 = vrot.slane %v1055, 7
        %v1059 = vsel %vm395, 0.0, %v1057
        %vm1060 = vcmask 1041408
        %v1061 = vsel %vm1060, %v1059, 0.0
        %v1062 = vld [vmem:[%s4] sm:$0x1]
        %v1063 = vmax.f32 %v1061, 0.0
        %v1064 = vpack.c.bf16 %v1063, %v1063
        %v1065 = vld [vmem:[%s3] sm:$0xf]
        %v1066 = vld [vmem:[%s3 + $0x4] sm:$0xf]
        %v1067 = vld [vmem:[%s3 + $0x8] sm:$0xf]
        %v1068 = vld [vmem:[%s3 + $0xc] sm:$0xf]
        %v1069 = vld [vmem:[%s3 + $0x10] sm:$0xf]
        %v1070 = vld [vmem:[%s3 + $0x14] sm:$0xf]
        %v1071 = vld [vmem:[%s3 + $0x18] sm:$0xf]
        %v1072 = vld [vmem:[%s3 + $0x1c] sm:$0xf]
        %v1073 = vld [vmem:[%s3 + $0x20] sm:$0xf]
        %v1074 = vld [vmem:[%s3 + $0x24] sm:$0xf]
        %v1075 = vld [vmem:[%s3 + $0x28] sm:$0xf]
        %v1076 = vld [vmem:[%s3 + $0x2c] sm:$0xf]
        %v1077 = vld [vmem:[%s3 + $0x30] sm:$0xf]
        %v1078 = vld [vmem:[%s3 + $0x34] sm:$0xf]
        %v1079 = vld [vmem:[%s3 + $0x38] sm:$0xf]
        %v1080 = vld [vmem:[%s3 + $0x3c] sm:$0xf]
        %v1081 = vld [vmem:[%s418] sm:$0xf]
        %v1082 = vld [vmem:[%s418 + $0x4] sm:$0xf]
        %v1083 = vld [vmem:[%s418 + $0x8] sm:$0xf]
        %v1084 = vld [vmem:[%s418 + $0xc] sm:$0xf]
        %v1085 = vld [vmem:[%s418 + $0x10] sm:$0xf]
        %v1086 = vld [vmem:[%s418 + $0x14] sm:$0xf]
        %v1087 = vld [vmem:[%s418 + $0x18] sm:$0xf]
        %v1088 = vld [vmem:[%s418 + $0x1c] sm:$0xf]
        %v1089 = vld [vmem:[%s418 + $0x20] sm:$0xf]
        %v1090 = vld [vmem:[%s418 + $0x24] sm:$0xf]
        %v1091 = vld [vmem:[%s418 + $0x28] sm:$0xf]
        %v1092 = vld [vmem:[%s418 + $0x2c] sm:$0xf]
        %v1093 = vld [vmem:[%s418 + $0x30] sm:$0xf]
        %v1094 = vld [vmem:[%s418 + $0x34] sm:$0xf]
        %v1095 = vld [vmem:[%s418 + $0x38] sm:$0xf]
        %v1096 = vld [vmem:[%s418 + $0x3c] sm:$0xf]
        %v1098 = vunpack.c.l.b16 %v1064
        %v1099 = vpack.c.b16 %v1098, %v1098
        %v1101 = vshrl.u32 %v1099, 16
        %v1120 = vunpack.c.l.b16 %v1081
        %v1121 = vunpack.c.l.b16 %v1082
        %v1122 = vunpack.c.l.b16 %v1083
        %v1123 = vunpack.c.l.b16 %v1084
        %v1124 = vunpack.c.l.b16 %v1085
        %v1125 = vunpack.c.l.b16 %v1086
        %v1126 = vunpack.c.l.b16 %v1087
        %v1127 = vunpack.c.l.b16 %v1088
        %v1128 = vunpack.c.l.b16 %v1089
        %v1129 = vunpack.c.l.b16 %v1090
        %v1130 = vunpack.c.l.b16 %v1091
        %v1131 = vunpack.c.l.b16 %v1092
        %v1132 = vunpack.c.l.b16 %v1093
        %v1133 = vunpack.c.l.b16 %v1094
        %v1134 = vunpack.c.l.b16 %v1095
        %v1135 = vunpack.c.l.b16 %v1096
        %v1136 = vpack.c.b16 %v1121, %v1120
        %v1137 = vpack.c.b16 %v1123, %v1122
        %v1138 = vpack.c.b16 %v1125, %v1124
        %v1139 = vpack.c.b16 %v1127, %v1126
        %v1140 = vpack.c.b16 %v1129, %v1128
        %v1141 = vpack.c.b16 %v1131, %v1130
        %v1142 = vpack.c.b16 %v1133, %v1132
        %v1143 = vpack.c.b16 %v1135, %v1134
        %1152 = vmatpush.bf16.msra.mxu0 %v1143
        %1153 = vmatpush.bf16.msra.mxu0 %v1142
        %1154 = vmatpush.bf16.msra.mxu0 %v1141
        %1155 = vmatpush.bf16.msra.mxu0 %v1140
        %1156 = vmatpush.bf16.msra.mxu0 %v1139
        %1157 = vmatpush.bf16.msra.mxu0 %v1138
        %1158 = vmatpush.bf16.msra.mxu0 %v1137
        %1159 = vmatpush.bf16.msra.mxu0 %v1136
        %1160 = vmatmul.bf16.gmra.mxu0 %v1101
        %v1161 = vpop.f32.mrf.mxu0
        %v1162 = vadd.f32 0.0, %v1161
        %v1163 = vpop.f32.mrf.mxu0
        %1164 = vdwg.mxu0
        %v1181 = vunpack.c.l.b16 %v1065
        %v1182 = vunpack.c.l.b16 %v1066
        %v1183 = vunpack.c.l.b16 %v1067
        %v1184 = vunpack.c.l.b16 %v1068
        %v1185 = vunpack.c.l.b16 %v1069
        %v1186 = vunpack.c.l.b16 %v1070
        %v1187 = vunpack.c.l.b16 %v1071
        %v1188 = vunpack.c.l.b16 %v1072
        %v1189 = vunpack.c.l.b16 %v1073
        %v1190 = vunpack.c.l.b16 %v1074
        %v1191 = vunpack.c.l.b16 %v1075
        %v1192 = vunpack.c.l.b16 %v1076
        %v1193 = vunpack.c.l.b16 %v1077
        %v1194 = vunpack.c.l.b16 %v1078
        %v1195 = vunpack.c.l.b16 %v1079
        %v1196 = vunpack.c.l.b16 %v1080
        %v1197 = vpack.c.b16 %v1182, %v1181
        %v1198 = vpack.c.b16 %v1184, %v1183
        %v1199 = vpack.c.b16 %v1186, %v1185
        %v1200 = vpack.c.b16 %v1188, %v1187
        %v1201 = vpack.c.b16 %v1190, %v1189
        %v1202 = vpack.c.b16 %v1192, %v1191
        %v1203 = vpack.c.b16 %v1194, %v1193
        %v1204 = vpack.c.b16 %v1196, %v1195
        %1213 = vmatpush.bf16.msra.mxu0 %v1204
        %1214 = vmatpush.bf16.msra.mxu0 %v1203
        %1215 = vmatpush.bf16.msra.mxu0 %v1202
        %1216 = vmatpush.bf16.msra.mxu0 %v1201
        %1217 = vmatpush.bf16.msra.mxu0 %v1200
        %1218 = vmatpush.bf16.msra.mxu0 %v1199
        %1219 = vmatpush.bf16.msra.mxu0 %v1198
        %1220 = vmatpush.bf16.msra.mxu0 %v1197
        %1221 = vmatmul.bf16.gmra.mxu0 %v1064
        %v1222 = vpop.f32.mrf.mxu0
        %v1223 = vadd.f32 %v1162, %v1222
        %v1224 = vpop.f32.mrf.mxu0
        %1225 = vdwg.mxu0
        %v1226 = vld [vmem:[%s568] sm:$0xf]
        %v1227 = vld [vmem:[%s568 + $0x4] sm:$0xf]
        %v1228 = vld [vmem:[%s568 + $0x8] sm:$0xf]
        %v1229 = vld [vmem:[%s568 + $0xc] sm:$0xf]
        %v1230 = vld [vmem:[%s568 + $0x10] sm:$0xf]
        %v1231 = vld [vmem:[%s568 + $0x14] sm:$0xf]
        %v1232 = vld [vmem:[%s568 + $0x18] sm:$0xf]
        %v1233 = vld [vmem:[%s568 + $0x1c] sm:$0xf]
        %v1234 = vld [vmem:[%s568 + $0x20] sm:$0xf]
        %v1235 = vld [vmem:[%s568 + $0x24] sm:$0xf]
        %v1236 = vld [vmem:[%s568 + $0x28] sm:$0xf]
        %v1237 = vld [vmem:[%s568 + $0x2c] sm:$0xf]
        %v1238 = vld [vmem:[%s568 + $0x30] sm:$0xf]
        %v1239 = vld [vmem:[%s568 + $0x34] sm:$0xf]
        %v1240 = vld [vmem:[%s568 + $0x38] sm:$0xf]
        %v1241 = vld [vmem:[%s568 + $0x3c] sm:$0xf]
        %v1242 = vrot.slane %v1099, 1
        %v1260 = vunpack.c.l.b16 %v1226
        %v1261 = vunpack.c.l.b16 %v1227
        %v1262 = vunpack.c.l.b16 %v1228
        %v1263 = vunpack.c.l.b16 %v1229
        %v1264 = vunpack.c.l.b16 %v1230
        %v1265 = vunpack.c.l.b16 %v1231
        %v1266 = vunpack.c.l.b16 %v1232
        %v1267 = vunpack.c.l.b16 %v1233
        %v1268 = vunpack.c.l.b16 %v1234
        %v1269 = vunpack.c.l.b16 %v1235
        %v1270 = vunpack.c.l.b16 %v1236
        %v1271 = vunpack.c.l.b16 %v1237
        %v1272 = vunpack.c.l.b16 %v1238
        %v1273 = vunpack.c.l.b16 %v1239
        %v1274 = vunpack.c.l.b16 %v1240
        %v1275 = vunpack.c.l.b16 %v1241
        %v1276 = vpack.c.b16 %v1261, %v1260
        %v1277 = vpack.c.b16 %v1263, %v1262
        %v1278 = vpack.c.b16 %v1265, %v1264
        %v1279 = vpack.c.b16 %v1267, %v1266
        %v1280 = vpack.c.b16 %v1269, %v1268
        %v1281 = vpack.c.b16 %v1271, %v1270
        %v1282 = vpack.c.b16 %v1273, %v1272
        %v1283 = vpack.c.b16 %v1275, %v1274
        %1292 = vmatpush.bf16.msra.mxu0 %v1283
        %1293 = vmatpush.bf16.msra.mxu0 %v1282
        %1294 = vmatpush.bf16.msra.mxu0 %v1281
        %1295 = vmatpush.bf16.msra.mxu0 %v1280
        %1296 = vmatpush.bf16.msra.mxu0 %v1279
        %1297 = vmatpush.bf16.msra.mxu0 %v1278
        %1298 = vmatpush.bf16.msra.mxu0 %v1277
        %1299 = vmatpush.bf16.msra.mxu0 %v1276
        %1300 = vmatmul.bf16.gmra.mxu0 %v1242
        %v1301 = vpop.f32.mrf.mxu0
        %v1302 = vadd.f32 0.0, %v1301
        %v1303 = vpop.f32.mrf.mxu0
        %1304 = vdwg.mxu0
        %v1305 = vadd.f32 %v1223, %v1302
        %v1306 = vadd.f32 %v1305, %v1062
        %v1308 = vrot.slane %v1306, 7
        %v1310 = vsel %vm395, 0.0, %v1308
        %v1311 = vsel %vm1060, %v1310, 0.0
        %v1312 = vmax.f32 %v1311, 0.0
        %v1313 = vpack.c.bf16 %v1312, %v1312
        %v1315 = vunpack.c.l.b16 %v1313
        %v1316 = vpack.c.b16 %v1315, %v1315
        %v1318 = vshrl.u32 %v1316, 16
        %1321 = vmatpush.bf16.msra.mxu0 %v1143
        %1322 = vmatpush.bf16.msra.mxu0 %v1142
        %1323 = vmatpush.bf16.msra.mxu0 %v1141
        %1324 = vmatpush.bf16.msra.mxu0 %v1140
        %1325 = vmatpush.bf16.msra.mxu0 %v1139
        %1326 = vmatpush.bf16.msra.mxu0 %v1138
        %1327 = vmatpush.bf16.msra.mxu0 %v1137
        %1328 = vmatpush.bf16.msra.mxu0 %v1136
        %1329 = vmatmul.bf16.gmra.mxu0 %v1318
        %v1330 = vpop.f32.mrf.mxu0
        %v1331 = vadd.f32 0.0, %v1330
        %v1332 = vpop.f32.mrf.mxu0
        %1333 = vdwg.mxu0
        %1334 = vmatpush.bf16.msra.mxu0 %v1204
        %1335 = vmatpush.bf16.msra.mxu0 %v1203
        %1336 = vmatpush.bf16.msra.mxu0 %v1202
        %1337 = vmatpush.bf16.msra.mxu0 %v1201
        %1338 = vmatpush.bf16.msra.mxu0 %v1200
        %1339 = vmatpush.bf16.msra.mxu0 %v1199
        %1340 = vmatpush.bf16.msra.mxu0 %v1198
        %1341 = vmatpush.bf16.msra.mxu0 %v1197
        %1342 = vmatmul.bf16.gmra.mxu0 %v1313
        %v1343 = vpop.f32.mrf.mxu0
        %v1344 = vadd.f32 %v1331, %v1343
        %v1345 = vpop.f32.mrf.mxu0
        %1346 = vdwg.mxu0
        %v1347 = vrot.slane %v1316, 1
        %1349 = vmatpush.bf16.msra.mxu0 %v1283
        %1350 = vmatpush.bf16.msra.mxu0 %v1282
        %1351 = vmatpush.bf16.msra.mxu0 %v1281
        %1352 = vmatpush.bf16.msra.mxu0 %v1280
        %1353 = vmatpush.bf16.msra.mxu0 %v1279
        %1354 = vmatpush.bf16.msra.mxu0 %v1278
        %1355 = vmatpush.bf16.msra.mxu0 %v1277
        %1356 = vmatpush.bf16.msra.mxu0 %v1276
        %1357 = vmatmul.bf16.gmra.mxu0 %v1347
        %v1358 = vpop.f32.mrf.mxu0
        %v1359 = vadd.f32 0.0, %v1358
        %v1360 = vpop.f32.mrf.mxu0
        %1361 = vdwg.mxu0
        %v1362 = vadd.f32 %v1344, %v1359
        %v1363 = vadd.f32 %v1362, %v1062
        %v1364 = vadd.f32 %v1363, %v1055
        %v1365 = vpack.c.bf16 %v1364, %v1364
        %v1366 = vld [vmem:[%s5] sm:$0xf]
        %v1367 = vld [vmem:[%s5 + $0x4] sm:$0xf]
        %v1368 = vld [vmem:[%s5 + $0x8] sm:$0xf]
        %v1369 = vld [vmem:[%s5 + $0xc] sm:$0xf]
        %v1370 = vld [vmem:[%s5 + $0x10] sm:$0xf]
        %v1371 = vld [vmem:[%s5 + $0x14] sm:$0xf]
        %v1372 = vld [vmem:[%s5 + $0x18] sm:$0xf]
        %v1373 = vld [vmem:[%s5 + $0x1c] sm:$0xf]
        %v1374 = vld [vmem:[%s5 + $0x20] sm:$0xf]
        %v1375 = vld [vmem:[%s5 + $0x24] sm:$0xf]
        %v1376 = vld [vmem:[%s5 + $0x28] sm:$0xf]
        %v1377 = vld [vmem:[%s5 + $0x2c] sm:$0xf]
        %v1378 = vld [vmem:[%s5 + $0x30] sm:$0xf]
        %v1379 = vld [vmem:[%s5 + $0x34] sm:$0xf]
        %v1380 = vld [vmem:[%s5 + $0x38] sm:$0xf]
        %v1381 = vld [vmem:[%s5 + $0x3c] sm:$0xf]
        %v1382 = vld [vmem:[%s6] sm:$0x1]
        %v1399 = vunpack.c.l.b16 %v1366
        %v1400 = vunpack.c.l.b16 %v1367
        %v1401 = vunpack.c.l.b16 %v1368
        %v1402 = vunpack.c.l.b16 %v1369
        %v1403 = vunpack.c.l.b16 %v1370
        %v1404 = vunpack.c.l.b16 %v1371
        %v1405 = vunpack.c.l.b16 %v1372
        %v1406 = vunpack.c.l.b16 %v1373
        %v1407 = vunpack.c.l.b16 %v1374
        %v1408 = vunpack.c.l.b16 %v1375
        %v1409 = vunpack.c.l.b16 %v1376
        %v1410 = vunpack.c.l.b16 %v1377
        %v1411 = vunpack.c.l.b16 %v1378
        %v1412 = vunpack.c.l.b16 %v1379
        %v1413 = vunpack.c.l.b16 %v1380
        %v1414 = vunpack.c.l.b16 %v1381
        %v1415 = vpack.c.b16 %v1400, %v1399
        %v1416 = vpack.c.b16 %v1402, %v1401
        %v1417 = vpack.c.b16 %v1404, %v1403
        %v1418 = vpack.c.b16 %v1406, %v1405
        %v1419 = vpack.c.b16 %v1408, %v1407
        %v1420 = vpack.c.b16 %v1410, %v1409
        %v1421 = vpack.c.b16 %v1412, %v1411
        %v1422 = vpack.c.b16 %v1414, %v1413
        %1431 = vmatpush.bf16.msra.mxu0 %v1422
        %1432 = vmatpush.bf16.msra.mxu0 %v1421
        %1433 = vmatpush.bf16.msra.mxu0 %v1420
        %1434 = vmatpush.bf16.msra.mxu0 %v1419
        %1435 = vmatpush.bf16.msra.mxu0 %v1418
        %1436 = vmatpush.bf16.msra.mxu0 %v1417
        %1437 = vmatpush.bf16.msra.mxu0 %v1416
        %1438 = vmatpush.bf16.msra.mxu0 %v1415
        %1439 = vmatmul.bf16.gmra.mxu0 %v1365
        %v1440 = vpop.f32.mrf.mxu0
        %v1441 = vadd.f32 %v1382, %v1440
        %v1442 = vpop.f32.mrf.mxu0
        %1443 = vdwg.mxu0
        %1444 = vst [vmem:[%s268] sm:$0x1] %v1441
        %s1445 = sand.u32 %s181, 1
        %s1446 = scalar_lea.sflag [#allocation4], %s1445
        %s1447 = sand.u32 %s181, 1
        %s1448 = scalar_lea.vmem [#allocation3], %s1447
        // Predicated region
        $region49: #{model_forward.3} parent=47 // pred_check
          %p1449 = pneg %p191
        $region50: #{model_forward.3} parent=47 // pred_check_branch
          %1451 = sbr.rel (%p1449) target = $region52
        $region51: #{model_forward.3} parent=47 // pred_region
          %1453 = vsyncadd %s1446, 0
          %s1454 = scalar_lea.hbm %s7, %s21
          %s1456 = sshll.u32 %s1448, 4
          %s1457 = int_to_ptr.vmem [resolvable:$true] %s1456
          %s1458 = sshll.u32 %s1454, 4
          %s1459 = int_to_ptr.hbm [resolvable:$true] %s1458
          %1461 = dma.vmem_to_hbm [thread:$0]  %s1457, 16, %s1459, %s1446
        $region52: #{model_forward.3} parent=47 // pred_fallthru
          _
      $region48: #{model_forward.3} parent=5 // pred_fallthru
        _
      %p1462 = scmp.le.s32.totalorder 2, %s16
      // Predicated region
      $region53: #{model_forward.3} parent=5 // pred_check
        %p1463 = pneg %p1462
      $region54: #{model_forward.3} parent=5 // pred_check_branch
        %1465 = sbr.rel (%p1463) target = $region56
      $region55: #{model_forward.3} parent=5 // pred_region
        %s1466 = ssub.s32 %s16, 2
        // Predicated region
        $region57: #{model_forward.3} parent=55 // pred_check
          %p1467 = pneg %p197
        $region58: #{model_forward.3} parent=55 // pred_check_branch
          %1469 = sbr.rel (%p1467) target = $region60
        $region59: #{model_forward.3} parent=55 // pred_region
          %s1470 = sand.u32 %s182, 1
          %s1471 = scalar_lea.sflag [#allocation4], %s1470
          %s1472 = sand.u32 %s182, 1
          %s1473 = scalar_lea.vmem [#allocation3], %s1472
          %1475 = dma.done %s1471, 16
        $region60: #{model_forward.3} parent=55 // pred_fallthru
          _
      $region56: #{model_forward.3} parent=5 // pred_fallthru
        _
    $region6: #{model_forward.3} parent=1 // loop_footer
      %s20 = sadd.s32 1, %s16
    $region7: #{model_forward.3} parent=1 // loop_footer_branch
      %15 = sbr.rel target = $region3
    $region8: #{model_forward.3} parent=1 // loop_exit
      _
    %1476 = vsyncpa [#allocation4], 1
    %s1477 = scalar_lea.sflag [#allocation4], 1
    %1478 = vsyncpa %s1477, 1

</llo_original>
